<compile_context>
chip_gen: v7x
topology: tpu7x:2x2x1
jax: 0.10.0
libtpu: 0.0.40
codegen_flags: <defaults>
</compile_context>

<pallas_src>
import functools

import jax
import jax.numpy as jnp
from jax.experimental import pallas as pl
from jax.experimental.pallas import tpu as pltpu

NUM_PRIMITIVES = 8
_BN_EPS = 1e-5
_PAD = 4  # max spatial halo needed (dil_conv_5x5: k=5, dilation=2 -> pad 4)
# 3x3 pooling window offsets; the order is shared by the kernel and the host masks.
_POOL_OFFSETS = tuple((dy, dx) for dy in (-1, 0, 1) for dx in (-1, 0, 1))


def _cell_step_kernel(alpha_ref, scale_ref, x_ref, aux_ref, dw3_ref, dw5_ref,
                      pw_ref, out_ref, pad_ref, *, channels):
    """One grid step == one MixedOp edge; accumulates scale*MixedOp(x) into out_ref.

    alpha_ref : SMEM (n_edges, 8)      per-edge, per-primitive mixing weights
    scale_ref : SMEM (n_edges,)        per-edge outer (cell-level) scalar weight
    x_ref     : VMEM (B, H, W*C)       lane-folded input state of this edge
    aux_ref   : VMEM (10, H, PWC)      9 additive max-pool masks (0/-inf) + 1/count
    dw3_ref   : VMEM (3, 3, 3, PWC)    depthwise 3x3 weights, lane-tiled
    dw5_ref   : VMEM (3, 5, 5, PWC)    depthwise 5x5 weights, lane-tiled
    pw_ref    : VMEM (6, WC, WC)       block-diagonal folded 1x1 conv weights
    out_ref   : VMEM (B, H, W*C)       accumulator (same block for every edge)
    pad_ref   : VMEM (B, H+8, PWC)     shared zero-bordered padded scratch
    """
    B, H, WC = x_ref.shape
    PWC = pad_ref.shape[-1]
    C = channels
    W = WC // C
    BH = B * H
    N = BH * W                      # per-channel element count for BatchNorm
    LANE0 = _PAD * C
    e = pl.program_id(0)

    @pl.when(e == 0)
    def _init():
        out_ref[...] = jnp.zeros_like(out_ref)
        # One-time full clear: the zero border is reused by every edge and the
        # interior is overwritten before each use, so a single unmasked store
        # here is cheaper/simpler than per-edge border-strip stores.
        pad_ref[...] = jnp.zeros_like(pad_ref)

    # ---------------- helpers -------------------------------------------------
    def set_interior(t):            # t: (BH, WC) -> padded scratch interior
        pad_ref[:, _PAD:_PAD + H, LANE0:LANE0 + WC] = t.reshape(B, H, WC)

    def rows_at(dy):                # padded rows aligned with output rows
        return pad_ref[:, _PAD + dy:_PAD + dy + H, :]          # (B, H, PWC)

    def shift_lanes(t, dx):         # horizontal tap = lane roll by dx*C (XLU slot)
        if dx == 0:
            return t
        return pltpu.roll(t, shift=(-dx * C) % PWC, axis=2)

    def interior(t):                # (B, H, PWC) -> (BH, WC)
        return t[:, :, LANE0:LANE0 + WC].reshape(BH, WC)

    def group_allreduce(v):         # (R, WC): per-channel sum over the W lane-groups
        if W & (W - 1) == 0:        # power-of-two W: lane-resident roll tree
            shift = C
            while shift < WC:
                v = v + pltpu.roll(v, shift=shift, axis=1)
                shift *= 2
            return v
        # Fallback (never traced for power-of-two W): reshape-reduce-tile.
        g = jnp.sum(v.reshape(v.shape[0], W, C), axis=1, keepdims=True)
        return jnp.tile(g, (1, W, 1)).reshape(v.shape[0], WC)

    def flat_bn(tf):                # (BH, WC): training-mode BN, fused stats pass
        s = jnp.sum(tf, axis=0, keepdims=True)
        q = jnp.sum(tf * tf, axis=0, keepdims=True)
        sq = group_allreduce(jnp.concatenate([s, q], axis=0))   # (2, WC)
        inv_n = 1.0 / N
        mean = sq[0:1] * inv_n
        var = jnp.maximum(sq[1:2] * inv_n - mean * mean, 0.0)
        return (tf - mean) * jax.lax.rsqrt(var + _BN_EPS)

    def pw_bn(tf, m):               # folded 1x1 conv (block-diag MXU matmul) + BN
        y = jnp.dot(tf, pw_ref[m], preferred_element_type=jnp.float32)
        return flat_bn(y)

    def dwconv(dw_full_ref, idx, k, dil):   # depthwise conv from the padded scratch
        dw = dw_full_ref[idx]               # (k, k, PWC), loaded at point of use
        half = (k - 1) // 2
        acc = None
        for i in range(k):
            rows = rows_at((i - half) * dil)
            for j in range(k):
                term = shift_lanes(rows, (j - half) * dil) * dw[i, j]
                acc = term if acc is None else acc + term
        return interior(acc)

    # ---------------- per-edge scalars (SMEM) ---------------------------------
    a = [alpha_ref[e, k] for k in range(NUM_PRIMITIVES)]
    scale = scale_ref[e]

    x = x_ref[...].reshape(BH, WC)

    # primitive 0 ('none' == Zero) contributes exact zeros and is folded out.
    acc = a[3] * x                                          # 3: skip_connect

    # ---------------- pooling branches -----------------------------------------
    # Zero border handles avg-pool (count_include_pad=False via 1/count plane);
    # additive -inf masks (precomputed on host) exclude padding for max-pool.
    set_interior(x)
    mp = None
    ap = None
    rows_cache = {}
    for ki, (dy, dx) in enumerate(_POOL_OFFSETS):
        if dy not in rows_cache:
            rows_cache[dy] = rows_at(dy)
        t = shift_lanes(rows_cache[dy], dx)
        ap = t if ap is None else ap + t
        m = t + aux_ref[ki]
        mp = m if mp is None else jnp.maximum(mp, m)
    acc = acc + a[1] * flat_bn(interior(mp))                       # 1: max_pool_3x3+BN
    acc = acc + a[2] * flat_bn(interior(ap * aux_ref[9]))          # 2: avg_pool_3x3+BN

    # ---------------- conv branches (all start with ReLU(x)) -------------------
    set_interior(jnp.maximum(x, 0.0))                              # padded ReLU(x)
    acc = acc + a[6] * pw_bn(dwconv(dw3_ref, 2, 3, 2), 4)          # 6: dil_conv_3x3
    acc = acc + a[7] * pw_bn(dwconv(dw5_ref, 2, 5, 2), 5)          # 7: dil_conv_5x5
    t3 = jnp.maximum(pw_bn(dwconv(dw3_ref, 0, 3, 1), 0), 0.0)      # sep3 stage 1
    t5 = jnp.maximum(pw_bn(dwconv(dw5_ref, 0, 5, 1), 2), 0.0)      # sep5 stage 1

    set_interior(t3)
    acc = acc + a[4] * pw_bn(dwconv(dw3_ref, 1, 3, 1), 1)          # 4: sep_conv_3x3
    set_interior(t5)
    acc = acc + a[5] * pw_bn(dwconv(dw5_ref, 1, 5, 1), 3)          # 5: sep_conv_5x5

    out_ref[...] += (scale * acc).reshape(B, H, WC)


def _pool_aux(H, W, C):
    """(10, H, (W+2*_PAD)*C) f32: 9 additive max-pool masks (0 valid / -inf
    invalid) in _POOL_OFFSETS order + 1/count plane (count_include_pad=False)."""
    P = _PAD
    WC, PWC = W * C, (W + 2 * P) * C
    hh = jnp.arange(H, dtype=jnp.int32)[:, None]                 # (H, 1)
    lane = jnp.arange(PWC, dtype=jnp.int32)[None, :]             # (1, PWC)
    wq = (lane - P * C) // C                                     # pixel column per lane
    inside = (lane >= P * C) & (lane < P * C + WC)
    planes = []
    for dy, dx in _POOL_OFFSETS:
        valid = ((hh + dy >= 0) & (hh + dy < H) &
                 (wq + dx >= 0) & (wq + dx < W))
        planes.append(jnp.where(valid | ~inside, 0.0, -jnp.inf))
    cnt_h = jnp.minimum(hh + 1, H - 1) - jnp.maximum(hh - 1, 0) + 1
    wqc = jnp.clip(wq, 0, W - 1)
    cnt_w = jnp.minimum(wqc + 1, W - 1) - jnp.maximum(wqc - 1, 0) + 1
    planes.append(1.0 / (cnt_h * cnt_w).astype(jnp.float32))
    return jnp.stack(
        [jnp.broadcast_to(p, (H, PWC)) for p in planes]).astype(jnp.float32)


def _prep_step_params(params, W):
    """Tile depthwise weights along the folded lane axis and expand each (C,C)
    pointwise matrix to its block-diagonal (W*C, W*C) folded form."""
    dw3, dw5, pw = params                 # (E,3,3,3,C), (E,3,5,5,C), (E,6,C,C)
    PW = W + 2 * _PAD
    E, K, C = pw.shape[0], pw.shape[1], pw.shape[-1]
    dw3t = jnp.tile(dw3, (1, 1, 1, 1, PW))
    dw5t = jnp.tile(dw5, (1, 1, 1, 1, PW))
    eye_w = jnp.eye(W, dtype=pw.dtype)
    pwbd = jnp.einsum("wv,ekio->ekwivo", eye_w, pw).reshape(E, K, W * C, W * C)
    return dw3t, dw5t, pwbd


def _vmem_ceiling_bytes():
    cap = 64 * 2 ** 20                      # conservative default (v7x per-core VMEM)
    try:
        cap = int(pltpu.get_tpu_info().vmem_capacity_bytes)
    except Exception:
        pass
    # Leave >=16 MiB for compiler-internal scratch: 64 MiB (v7x) -> 48 MiB,
    # 128 MiB (v5e/v6e) -> 112 MiB.
    return max(cap - 16 * 2 ** 20, 32 * 2 ** 20)


def _vmem_limit_bytes(B, H, W, C):
    WC, PWC = W * C, (W + 2 * _PAD) * C
    act = 4 * B * H * WC
    pad = 4 * B * (H + 2 * _PAD) * PWC
    params = 4 * (3 * (9 + 25) * PWC + 6 * WC * WC)
    aux = 4 * 10 * H * PWC
    est = 2 * (2 * act + 2 * params + aux) + act + pad + 12 * act
    return int(min(max(2 * est, 32 * 2 ** 20), _vmem_ceiling_bytes()))


def cell_step(x_stack, alphas, scales, params):
    """sum_e scales[e] * MixedOp_e(x_stack[e], alphas[e]) as ONE gridded pallas_call."""
    n_edges, B, H, W, C = x_stack.shape
    WC, PWC = W * C, (W + 2 * _PAD) * C
    alphas = jnp.asarray(alphas, jnp.float32).reshape(n_edges, NUM_PRIMITIVES)
    scales = jnp.asarray(scales, jnp.float32).reshape(n_edges)
    xf = x_stack.reshape(n_edges, B, H, WC)          # lane-folded activations
    aux = _pool_aux(H, W, C)
    dw3t, dw5t, pwbd = _prep_step_params(params, W)

    grid_spec = pltpu.PrefetchScalarGridSpec(
        num_scalar_prefetch=2,                       # alphas, scales -> SMEM
        grid=(n_edges,),
        in_specs=[
            pl.BlockSpec((None, B, H, WC), lambda e, a, s: (e, 0, 0, 0)),
            pl.BlockSpec((10, H, PWC), lambda e, a, s: (0, 0, 0)),
            pl.BlockSpec((None, 3, 3, 3, PWC), lambda e, a, s: (e, 0, 0, 0, 0)),
            pl.BlockSpec((None, 3, 5, 5, PWC), lambda e, a, s: (e, 0, 0, 0, 0)),
            pl.BlockSpec((None, 6, WC, WC), lambda e, a, s: (e, 0, 0, 0)),
        ],
        out_specs=pl.BlockSpec((B, H, WC), lambda e, a, s: (0, 0, 0)),
        scratch_shapes=[
            pltpu.VMEM((B, H + 2 * _PAD, PWC), jnp.float32)],
    )
    # TODO(synk): for C >= 128 add a second, "parallel" grid axis over Cout tiles
    # (v7x second TensorCore); bf16 MXU operands are a further accuracy-trading win.
    out = pl.pallas_call(
        functools.partial(_cell_step_kernel, channels=C),
        out_shape=jax.ShapeDtypeStruct((B, H, WC), jnp.float32),
        grid_spec=grid_spec,
        compiler_params=pltpu.CompilerParams(
            dimension_semantics=("arbitrary",),      # edge axis is a reduction
            vmem_limit_bytes=_vmem_limit_bytes(B, H, W, C)),
    )(alphas, scales, xf, aux, dw3t, dw5t, pwbd)
    return out.reshape(B, H, W, C)


class Cell:
    """JAX/Pallas port of model_search7.Cell (all MixedOps use stride=1).

    Note: 1x1 conv weights are stored (Cin, Cout); BatchNorm uses batch stats
    only (no running-stat buffers), i.e. a fresh torch module in train() mode.
    """

    def __init__(self, steps, genotypes, C_prev_prev, C_prev, C, *, key):
        self._steps = steps
        self._genotypes = genotypes
        n = 2 if not genotypes else 4
        self._step_params = []                     # per-step stacked edge params
        idx = 0
        for i in range(steps):
            dw3s, dw5s, pws = [], [], []
            for _ in range(n + i):
                k = jax.random.fold_in(key, idx)
                idx += 1
                k1, k2, k3 = jax.random.split(k, 3)
                dw3s.append(0.2 * jax.random.normal(k1, (3, 3, 3, C), jnp.float32))
                dw5s.append(0.2 * jax.random.normal(k2, (3, 5, 5, C), jnp.float32))
                pws.append(0.2 * jax.random.normal(k3, (6, C, C), jnp.float32))
            self._step_params.append(
                (jnp.stack(dw3s), jnp.stack(dw5s), jnp.stack(pws)))

    def __call__(self, states, weights, weights2):
        # states: NCHW tensors (PyTorch layout) -> NHWC for the kernel wrapper.
        states = [jnp.transpose(s, (0, 2, 3, 1)) for s in states[-4:]]
        offset = 0
        if len(states) == 2:
            n0 = 2
            s2 = cell_step(jnp.stack(states), weights[offset:offset + n0],
                           jnp.ones((n0,), jnp.float32), self._step_params[0])
            offset += n0
            states.append(s2)
            n1 = 3
            s3 = cell_step(jnp.stack(states), weights[offset:offset + n1],
                           weights2[0][0][:n1] * 3.0, self._step_params[1])
            offset += n1
            states.append(s3)
        elif len(states) == 4:
            n0 = 4
            s2 = cell_step(jnp.stack(states), weights[offset:offset + n0],
                           weights2[0][0][:n0] * 4.0, self._step_params[0])
            offset += n0
            states.append(s2)
            n1 = 5
            s3 = cell_step(jnp.stack(states), weights[offset:offset + n1],
                           weights2[1][0][:n1] * 5.0, self._step_params[1])
            offset += n1
            states.append(s3)
        out_m2 = jnp.transpose(states[-2], (0, 3, 1, 2))   # NHWC -> NCHW
        out_m1 = jnp.transpose(states[-1], (0, 3, 1, 2))
        return out_m2, out_m1


if __name__ == "__main__":
    key = jax.random.PRNGKey(0)
    B, C, H, W = 2, 8, 8, 8
    steps = 2
    k_s0, k_s1, k_w, k_w2, k_cell = jax.random.split(key, 5)

    # two input states, NCHW like the PyTorch module
    s0 = jax.random.normal(k_s0, (B, C, H, W), jnp.float32)
    s1 = jax.random.normal(k_s1, (B, C, H, W), jnp.float32)

    # genotypes=None -> n=2 -> 2+3 = 5 MixedOps (edges)
    num_edges = sum(2 + i for i in range(steps))
    weights = jax.nn.softmax(
        jax.random.normal(k_w, (num_edges, NUM_PRIMITIVES), jnp.float32), axis=-1)
    weights2 = jax.nn.softmax(
        jax.random.normal(k_w2, (2, 1, 5), jnp.float32), axis=-1)

    cell = Cell(steps, None, C, C, C, key=k_cell)
    out_s2, out_s3 = cell([s0, s1], weights, weights2)
    jax.block_until_ready((out_s2, out_s3))

    assert out_s2.shape == (B, C, H, W) and out_s3.shape == (B, C, H, W)
    assert bool(jnp.all(jnp.isfinite(out_s2))) and bool(jnp.all(jnp.isfinite(out_s3)))
    print("KERNEL_OK")
</pallas_src>

<mosaic_0001>
module attributes {stable_mosaic.version = 11 : i64} {
  func.func @_cell_step_kernel(%arg0: i32, %arg1: memref<2x8xf32, #tpu.memory_space<smem>>, %arg2: memref<2xf32, #tpu.memory_space<smem>>, %arg3: memref<1x2x8x64xf32, #tpu.memory_space<vmem>>, %arg4: memref<10x8x128xf32, #tpu.memory_space<vmem>>, %arg5: memref<1x3x3x3x128xf32, #tpu.memory_space<vmem>>, %arg6: memref<1x3x5x5x128xf32, #tpu.memory_space<vmem>>, %arg7: memref<1x6x64x64xf32, #tpu.memory_space<vmem>>, %arg8: memref<2x8x64xf32, #tpu.memory_space<vmem>>, %arg9: memref<2x16x128xf32, #tpu.memory_space<vmem>>) attributes {dimension_semantics = [#tpu.dimension_semantics<arbitrary>], iteration_bounds = array<i64: 2>, scalar_prefetch = 2 : i64, scratch_operands = 1 : i64, tpu.core_type = #tpu.core_type<tc>, window_params = [{transform_indices = @transform_0, window_bounds = array<i64: 1, 2, 8, 64>}, {pipeline_mode = #tpu.pipeline_mode<synchronous>, transform_indices = @transform_1, window_bounds = array<i64: 10, 8, 128>}, {transform_indices = @transform_2, window_bounds = array<i64: 1, 3, 3, 3, 128>}, {transform_indices = @transform_3, window_bounds = array<i64: 1, 3, 5, 5, 128>}, {transform_indices = @transform_4, window_bounds = array<i64: 1, 6, 64, 64>}, {pipeline_mode = #tpu.pipeline_mode<synchronous>, transform_indices = @transform_5, window_bounds = array<i64: 2, 8, 64>}]} {
    %c0_i32 = arith.constant 0 : i32
    %0 = arith.cmpi eq, %arg0, %c0_i32 : i32
    %1 = arith.extui %0 : i1 to i32
    %c0_i32_0 = arith.constant 0 : i32
    %2 = arith.cmpi ne, %1, %c0_i32_0 : i32
    scf.if %2 {
      %cst_342 = arith.constant 0.000000e+00 : f32
      %1123 = vector.broadcast %cst_342 : f32 to vector<2x8x64xf32>
      %c0_343 = arith.constant 0 : index
      %c0_344 = arith.constant 0 : index
      %c0_345 = arith.constant 0 : index
      %1124 = vector.load %arg8[%c0_343, %c0_344, %c0_345] : memref<2x8x64xf32, #tpu.memory_space<vmem>>, vector<2x8x64xf32>
      tpu.vector_store %arg8[%c0_343, %c0_344, %c0_345], %1123 {strides = array<i32>} : memref<2x8x64xf32, #tpu.memory_space<vmem>>, vector<2x8x64xf32>,
      %cst_346 = arith.constant 0.000000e+00 : f32
      %1125 = vector.broadcast %cst_346 : f32 to vector<2x16x128xf32>
      %c0_347 = arith.constant 0 : index
      %c0_348 = arith.constant 0 : index
      %c0_349 = arith.constant 0 : index
      %1126 = vector.load %arg9[%c0_347, %c0_348, %c0_349] : memref<2x16x128xf32, #tpu.memory_space<vmem>>, vector<2x16x128xf32>
      tpu.vector_store %arg9[%c0_347, %c0_348, %c0_349], %1125 {strides = array<i32>} : memref<2x16x128xf32, #tpu.memory_space<vmem>>, vector<2x16x128xf32>,
    } else {
    }
    %3 = arith.index_cast %arg0 : i32 to index
    %c1 = arith.constant 1 : index
    %4 = memref.load %arg1[%3, %c1] : memref<2x8xf32, #tpu.memory_space<smem>>
    %5 = arith.index_cast %arg0 : i32 to index
    %c2 = arith.constant 2 : index
    %6 = memref.load %arg1[%5, %c2] : memref<2x8xf32, #tpu.memory_space<smem>>
    %7 = arith.index_cast %arg0 : i32 to index
    %c3 = arith.constant 3 : index
    %8 = memref.load %arg1[%7, %c3] : memref<2x8xf32, #tpu.memory_space<smem>>
    %9 = arith.index_cast %arg0 : i32 to index
    %c4 = arith.constant 4 : index
    %10 = memref.load %arg1[%9, %c4] : memref<2x8xf32, #tpu.memory_space<smem>>
    %11 = arith.index_cast %arg0 : i32 to index
    %c5 = arith.constant 5 : index
    %12 = memref.load %arg1[%11, %c5] : memref<2x8xf32, #tpu.memory_space<smem>>
    %13 = arith.index_cast %arg0 : i32 to index
    %c6 = arith.constant 6 : index
    %14 = memref.load %arg1[%13, %c6] : memref<2x8xf32, #tpu.memory_space<smem>>
    %15 = arith.index_cast %arg0 : i32 to index
    %c7 = arith.constant 7 : index
    %16 = memref.load %arg1[%15, %c7] : memref<2x8xf32, #tpu.memory_space<smem>>
    %17 = arith.index_cast %arg0 : i32 to index
    %18 = memref.load %arg2[%17] : memref<2xf32, #tpu.memory_space<smem>>
    %c0 = arith.constant 0 : index
    %c0_1 = arith.constant 0 : index
    %c0_2 = arith.constant 0 : index
    %c0_3 = arith.constant 0 : index
    %19 = vector.load %arg3[%c0, %c0_1, %c0_2, %c0_3] : memref<1x2x8x64xf32, #tpu.memory_space<vmem>>, vector<1x2x8x64xf32>
    %20 = vector.shape_cast %19 : vector<1x2x8x64xf32> to vector<2x8x64xf32>
    %21 = vector.shape_cast %20 : vector<2x8x64xf32> to vector<16x64xf32>
    %22 = vector.broadcast %8 : f32 to vector<16x64xf32>
    %23 = arith.mulf %22, %21 : vector<16x64xf32>
    %24 = vector.shape_cast %21 : vector<16x64xf32> to vector<2x8x64xf32>
    %c0_4 = arith.constant 0 : index
    %c4_5 = arith.constant 4 : index
    %c32 = arith.constant 32 : index
    %25 = vector.load %arg9[%c0_4, %c4_5, %c32] : memref<2x16x128xf32, #tpu.memory_space<vmem>>, vector<2x8x64xf32>
    tpu.vector_store %arg9[%c0_4, %c4_5, %c32], %24 {strides = array<i32>} : memref<2x16x128xf32, #tpu.memory_space<vmem>>, vector<2x8x64xf32>,
    %c0_6 = arith.constant 0 : index
    %c3_7 = arith.constant 3 : index
    %c0_8 = arith.constant 0 : index
    %26 = vector.load %arg9[%c0_6, %c3_7, %c0_8] : memref<2x16x128xf32, #tpu.memory_space<vmem>>, vector<2x8x128xf32>
    %c8_i32 = arith.constant 8 : i32
    %27 = tpu.dynamic_rotate %26 by %c8_i32 dim 2 : vector<2x8x128xf32>, i32 -> vector<2x8x128xf32>
    %c0_9 = arith.constant 0 : index
    %c0_10 = arith.constant 0 : index
    %c0_11 = arith.constant 0 : index
    %28 = vector.load %arg4[%c0_9, %c0_10, %c0_11] : memref<10x8x128xf32, #tpu.memory_space<vmem>>, vector<1x8x128xf32>
    %29 = vector.shape_cast %28 : vector<1x8x128xf32> to vector<8x128xf32>
    %30 = vector.shape_cast %29 : vector<8x128xf32> to vector<1x8x128xf32>
    %31 = vector.broadcast %30 : vector<1x8x128xf32> to vector<2x8x128xf32>
    %32 = arith.addf %27, %31 : vector<2x8x128xf32>
    %33 = arith.addf %27, %26 : vector<2x8x128xf32>
    %c1_12 = arith.constant 1 : index
    %c0_13 = arith.constant 0 : index
    %c0_14 = arith.constant 0 : index
    %34 = vector.load %arg4[%c1_12, %c0_13, %c0_14] : memref<10x8x128xf32, #tpu.memory_space<vmem>>, vector<1x8x128xf32>
    %35 = vector.shape_cast %34 : vector<1x8x128xf32> to vector<8x128xf32>
    %36 = vector.shape_cast %35 : vector<8x128xf32> to vector<1x8x128xf32>
    %37 = vector.broadcast %36 : vector<1x8x128xf32> to vector<2x8x128xf32>
    %38 = arith.addf %26, %37 : vector<2x8x128xf32>
    %39 = arith.maximumf %32, %38 : vector<2x8x128xf32>
    %c120_i32 = arith.constant 120 : i32
    %40 = tpu.dynamic_rotate %26 by %c120_i32 dim 2 : vector<2x8x128xf32>, i32 -> vector<2x8x128xf32>
    %41 = arith.addf %33, %40 : vector<2x8x128xf32>
    %c2_15 = arith.constant 2 : index
    %c0_16 = arith.constant 0 : index
    %c0_17 = arith.constant 0 : index
    %42 = vector.load %arg4[%c2_15, %c0_16, %c0_17] : memref<10x8x128xf32, #tpu.memory_space<vmem>>, vector<1x8x128xf32>
    %43 = vector.shape_cast %42 : vector<1x8x128xf32> to vector<8x128xf32>
    %44 = vector.shape_cast %43 : vector<8x128xf32> to vector<1x8x128xf32>
    %45 = vector.broadcast %44 : vector<1x8x128xf32> to vector<2x8x128xf32>
    %46 = arith.addf %40, %45 : vector<2x8x128xf32>
    %47 = arith.maximumf %39, %46 : vector<2x8x128xf32>
    %c0_18 = arith.constant 0 : index
    %c4_19 = arith.constant 4 : index
    %c0_20 = arith.constant 0 : index
    %48 = vector.load %arg9[%c0_18, %c4_19, %c0_20] : memref<2x16x128xf32, #tpu.memory_space<vmem>>, vector<2x8x128xf32>
    %c8_i32_21 = arith.constant 8 : i32
    %49 = tpu.dynamic_rotate %48 by %c8_i32_21 dim 2 : vector<2x8x128xf32>, i32 -> vector<2x8x128xf32>
    %50 = arith.addf %41, %49 : vector<2x8x128xf32>
    %c3_22 = arith.constant 3 : index
    %c0_23 = arith.constant 0 : index
    %c0_24 = arith.constant 0 : index
    %51 = vector.load %arg4[%c3_22, %c0_23, %c0_24] : memref<10x8x128xf32, #tpu.memory_space<vmem>>, vector<1x8x128xf32>
    %52 = vector.shape_cast %51 : vector<1x8x128xf32> to vector<8x128xf32>
    %53 = vector.shape_cast %52 : vector<8x128xf32> to vector<1x8x128xf32>
    %54 = vector.broadcast %53 : vector<1x8x128xf32> to vector<2x8x128xf32>
    %55 = arith.addf %49, %54 : vector<2x8x128xf32>
    %56 = arith.maximumf %47, %55 : vector<2x8x128xf32>
    %57 = arith.addf %50, %48 : vector<2x8x128xf32>
    %c4_25 = arith.constant 4 : index
    %c0_26 = arith.constant 0 : index
    %c0_27 = arith.constant 0 : index
    %58 = vector.load %arg4[%c4_25, %c0_26, %c0_27] : memref<10x8x128xf32, #tpu.memory_space<vmem>>, vector<1x8x128xf32>
    %59 = vector.shape_cast %58 : vector<1x8x128xf32> to vector<8x128xf32>
    %60 = vector.shape_cast %59 : vector<8x128xf32> to vector<1x8x128xf32>
    %61 = vector.broadcast %60 : vector<1x8x128xf32> to vector<2x8x128xf32>
    %62 = arith.addf %48, %61 : vector<2x8x128xf32>
    %63 = arith.maximumf %56, %62 : vector<2x8x128xf32>
    %c120_i32_28 = arith.constant 120 : i32
    %64 = tpu.dynamic_rotate %48 by %c120_i32_28 dim 2 : vector<2x8x128xf32>, i32 -> vector<2x8x128xf32>
    %65 = arith.addf %57, %64 : vector<2x8x128xf32>
    %c5_29 = arith.constant 5 : index
    %c0_30 = arith.constant 0 : index
    %c0_31 = arith.constant 0 : index
    %66 = vector.load %arg4[%c5_29, %c0_30, %c0_31] : memref<10x8x128xf32, #tpu.memory_space<vmem>>, vector<1x8x128xf32>
    %67 = vector.shape_cast %66 : vector<1x8x128xf32> to vector<8x128xf32>
    %68 = vector.shape_cast %67 : vector<8x128xf32> to vector<1x8x128xf32>
    %69 = vector.broadcast %68 : vector<1x8x128xf32> to vector<2x8x128xf32>
    %70 = arith.addf %64, %69 : vector<2x8x128xf32>
    %71 = arith.maximumf %63, %70 : vector<2x8x128xf32>
    %c0_32 = arith.constant 0 : index
    %c5_33 = arith.constant 5 : index
    %c0_34 = arith.constant 0 : index
    %72 = vector.load %arg9[%c0_32, %c5_33, %c0_34] : memref<2x16x128xf32, #tpu.memory_space<vmem>>, vector<2x8x128xf32>
    %c8_i32_35 = arith.constant 8 : i32
    %73 = tpu.dynamic_rotate %72 by %c8_i32_35 dim 2 : vector<2x8x128xf32>, i32 -> vector<2x8x128xf32>
    %74 = arith.addf %65, %73 : vector<2x8x128xf32>
    %c6_36 = arith.constant 6 : index
    %c0_37 = arith.constant 0 : index
    %c0_38 = arith.constant 0 : index
    %75 = vector.load %arg4[%c6_36, %c0_37, %c0_38] : memref<10x8x128xf32, #tpu.memory_space<vmem>>, vector<1x8x128xf32>
    %76 = vector.shape_cast %75 : vector<1x8x128xf32> to vector<8x128xf32>
    %77 = vector.shape_cast %76 : vector<8x128xf32> to vector<1x8x128xf32>
    %78 = vector.broadcast %77 : vector<1x8x128xf32> to vector<2x8x128xf32>
    %79 = arith.addf %73, %78 : vector<2x8x128xf32>
    %80 = arith.maximumf %71, %79 : vector<2x8x128xf32>
    %81 = arith.addf %74, %72 : vector<2x8x128xf32>
    %c7_39 = arith.constant 7 : index
    %c0_40 = arith.constant 0 : index
    %c0_41 = arith.constant 0 : index
    %82 = vector.load %arg4[%c7_39, %c0_40, %c0_41] : memref<10x8x128xf32, #tpu.memory_space<vmem>>, vector<1x8x128xf32>
    %83 = vector.shape_cast %82 : vector<1x8x128xf32> to vector<8x128xf32>
    %84 = vector.shape_cast %83 : vector<8x128xf32> to vector<1x8x128xf32>
    %85 = vector.broadcast %84 : vector<1x8x128xf32> to vector<2x8x128xf32>
    %86 = arith.addf %72, %85 : vector<2x8x128xf32>
    %87 = arith.maximumf %80, %86 : vector<2x8x128xf32>
    %c120_i32_42 = arith.constant 120 : i32
    %88 = tpu.dynamic_rotate %72 by %c120_i32_42 dim 2 : vector<2x8x128xf32>, i32 -> vector<2x8x128xf32>
    %89 = arith.addf %81, %88 : vector<2x8x128xf32>
    %c8 = arith.constant 8 : index
    %c0_43 = arith.constant 0 : index
    %c0_44 = arith.constant 0 : index
    %90 = vector.load %arg4[%c8, %c0_43, %c0_44] : memref<10x8x128xf32, #tpu.memory_space<vmem>>, vector<1x8x128xf32>
    %91 = vector.shape_cast %90 : vector<1x8x128xf32> to vector<8x128xf32>
    %92 = vector.shape_cast %91 : vector<8x128xf32> to vector<1x8x128xf32>
    %93 = vector.broadcast %92 : vector<1x8x128xf32> to vector<2x8x128xf32>
    %94 = arith.addf %88, %93 : vector<2x8x128xf32>
    %95 = arith.maximumf %87, %94 : vector<2x8x128xf32>
    %96 = vector.extract_strided_slice %95 {offsets = [0, 0, 32], sizes = [2, 8, 64], strides = [1, 1, 1]} : vector<2x8x128xf32> to vector<2x8x64xf32>
    %97 = vector.shape_cast %96 : vector<2x8x64xf32> to vector<16x64xf32>
    %cst = arith.constant dense<0.000000e+00> : vector<64xf32>
    %98 = vector.multi_reduction <add>, %97, %cst [0] : vector<16x64xf32> to vector<64xf32>
    %99 = vector.shape_cast %98 : vector<64xf32> to vector<1x64xf32>
    %100 = arith.mulf %97, %97 : vector<16x64xf32>
    %cst_45 = arith.constant dense<0.000000e+00> : vector<64xf32>
    %101 = vector.multi_reduction <add>, %100, %cst_45 [0] : vector<16x64xf32> to vector<64xf32>
    %102 = vector.shape_cast %101 : vector<64xf32> to vector<1x64xf32>
    %103 = tpu.concatenate %99, %102 in 0 : vector<1x64xf32>, vector<1x64xf32> -> vector<2x64xf32>
    %c8_i32_46 = arith.constant 8 : i32
    %104 = tpu.dynamic_rotate %103 by %c8_i32_46 dim 1 : vector<2x64xf32>, i32 -> vector<2x64xf32>
    %105 = arith.addf %103, %104 : vector<2x64xf32>
    %c16_i32 = arith.constant 16 : i32
    %106 = tpu.dynamic_rotate %105 by %c16_i32 dim 1 : vector<2x64xf32>, i32 -> vector<2x64xf32>
    %107 = arith.addf %105, %106 : vector<2x64xf32>
    %c32_i32 = arith.constant 32 : i32
    %108 = tpu.dynamic_rotate %107 by %c32_i32 dim 1 : vector<2x64xf32>, i32 -> vector<2x64xf32>
    %109 = arith.addf %107, %108 : vector<2x64xf32>
    %110 = vector.extract_strided_slice %109 {offsets = [0, 0], sizes = [1, 64], strides = [1, 1]} : vector<2x64xf32> to vector<1x64xf32>
    %cst_47 = arith.constant 7.812500e-03 : f32
    %111 = vector.broadcast %cst_47 : f32 to vector<1x64xf32>
    %112 = arith.mulf %110, %111 : vector<1x64xf32>
    %113 = vector.extract_strided_slice %109 {offsets = [1, 0], sizes = [1, 64], strides = [1, 1]} : vector<2x64xf32> to vector<1x64xf32>
    %cst_48 = arith.constant 7.812500e-03 : f32
    %114 = vector.broadcast %cst_48 : f32 to vector<1x64xf32>
    %115 = arith.mulf %113, %114 : vector<1x64xf32>
    %116 = arith.mulf %112, %112 : vector<1x64xf32>
    %117 = arith.subf %115, %116 : vector<1x64xf32>
    %cst_49 = arith.constant 0.000000e+00 : f32
    %118 = vector.broadcast %cst_49 : f32 to vector<1x64xf32>
    %119 = arith.maximumf %117, %118 : vector<1x64xf32>
    %120 = vector.broadcast %112 : vector<1x64xf32> to vector<16x64xf32>
    %121 = arith.subf %97, %120 : vector<16x64xf32>
    %cst_50 = arith.constant 9.99999974E-6 : f32
    %122 = vector.broadcast %cst_50 : f32 to vector<1x64xf32>
    %123 = arith.addf %119, %122 : vector<1x64xf32>
    %124 = math.rsqrt %123 : vector<1x64xf32>
    %125 = vector.broadcast %124 : vector<1x64xf32> to vector<16x64xf32>
    %126 = arith.mulf %121, %125 : vector<16x64xf32>
    %127 = vector.broadcast %4 : f32 to vector<16x64xf32>
    %128 = arith.mulf %127, %126 : vector<16x64xf32>
    %129 = arith.addf %23, %128 : vector<16x64xf32>
    %c9 = arith.constant 9 : index
    %c0_51 = arith.constant 0 : index
    %c0_52 = arith.constant 0 : index
    %130 = vector.load %arg4[%c9, %c0_51, %c0_52] : memref<10x8x128xf32, #tpu.memory_space<vmem>>, vector<1x8x128xf32>
    %131 = vector.shape_cast %130 : vector<1x8x128xf32> to vector<8x128xf32>
    %132 = vector.shape_cast %131 : vector<8x128xf32> to vector<1x8x128xf32>
    %133 = vector.broadcast %132 : vector<1x8x128xf32> to vector<2x8x128xf32>
    %134 = arith.mulf %89, %133 : vector<2x8x128xf32>
    %135 = vector.extract_strided_slice %134 {offsets = [0, 0, 32], sizes = [2, 8, 64], strides = [1, 1, 1]} : vector<2x8x128xf32> to vector<2x8x64xf32>
    %136 = vector.shape_cast %135 : vector<2x8x64xf32> to vector<16x64xf32>
    %cst_53 = arith.constant dense<0.000000e+00> : vector<64xf32>
    %137 = vector.multi_reduction <add>, %136, %cst_53 [0] : vector<16x64xf32> to vector<64xf32>
    %138 = vector.shape_cast %137 : vector<64xf32> to vector<1x64xf32>
    %139 = arith.mulf %136, %136 : vector<16x64xf32>
    %cst_54 = arith.constant dense<0.000000e+00> : vector<64xf32>
    %140 = vector.multi_reduction <add>, %139, %cst_54 [0] : vector<16x64xf32> to vector<64xf32>
    %141 = vector.shape_cast %140 : vector<64xf32> to vector<1x64xf32>
    %142 = tpu.concatenate %138, %141 in 0 : vector<1x64xf32>, vector<1x64xf32> -> vector<2x64xf32>
    %c8_i32_55 = arith.constant 8 : i32
    %143 = tpu.dynamic_rotate %142 by %c8_i32_55 dim 1 : vector<2x64xf32>, i32 -> vector<2x64xf32>
    %144 = arith.addf %142, %143 : vector<2x64xf32>
    %c16_i32_56 = arith.constant 16 : i32
    %145 = tpu.dynamic_rotate %144 by %c16_i32_56 dim 1 : vector<2x64xf32>, i32 -> vector<2x64xf32>
    %146 = arith.addf %144, %145 : vector<2x64xf32>
    %c32_i32_57 = arith.constant 32 : i32
    %147 = tpu.dynamic_rotate %146 by %c32_i32_57 dim 1 : vector<2x64xf32>, i32 -> vector<2x64xf32>
    %148 = arith.addf %146, %147 : vector<2x64xf32>
    %149 = vector.extract_strided_slice %148 {offsets = [0, 0], sizes = [1, 64], strides = [1, 1]} : vector<2x64xf32> to vector<1x64xf32>
    %cst_58 = arith.constant 7.812500e-03 : f32
    %150 = vector.broadcast %cst_58 : f32 to vector<1x64xf32>
    %151 = arith.mulf %149, %150 : vector<1x64xf32>
    %152 = vector.extract_strided_slice %148 {offsets = [1, 0], sizes = [1, 64], strides = [1, 1]} : vector<2x64xf32> to vector<1x64xf32>
    %cst_59 = arith.constant 7.812500e-03 : f32
    %153 = vector.broadcast %cst_59 : f32 to vector<1x64xf32>
    %154 = arith.mulf %152, %153 : vector<1x64xf32>
    %155 = arith.mulf %151, %151 : vector<1x64xf32>
    %156 = arith.subf %154, %155 : vector<1x64xf32>
    %cst_60 = arith.constant 0.000000e+00 : f32
    %157 = vector.broadcast %cst_60 : f32 to vector<1x64xf32>
    %158 = arith.maximumf %156, %157 : vector<1x64xf32>
    %159 = vector.broadcast %151 : vector<1x64xf32> to vector<16x64xf32>
    %160 = arith.subf %136, %159 : vector<16x64xf32>
    %cst_61 = arith.constant 9.99999974E-6 : f32
    %161 = vector.broadcast %cst_61 : f32 to vector<1x64xf32>
    %162 = arith.addf %158, %161 : vector<1x64xf32>
    %163 = math.rsqrt %162 : vector<1x64xf32>
    %164 = vector.broadcast %163 : vector<1x64xf32> to vector<16x64xf32>
    %165 = arith.mulf %160, %164 : vector<16x64xf32>
    %166 = vector.broadcast %6 : f32 to vector<16x64xf32>
    %167 = arith.mulf %166, %165 : vector<16x64xf32>
    %168 = arith.addf %129, %167 : vector<16x64xf32>
    %cst_62 = arith.constant 0.000000e+00 : f32
    %169 = vector.broadcast %cst_62 : f32 to vector<16x64xf32>
    %170 = arith.maximumf %21, %169 : vector<16x64xf32>
    %171 = vector.shape_cast %170 : vector<16x64xf32> to vector<2x8x64xf32>
    %c0_63 = arith.constant 0 : index
    %c4_64 = arith.constant 4 : index
    %c32_65 = arith.constant 32 : index
    %172 = vector.load %arg9[%c0_63, %c4_64, %c32_65] : memref<2x16x128xf32, #tpu.memory_space<vmem>>, vector<2x8x64xf32>
    tpu.vector_store %arg9[%c0_63, %c4_64, %c32_65], %171 {strides = array<i32>} : memref<2x16x128xf32, #tpu.memory_space<vmem>>, vector<2x8x64xf32>,
    %c0_66 = arith.constant 0 : index
    %c2_67 = arith.constant 2 : index
    %c0_68 = arith.constant 0 : index
    %c0_69 = arith.constant 0 : index
    %c0_70 = arith.constant 0 : index
    %173 = vector.load %arg5[%c0_66, %c2_67, %c0_68, %c0_69, %c0_70] : memref<1x3x3x3x128xf32, #tpu.memory_space<vmem>>, vector<1x1x3x3x128xf32>
    %174 = vector.shape_cast %173 : vector<1x1x3x3x128xf32> to vector<3x3x128xf32>
    %c0_71 = arith.constant 0 : index
    %c2_72 = arith.constant 2 : index
    %c0_73 = arith.constant 0 : index
    %175 = vector.load %arg9[%c0_71, %c2_72, %c0_73] : memref<2x16x128xf32, #tpu.memory_space<vmem>>, vector<2x8x128xf32>
    %c16_i32_74 = arith.constant 16 : i32
    %176 = tpu.dynamic_rotate %175 by %c16_i32_74 dim 2 : vector<2x8x128xf32>, i32 -> vector<2x8x128xf32>
    %177 = vector.extract_strided_slice %174 {offsets = [0, 0, 0], sizes = [1, 1, 128], strides = [1, 1, 1]} : vector<3x3x128xf32> to vector<1x1x128xf32>
    %178 = vector.shape_cast %177 : vector<1x1x128xf32> to vector<128xf32>
    %179 = vector.shape_cast %178 : vector<128xf32> to vector<1x1x128xf32>
    %180 = vector.broadcast %179 : vector<1x1x128xf32> to vector<2x8x128xf32>
    %181 = arith.mulf %176, %180 : vector<2x8x128xf32>
    %182 = vector.extract_strided_slice %174 {offsets = [0, 1, 0], sizes = [1, 1, 128], strides = [1, 1, 1]} : vector<3x3x128xf32> to vector<1x1x128xf32>
    %183 = vector.shape_cast %182 : vector<1x1x128xf32> to vector<128xf32>
    %184 = vector.shape_cast %183 : vector<128xf32> to vector<1x1x128xf32>
    %185 = vector.broadcast %184 : vector<1x1x128xf32> to vector<2x8x128xf32>
    %186 = arith.mulf %175, %185 : vector<2x8x128xf32>
    %187 = arith.addf %181, %186 : vector<2x8x128xf32>
    %c112_i32 = arith.constant 112 : i32
    %188 = tpu.dynamic_rotate %175 by %c112_i32 dim 2 : vector<2x8x128xf32>, i32 -> vector<2x8x128xf32>
    %189 = vector.extract_strided_slice %174 {offsets = [0, 2, 0], sizes = [1, 1, 128], strides = [1, 1, 1]} : vector<3x3x128xf32> to vector<1x1x128xf32>
    %190 = vector.shape_cast %189 : vector<1x1x128xf32> to vector<128xf32>
    %191 = vector.shape_cast %190 : vector<128xf32> to vector<1x1x128xf32>
    %192 = vector.broadcast %191 : vector<1x1x128xf32> to vector<2x8x128xf32>
    %193 = arith.mulf %188, %192 : vector<2x8x128xf32>
    %194 = arith.addf %187, %193 : vector<2x8x128xf32>
    %c0_75 = arith.constant 0 : index
    %c4_76 = arith.constant 4 : index
    %c0_77 = arith.constant 0 : index
    %195 = vector.load %arg9[%c0_75, %c4_76, %c0_77] : memref<2x16x128xf32, #tpu.memory_space<vmem>>, vector<2x8x128xf32>
    %c16_i32_78 = arith.constant 16 : i32
    %196 = tpu.dynamic_rotate %195 by %c16_i32_78 dim 2 : vector<2x8x128xf32>, i32 -> vector<2x8x128xf32>
    %197 = vector.extract_strided_slice %174 {offsets = [1, 0, 0], sizes = [1, 1, 128], strides = [1, 1, 1]} : vector<3x3x128xf32> to vector<1x1x128xf32>
    %198 = vector.shape_cast %197 : vector<1x1x128xf32> to vector<128xf32>
    %199 = vector.shape_cast %198 : vector<128xf32> to vector<1x1x128xf32>
    %200 = vector.broadcast %199 : vector<1x1x128xf32> to vector<2x8x128xf32>
    %201 = arith.mulf %196, %200 : vector<2x8x128xf32>
    %202 = arith.addf %194, %201 : vector<2x8x128xf32>
    %203 = vector.extract_strided_slice %174 {offsets = [1, 1, 0], sizes = [1, 1, 128], strides = [1, 1, 1]} : vector<3x3x128xf32> to vector<1x1x128xf32>
    %204 = vector.shape_cast %203 : vector<1x1x128xf32> to vector<128xf32>
    %205 = vector.shape_cast %204 : vector<128xf32> to vector<1x1x128xf32>
    %206 = vector.broadcast %205 : vector<1x1x128xf32> to vector<2x8x128xf32>
    %207 = arith.mulf %195, %206 : vector<2x8x128xf32>
    %208 = arith.addf %202, %207 : vector<2x8x128xf32>
    %c112_i32_79 = arith.constant 112 : i32
    %209 = tpu.dynamic_rotate %195 by %c112_i32_79 dim 2 : vector<2x8x128xf32>, i32 -> vector<2x8x128xf32>
    %210 = vector.extract_strided_slice %174 {offsets = [1, 2, 0], sizes = [1, 1, 128], strides = [1, 1, 1]} : vector<3x3x128xf32> to vector<1x1x128xf32>
    %211 = vector.shape_cast %210 : vector<1x1x128xf32> to vector<128xf32>
    %212 = vector.shape_cast %211 : vector<128xf32> to vector<1x1x128xf32>
    %213 = vector.broadcast %212 : vector<1x1x128xf32> to vector<2x8x128xf32>
    %214 = arith.mulf %209, %213 : vector<2x8x128xf32>
    %215 = arith.addf %208, %214 : vector<2x8x128xf32>
    %c0_80 = arith.constant 0 : index
    %c6_81 = arith.constant 6 : index
    %c0_82 = arith.constant 0 : index
    %216 = vector.load %arg9[%c0_80, %c6_81, %c0_82] : memref<2x16x128xf32, #tpu.memory_space<vmem>>, vector<2x8x128xf32>
    %c16_i32_83 = arith.constant 16 : i32
    %217 = tpu.dynamic_rotate %216 by %c16_i32_83 dim 2 : vector<2x8x128xf32>, i32 -> vector<2x8x128xf32>
    %218 = vector.extract_strided_slice %174 {offsets = [2, 0, 0], sizes = [1, 1, 128], strides = [1, 1, 1]} : vector<3x3x128xf32> to vector<1x1x128xf32>
    %219 = vector.shape_cast %218 : vector<1x1x128xf32> to vector<128xf32>
    %220 = vector.shape_cast %219 : vector<128xf32> to vector<1x1x128xf32>
    %221 = vector.broadcast %220 : vector<1x1x128xf32> to vector<2x8x128xf32>
    %222 = arith.mulf %217, %221 : vector<2x8x128xf32>
    %223 = arith.addf %215, %222 : vector<2x8x128xf32>
    %224 = vector.extract_strided_slice %174 {offsets = [2, 1, 0], sizes = [1, 1, 128], strides = [1, 1, 1]} : vector<3x3x128xf32> to vector<1x1x128xf32>
    %225 = vector.shape_cast %224 : vector<1x1x128xf32> to vector<128xf32>
    %226 = vector.shape_cast %225 : vector<128xf32> to vector<1x1x128xf32>
    %227 = vector.broadcast %226 : vector<1x1x128xf32> to vector<2x8x128xf32>
    %228 = arith.mulf %216, %227 : vector<2x8x128xf32>
    %229 = arith.addf %223, %228 : vector<2x8x128xf32>
    %c112_i32_84 = arith.constant 112 : i32
    %230 = tpu.dynamic_rotate %216 by %c112_i32_84 dim 2 : vector<2x8x128xf32>, i32 -> vector<2x8x128xf32>
    %231 = vector.extract_strided_slice %174 {offsets = [2, 2, 0], sizes = [1, 1, 128], strides = [1, 1, 1]} : vector<3x3x128xf32> to vector<1x1x128xf32>
    %232 = vector.shape_cast %231 : vector<1x1x128xf32> to vector<128xf32>
    %233 = vector.shape_cast %232 : vector<128xf32> to vector<1x1x128xf32>
    %234 = vector.broadcast %233 : vector<1x1x128xf32> to vector<2x8x128xf32>
    %235 = arith.mulf %230, %234 : vector<2x8x128xf32>
    %236 = arith.addf %229, %235 : vector<2x8x128xf32>
    %237 = vector.extract_strided_slice %236 {offsets = [0, 0, 32], sizes = [2, 8, 64], strides = [1, 1, 1]} : vector<2x8x128xf32> to vector<2x8x64xf32>
    %238 = vector.shape_cast %237 : vector<2x8x64xf32> to vector<16x64xf32>
    %c0_85 = arith.constant 0 : index
    %c4_86 = arith.constant 4 : index
    %c0_87 = arith.constant 0 : index
    %c0_88 = arith.constant 0 : index
    %239 = vector.load %arg7[%c0_85, %c4_86, %c0_87, %c0_88] : memref<1x6x64x64xf32, #tpu.memory_space<vmem>>, vector<1x1x64x64xf32>
    %240 = vector.shape_cast %239 : vector<1x1x64x64xf32> to vector<64x64xf32>
    %cst_89 = arith.constant dense<0.000000e+00> : vector<16x64xf32>
    %241 = tpu.matmul %238, %240, %cst_89 {dimension_numbers = #tpu.dot_dimension_numbers<[1], [0], [0], [1], [0, 0, 1, 1], [], []>} : vector<16x64xf32>, vector<64x64xf32>, vector<16x64xf32> -> vector<16x64xf32>
    %cst_90 = arith.constant dense<0.000000e+00> : vector<64xf32>
    %242 = vector.multi_reduction <add>, %241, %cst_90 [0] : vector<16x64xf32> to vector<64xf32>
    %243 = vector.shape_cast %242 : vector<64xf32> to vector<1x64xf32>
    %244 = arith.mulf %241, %241 : vector<16x64xf32>
    %cst_91 = arith.constant dense<0.000000e+00> : vector<64xf32>
    %245 = vector.multi_reduction <add>, %244, %cst_91 [0] : vector<16x64xf32> to vector<64xf32>
    %246 = vector.shape_cast %245 : vector<64xf32> to vector<1x64xf32>
    %247 = tpu.concatenate %243, %246 in 0 : vector<1x64xf32>, vector<1x64xf32> -> vector<2x64xf32>
    %c8_i32_92 = arith.constant 8 : i32
    %248 = tpu.dynamic_rotate %247 by %c8_i32_92 dim 1 : vector<2x64xf32>, i32 -> vector<2x64xf32>
    %249 = arith.addf %247, %248 : vector<2x64xf32>
    %c16_i32_93 = arith.constant 16 : i32
    %250 = tpu.dynamic_rotate %249 by %c16_i32_93 dim 1 : vector<2x64xf32>, i32 -> vector<2x64xf32>
    %251 = arith.addf %249, %250 : vector<2x64xf32>
    %c32_i32_94 = arith.constant 32 : i32
    %252 = tpu.dynamic_rotate %251 by %c32_i32_94 dim 1 : vector<2x64xf32>, i32 -> vector<2x64xf32>
    %253 = arith.addf %251, %252 : vector<2x64xf32>
    %254 = vector.extract_strided_slice %253 {offsets = [0, 0], sizes = [1, 64], strides = [1, 1]} : vector<2x64xf32> to vector<1x64xf32>
    %cst_95 = arith.constant 7.812500e-03 : f32
    %255 = vector.broadcast %cst_95 : f32 to vector<1x64xf32>
    %256 = arith.mulf %254, %255 : vector<1x64xf32>
    %257 = vector.extract_strided_slice %253 {offsets = [1, 0], sizes = [1, 64], strides = [1, 1]} : vector<2x64xf32> to vector<1x64xf32>
    %cst_96 = arith.constant 7.812500e-03 : f32
    %258 = vector.broadcast %cst_96 : f32 to vector<1x64xf32>
    %259 = arith.mulf %257, %258 : vector<1x64xf32>
    %260 = arith.mulf %256, %256 : vector<1x64xf32>
    %261 = arith.subf %259, %260 : vector<1x64xf32>
    %cst_97 = arith.constant 0.000000e+00 : f32
    %262 = vector.broadcast %cst_97 : f32 to vector<1x64xf32>
    %263 = arith.maximumf %261, %262 : vector<1x64xf32>
    %264 = vector.broadcast %256 : vector<1x64xf32> to vector<16x64xf32>
    %265 = arith.subf %241, %264 : vector<16x64xf32>
    %cst_98 = arith.constant 9.99999974E-6 : f32
    %266 = vector.broadcast %cst_98 : f32 to vector<1x64xf32>
    %267 = arith.addf %263, %266 : vector<1x64xf32>
    %268 = math.rsqrt %267 : vector<1x64xf32>
    %269 = vector.broadcast %268 : vector<1x64xf32> to vector<16x64xf32>
    %270 = arith.mulf %265, %269 : vector<16x64xf32>
    %271 = vector.broadcast %14 : f32 to vector<16x64xf32>
    %272 = arith.mulf %271, %270 : vector<16x64xf32>
    %273 = arith.addf %168, %272 : vector<16x64xf32>
    %c0_99 = arith.constant 0 : index
    %c2_100 = arith.constant 2 : index
    %c0_101 = arith.constant 0 : index
    %c0_102 = arith.constant 0 : index
    %c0_103 = arith.constant 0 : index
    %274 = vector.load %arg6[%c0_99, %c2_100, %c0_101, %c0_102, %c0_103] : memref<1x3x5x5x128xf32, #tpu.memory_space<vmem>>, vector<1x1x5x5x128xf32>
    %275 = vector.shape_cast %274 : vector<1x1x5x5x128xf32> to vector<5x5x128xf32>
    %c0_104 = arith.constant 0 : index
    %c0_105 = arith.constant 0 : index
    %c0_106 = arith.constant 0 : index
    %276 = vector.load %arg9[%c0_104, %c0_105, %c0_106] : memref<2x16x128xf32, #tpu.memory_space<vmem>>, vector<2x8x128xf32>
    %c32_i32_107 = arith.constant 32 : i32
    %277 = tpu.dynamic_rotate %276 by %c32_i32_107 dim 2 : vector<2x8x128xf32>, i32 -> vector<2x8x128xf32>
    %278 = vector.extract_strided_slice %275 {offsets = [0, 0, 0], sizes = [1, 1, 128], strides = [1, 1, 1]} : vector<5x5x128xf32> to vector<1x1x128xf32>
    %279 = vector.shape_cast %278 : vector<1x1x128xf32> to vector<128xf32>
    %280 = vector.shape_cast %279 : vector<128xf32> to vector<1x1x128xf32>
    %281 = vector.broadcast %280 : vector<1x1x128xf32> to vector<2x8x128xf32>
    %282 = arith.mulf %277, %281 : vector<2x8x128xf32>
    %c16_i32_108 = arith.constant 16 : i32
    %283 = tpu.dynamic_rotate %276 by %c16_i32_108 dim 2 : vector<2x8x128xf32>, i32 -> vector<2x8x128xf32>
    %284 = vector.extract_strided_slice %275 {offsets = [0, 1, 0], sizes = [1, 1, 128], strides = [1, 1, 1]} : vector<5x5x128xf32> to vector<1x1x128xf32>
    %285 = vector.shape_cast %284 : vector<1x1x128xf32> to vector<128xf32>
    %286 = vector.shape_cast %285 : vector<128xf32> to vector<1x1x128xf32>
    %287 = vector.broadcast %286 : vector<1x1x128xf32> to vector<2x8x128xf32>
    %288 = arith.mulf %283, %287 : vector<2x8x128xf32>
    %289 = arith.addf %282, %288 : vector<2x8x128xf32>
    %290 = vector.extract_strided_slice %275 {offsets = [0, 2, 0], sizes = [1, 1, 128], strides = [1, 1, 1]} : vector<5x5x128xf32> to vector<1x1x128xf32>
    %291 = vector.shape_cast %290 : vector<1x1x128xf32> to vector<128xf32>
    %292 = vector.shape_cast %291 : vector<128xf32> to vector<1x1x128xf32>
    %293 = vector.broadcast %292 : vector<1x1x128xf32> to vector<2x8x128xf32>
    %294 = arith.mulf %276, %293 : vector<2x8x128xf32>
    %295 = arith.addf %289, %294 : vector<2x8x128xf32>
    %c112_i32_109 = arith.constant 112 : i32
    %296 = tpu.dynamic_rotate %276 by %c112_i32_109 dim 2 : vector<2x8x128xf32>, i32 -> vector<2x8x128xf32>
    %297 = vector.extract_strided_slice %275 {offsets = [0, 3, 0], sizes = [1, 1, 128], strides = [1, 1, 1]} : vector<5x5x128xf32> to vector<1x1x128xf32>
    %298 = vector.shape_cast %297 : vector<1x1x128xf32> to vector<128xf32>
    %299 = vector.shape_cast %298 : vector<128xf32> to vector<1x1x128xf32>
    %300 = vector.broadcast %299 : vector<1x1x128xf32> to vector<2x8x128xf32>
    %301 = arith.mulf %296, %300 : vector<2x8x128xf32>
    %302 = arith.addf %295, %301 : vector<2x8x128xf32>
    %c96_i32 = arith.constant 96 : i32
    %303 = tpu.dynamic_rotate %276 by %c96_i32 dim 2 : vector<2x8x128xf32>, i32 -> vector<2x8x128xf32>
    %304 = vector.extract_strided_slice %275 {offsets = [0, 4, 0], sizes = [1, 1, 128], strides = [1, 1, 1]} : vector<5x5x128xf32> to vector<1x1x128xf32>
    %305 = vector.shape_cast %304 : vector<1x1x128xf32> to vector<128xf32>
    %306 = vector.shape_cast %305 : vector<128xf32> to vector<1x1x128xf32>
    %307 = vector.broadcast %306 : vector<1x1x128xf32> to vector<2x8x128xf32>
    %308 = arith.mulf %303, %307 : vector<2x8x128xf32>
    %309 = arith.addf %302, %308 : vector<2x8x128xf32>
    %c0_110 = arith.constant 0 : index
    %c2_111 = arith.constant 2 : index
    %c0_112 = arith.constant 0 : index
    %310 = vector.load %arg9[%c0_110, %c2_111, %c0_112] : memref<2x16x128xf32, #tpu.memory_space<vmem>>, vector<2x8x128xf32>
    %c32_i32_113 = arith.constant 32 : i32
    %311 = tpu.dynamic_rotate %310 by %c32_i32_113 dim 2 : vector<2x8x128xf32>, i32 -> vector<2x8x128xf32>
    %312 = vector.extract_strided_slice %275 {offsets = [1, 0, 0], sizes = [1, 1, 128], strides = [1, 1, 1]} : vector<5x5x128xf32> to vector<1x1x128xf32>
    %313 = vector.shape_cast %312 : vector<1x1x128xf32> to vector<128xf32>
    %314 = vector.shape_cast %313 : vector<128xf32> to vector<1x1x128xf32>
    %315 = vector.broadcast %314 : vector<1x1x128xf32> to vector<2x8x128xf32>
    %316 = arith.mulf %311, %315 : vector<2x8x128xf32>
    %317 = arith.addf %309, %316 : vector<2x8x128xf32>
    %c16_i32_114 = arith.constant 16 : i32
    %318 = tpu.dynamic_rotate %310 by %c16_i32_114 dim 2 : vector<2x8x128xf32>, i32 -> vector<2x8x128xf32>
    %319 = vector.extract_strided_slice %275 {offsets = [1, 1, 0], sizes = [1, 1, 128], strides = [1, 1, 1]} : vector<5x5x128xf32> to vector<1x1x128xf32>
    %320 = vector.shape_cast %319 : vector<1x1x128xf32> to vector<128xf32>
    %321 = vector.shape_cast %320 : vector<128xf32> to vector<1x1x128xf32>
    %322 = vector.broadcast %321 : vector<1x1x128xf32> to vector<2x8x128xf32>
    %323 = arith.mulf %318, %322 : vector<2x8x128xf32>
    %324 = arith.addf %317, %323 : vector<2x8x128xf32>
    %325 = vector.extract_strided_slice %275 {offsets = [1, 2, 0], sizes = [1, 1, 128], strides = [1, 1, 1]} : vector<5x5x128xf32> to vector<1x1x128xf32>
    %326 = vector.shape_cast %325 : vector<1x1x128xf32> to vector<128xf32>
    %327 = vector.shape_cast %326 : vector<128xf32> to vector<1x1x128xf32>
    %328 = vector.broadcast %327 : vector<1x1x128xf32> to vector<2x8x128xf32>
    %329 = arith.mulf %310, %328 : vector<2x8x128xf32>
    %330 = arith.addf %324, %329 : vector<2x8x128xf32>
    %c112_i32_115 = arith.constant 112 : i32
    %331 = tpu.dynamic_rotate %310 by %c112_i32_115 dim 2 : vector<2x8x128xf32>, i32 -> vector<2x8x128xf32>
    %332 = vector.extract_strided_slice %275 {offsets = [1, 3, 0], sizes = [1, 1, 128], strides = [1, 1, 1]} : vector<5x5x128xf32> to vector<1x1x128xf32>
    %333 = vector.shape_cast %332 : vector<1x1x128xf32> to vector<128xf32>
    %334 = vector.shape_cast %333 : vector<128xf32> to vector<1x1x128xf32>
    %335 = vector.broadcast %334 : vector<1x1x128xf32> to vector<2x8x128xf32>
    %336 = arith.mulf %331, %335 : vector<2x8x128xf32>
    %337 = arith.addf %330, %336 : vector<2x8x128xf32>
    %c96_i32_116 = arith.constant 96 : i32
    %338 = tpu.dynamic_rotate %310 by %c96_i32_116 dim 2 : vector<2x8x128xf32>, i32 -> vector<2x8x128xf32>
    %339 = vector.extract_strided_slice %275 {offsets = [1, 4, 0], sizes = [1, 1, 128], strides = [1, 1, 1]} : vector<5x5x128xf32> to vector<1x1x128xf32>
    %340 = vector.shape_cast %339 : vector<1x1x128xf32> to vector<128xf32>
    %341 = vector.shape_cast %340 : vector<128xf32> to vector<1x1x128xf32>
    %342 = vector.broadcast %341 : vector<1x1x128xf32> to vector<2x8x128xf32>
    %343 = arith.mulf %338, %342 : vector<2x8x128xf32>
    %344 = arith.addf %337, %343 : vector<2x8x128xf32>
    %c0_117 = arith.constant 0 : index
    %c4_118 = arith.constant 4 : index
    %c0_119 = arith.constant 0 : index
    %345 = vector.load %arg9[%c0_117, %c4_118, %c0_119] : memref<2x16x128xf32, #tpu.memory_space<vmem>>, vector<2x8x128xf32>
    %c32_i32_120 = arith.constant 32 : i32
    %346 = tpu.dynamic_rotate %345 by %c32_i32_120 dim 2 : vector<2x8x128xf32>, i32 -> vector<2x8x128xf32>
    %347 = vector.extract_strided_slice %275 {offsets = [2, 0, 0], sizes = [1, 1, 128], strides = [1, 1, 1]} : vector<5x5x128xf32> to vector<1x1x128xf32>
    %348 = vector.shape_cast %347 : vector<1x1x128xf32> to vector<128xf32>
    %349 = vector.shape_cast %348 : vector<128xf32> to vector<1x1x128xf32>
    %350 = vector.broadcast %349 : vector<1x1x128xf32> to vector<2x8x128xf32>
    %351 = arith.mulf %346, %350 : vector<2x8x128xf32>
    %352 = arith.addf %344, %351 : vector<2x8x128xf32>
    %c16_i32_121 = arith.constant 16 : i32
    %353 = tpu.dynamic_rotate %345 by %c16_i32_121 dim 2 : vector<2x8x128xf32>, i32 -> vector<2x8x128xf32>
    %354 = vector.extract_strided_slice %275 {offsets = [2, 1, 0], sizes = [1, 1, 128], strides = [1, 1, 1]} : vector<5x5x128xf32> to vector<1x1x128xf32>
    %355 = vector.shape_cast %354 : vector<1x1x128xf32> to vector<128xf32>
    %356 = vector.shape_cast %355 : vector<128xf32> to vector<1x1x128xf32>
    %357 = vector.broadcast %356 : vector<1x1x128xf32> to vector<2x8x128xf32>
    %358 = arith.mulf %353, %357 : vector<2x8x128xf32>
    %359 = arith.addf %352, %358 : vector<2x8x128xf32>
    %360 = vector.extract_strided_slice %275 {offsets = [2, 2, 0], sizes = [1, 1, 128], strides = [1, 1, 1]} : vector<5x5x128xf32> to vector<1x1x128xf32>
    %361 = vector.shape_cast %360 : vector<1x1x128xf32> to vector<128xf32>
    %362 = vector.shape_cast %361 : vector<128xf32> to vector<1x1x128xf32>
    %363 = vector.broadcast %362 : vector<1x1x128xf32> to vector<2x8x128xf32>
    %364 = arith.mulf %345, %363 : vector<2x8x128xf32>
    %365 = arith.addf %359, %364 : vector<2x8x128xf32>
    %c112_i32_122 = arith.constant 112 : i32
    %366 = tpu.dynamic_rotate %345 by %c112_i32_122 dim 2 : vector<2x8x128xf32>, i32 -> vector<2x8x128xf32>
    %367 = vector.extract_strided_slice %275 {offsets = [2, 3, 0], sizes = [1, 1, 128], strides = [1, 1, 1]} : vector<5x5x128xf32> to vector<1x1x128xf32>
    %368 = vector.shape_cast %367 : vector<1x1x128xf32> to vector<128xf32>
    %369 = vector.shape_cast %368 : vector<128xf32> to vector<1x1x128xf32>
    %370 = vector.broadcast %369 : vector<1x1x128xf32> to vector<2x8x128xf32>
    %371 = arith.mulf %366, %370 : vector<2x8x128xf32>
    %372 = arith.addf %365, %371 : vector<2x8x128xf32>
    %c96_i32_123 = arith.constant 96 : i32
    %373 = tpu.dynamic_rotate %345 by %c96_i32_123 dim 2 : vector<2x8x128xf32>, i32 -> vector<2x8x128xf32>
    %374 = vector.extract_strided_slice %275 {offsets = [2, 4, 0], sizes = [1, 1, 128], strides = [1, 1, 1]} : vector<5x5x128xf32> to vector<1x1x128xf32>
    %375 = vector.shape_cast %374 : vector<1x1x128xf32> to vector<128xf32>
    %376 = vector.shape_cast %375 : vector<128xf32> to vector<1x1x128xf32>
    %377 = vector.broadcast %376 : vector<1x1x128xf32> to vector<2x8x128xf32>
    %378 = arith.mulf %373, %377 : vector<2x8x128xf32>
    %379 = arith.addf %372, %378 : vector<2x8x128xf32>
    %c0_124 = arith.constant 0 : index
    %c6_125 = arith.constant 6 : index
    %c0_126 = arith.constant 0 : index
    %380 = vector.load %arg9[%c0_124, %c6_125, %c0_126] : memref<2x16x128xf32, #tpu.memory_space<vmem>>, vector<2x8x128xf32>
    %c32_i32_127 = arith.constant 32 : i32
    %381 = tpu.dynamic_rotate %380 by %c32_i32_127 dim 2 : vector<2x8x128xf32>, i32 -> vector<2x8x128xf32>
    %382 = vector.extract_strided_slice %275 {offsets = [3, 0, 0], sizes = [1, 1, 128], strides = [1, 1, 1]} : vector<5x5x128xf32> to vector<1x1x128xf32>
    %383 = vector.shape_cast %382 : vector<1x1x128xf32> to vector<128xf32>
    %384 = vector.shape_cast %383 : vector<128xf32> to vector<1x1x128xf32>
    %385 = vector.broadcast %384 : vector<1x1x128xf32> to vector<2x8x128xf32>
    %386 = arith.mulf %381, %385 : vector<2x8x128xf32>
    %387 = arith.addf %379, %386 : vector<2x8x128xf32>
    %c16_i32_128 = arith.constant 16 : i32
    %388 = tpu.dynamic_rotate %380 by %c16_i32_128 dim 2 : vector<2x8x128xf32>, i32 -> vector<2x8x128xf32>
    %389 = vector.extract_strided_slice %275 {offsets = [3, 1, 0], sizes = [1, 1, 128], strides = [1, 1, 1]} : vector<5x5x128xf32> to vector<1x1x128xf32>
    %390 = vector.shape_cast %389 : vector<1x1x128xf32> to vector<128xf32>
    %391 = vector.shape_cast %390 : vector<128xf32> to vector<1x1x128xf32>
    %392 = vector.broadcast %391 : vector<1x1x128xf32> to vector<2x8x128xf32>
    %393 = arith.mulf %388, %392 : vector<2x8x128xf32>
    %394 = arith.addf %387, %393 : vector<2x8x128xf32>
    %395 = vector.extract_strided_slice %275 {offsets = [3, 2, 0], sizes = [1, 1, 128], strides = [1, 1, 1]} : vector<5x5x128xf32> to vector<1x1x128xf32>
    %396 = vector.shape_cast %395 : vector<1x1x128xf32> to vector<128xf32>
    %397 = vector.shape_cast %396 : vector<128xf32> to vector<1x1x128xf32>
    %398 = vector.broadcast %397 : vector<1x1x128xf32> to vector<2x8x128xf32>
    %399 = arith.mulf %380, %398 : vector<2x8x128xf32>
    %400 = arith.addf %394, %399 : vector<2x8x128xf32>
    %c112_i32_129 = arith.constant 112 : i32
    %401 = tpu.dynamic_rotate %380 by %c112_i32_129 dim 2 : vector<2x8x128xf32>, i32 -> vector<2x8x128xf32>
    %402 = vector.extract_strided_slice %275 {offsets = [3, 3, 0], sizes = [1, 1, 128], strides = [1, 1, 1]} : vector<5x5x128xf32> to vector<1x1x128xf32>
    %403 = vector.shape_cast %402 : vector<1x1x128xf32> to vector<128xf32>
    %404 = vector.shape_cast %403 : vector<128xf32> to vector<1x1x128xf32>
    %405 = vector.broadcast %404 : vector<1x1x128xf32> to vector<2x8x128xf32>
    %406 = arith.mulf %401, %405 : vector<2x8x128xf32>
    %407 = arith.addf %400, %406 : vector<2x8x128xf32>
    %c96_i32_130 = arith.constant 96 : i32
    %408 = tpu.dynamic_rotate %380 by %c96_i32_130 dim 2 : vector<2x8x128xf32>, i32 -> vector<2x8x128xf32>
    %409 = vector.extract_strided_slice %275 {offsets = [3, 4, 0], sizes = [1, 1, 128], strides = [1, 1, 1]} : vector<5x5x128xf32> to vector<1x1x128xf32>
    %410 = vector.shape_cast %409 : vector<1x1x128xf32> to vector<128xf32>
    %411 = vector.shape_cast %410 : vector<128xf32> to vector<1x1x128xf32>
    %412 = vector.broadcast %411 : vector<1x1x128xf32> to vector<2x8x128xf32>
    %413 = arith.mulf %408, %412 : vector<2x8x128xf32>
    %414 = arith.addf %407, %413 : vector<2x8x128xf32>
    %c0_131 = arith.constant 0 : index
    %c8_132 = arith.constant 8 : index
    %c0_133 = arith.constant 0 : index
    %415 = vector.load %arg9[%c0_131, %c8_132, %c0_133] : memref<2x16x128xf32, #tpu.memory_space<vmem>>, vector<2x8x128xf32>
    %c32_i32_134 = arith.constant 32 : i32
    %416 = tpu.dynamic_rotate %415 by %c32_i32_134 dim 2 : vector<2x8x128xf32>, i32 -> vector<2x8x128xf32>
    %417 = vector.extract_strided_slice %275 {offsets = [4, 0, 0], sizes = [1, 1, 128], strides = [1, 1, 1]} : vector<5x5x128xf32> to vector<1x1x128xf32>
    %418 = vector.shape_cast %417 : vector<1x1x128xf32> to vector<128xf32>
    %419 = vector.shape_cast %418 : vector<128xf32> to vector<1x1x128xf32>
    %420 = vector.broadcast %419 : vector<1x1x128xf32> to vector<2x8x128xf32>
    %421 = arith.mulf %416, %420 : vector<2x8x128xf32>
    %422 = arith.addf %414, %421 : vector<2x8x128xf32>
    %c16_i32_135 = arith.constant 16 : i32
    %423 = tpu.dynamic_rotate %415 by %c16_i32_135 dim 2 : vector<2x8x128xf32>, i32 -> vector<2x8x128xf32>
    %424 = vector.extract_strided_slice %275 {offsets = [4, 1, 0], sizes = [1, 1, 128], strides = [1, 1, 1]} : vector<5x5x128xf32> to vector<1x1x128xf32>
    %425 = vector.shape_cast %424 : vector<1x1x128xf32> to vector<128xf32>
    %426 = vector.shape_cast %425 : vector<128xf32> to vector<1x1x128xf32>
    %427 = vector.broadcast %426 : vector<1x1x128xf32> to vector<2x8x128xf32>
    %428 = arith.mulf %423, %427 : vector<2x8x128xf32>
    %429 = arith.addf %422, %428 : vector<2x8x128xf32>
    %430 = vector.extract_strided_slice %275 {offsets = [4, 2, 0], sizes = [1, 1, 128], strides = [1, 1, 1]} : vector<5x5x128xf32> to vector<1x1x128xf32>
    %431 = vector.shape_cast %430 : vector<1x1x128xf32> to vector<128xf32>
    %432 = vector.shape_cast %431 : vector<128xf32> to vector<1x1x128xf32>
    %433 = vector.broadcast %432 : vector<1x1x128xf32> to vector<2x8x128xf32>
    %434 = arith.mulf %415, %433 : vector<2x8x128xf32>
    %435 = arith.addf %429, %434 : vector<2x8x128xf32>
    %c112_i32_136 = arith.constant 112 : i32
    %436 = tpu.dynamic_rotate %415 by %c112_i32_136 dim 2 : vector<2x8x128xf32>, i32 -> vector<2x8x128xf32>
    %437 = vector.extract_strided_slice %275 {offsets = [4, 3, 0], sizes = [1, 1, 128], strides = [1, 1, 1]} : vector<5x5x128xf32> to vector<1x1x128xf32>
    %438 = vector.shape_cast %437 : vector<1x1x128xf32> to vector<128xf32>
    %439 = vector.shape_cast %438 : vector<128xf32> to vector<1x1x128xf32>
    %440 = vector.broadcast %439 : vector<1x1x128xf32> to vector<2x8x128xf32>
    %441 = arith.mulf %436, %440 : vector<2x8x128xf32>
    %442 = arith.addf %435, %441 : vector<2x8x128xf32>
    %c96_i32_137 = arith.constant 96 : i32
    %443 = tpu.dynamic_rotate %415 by %c96_i32_137 dim 2 : vector<2x8x128xf32>, i32 -> vector<2x8x128xf32>
    %444 = vector.extract_strided_slice %275 {offsets = [4, 4, 0], sizes = [1, 1, 128], strides = [1, 1, 1]} : vector<5x5x128xf32> to vector<1x1x128xf32>
    %445 = vector.shape_cast %444 : vector<1x1x128xf32> to vector<128xf32>
    %446 = vector.shape_cast %445 : vector<128xf32> to vector<1x1x128xf32>
    %447 = vector.broadcast %446 : vector<1x1x128xf32> to vector<2x8x128xf32>
    %448 = arith.mulf %443, %447 : vector<2x8x128xf32>
    %449 = arith.addf %442, %448 : vector<2x8x128xf32>
    %450 = vector.extract_strided_slice %449 {offsets = [0, 0, 32], sizes = [2, 8, 64], strides = [1, 1, 1]} : vector<2x8x128xf32> to vector<2x8x64xf32>
    %451 = vector.shape_cast %450 : vector<2x8x64xf32> to vector<16x64xf32>
    %c0_138 = arith.constant 0 : index
    %c5_139 = arith.constant 5 : index
    %c0_140 = arith.constant 0 : index
    %c0_141 = arith.constant 0 : index
    %452 = vector.load %arg7[%c0_138, %c5_139, %c0_140, %c0_141] : memref<1x6x64x64xf32, #tpu.memory_space<vmem>>, vector<1x1x64x64xf32>
    %453 = vector.shape_cast %452 : vector<1x1x64x64xf32> to vector<64x64xf32>
    %cst_142 = arith.constant dense<0.000000e+00> : vector<16x64xf32>
    %454 = tpu.matmul %451, %453, %cst_142 {dimension_numbers = #tpu.dot_dimension_numbers<[1], [0], [0], [1], [0, 0, 1, 1], [], []>} : vector<16x64xf32>, vector<64x64xf32>, vector<16x64xf32> -> vector<16x64xf32>
    %cst_143 = arith.constant dense<0.000000e+00> : vector<64xf32>
    %455 = vector.multi_reduction <add>, %454, %cst_143 [0] : vector<16x64xf32> to vector<64xf32>
    %456 = vector.shape_cast %455 : vector<64xf32> to vector<1x64xf32>
    %457 = arith.mulf %454, %454 : vector<16x64xf32>
    %cst_144 = arith.constant dense<0.000000e+00> : vector<64xf32>
    %458 = vector.multi_reduction <add>, %457, %cst_144 [0] : vector<16x64xf32> to vector<64xf32>
    %459 = vector.shape_cast %458 : vector<64xf32> to vector<1x64xf32>
    %460 = tpu.concatenate %456, %459 in 0 : vector<1x64xf32>, vector<1x64xf32> -> vector<2x64xf32>
    %c8_i32_145 = arith.constant 8 : i32
    %461 = tpu.dynamic_rotate %460 by %c8_i32_145 dim 1 : vector<2x64xf32>, i32 -> vector<2x64xf32>
    %462 = arith.addf %460, %461 : vector<2x64xf32>
    %c16_i32_146 = arith.constant 16 : i32
    %463 = tpu.dynamic_rotate %462 by %c16_i32_146 dim 1 : vector<2x64xf32>, i32 -> vector<2x64xf32>
    %464 = arith.addf %462, %463 : vector<2x64xf32>
    %c32_i32_147 = arith.constant 32 : i32
    %465 = tpu.dynamic_rotate %464 by %c32_i32_147 dim 1 : vector<2x64xf32>, i32 -> vector<2x64xf32>
    %466 = arith.addf %464, %465 : vector<2x64xf32>
    %467 = vector.extract_strided_slice %466 {offsets = [0, 0], sizes = [1, 64], strides = [1, 1]} : vector<2x64xf32> to vector<1x64xf32>
    %cst_148 = arith.constant 7.812500e-03 : f32
    %468 = vector.broadcast %cst_148 : f32 to vector<1x64xf32>
    %469 = arith.mulf %467, %468 : vector<1x64xf32>
    %470 = vector.extract_strided_slice %466 {offsets = [1, 0], sizes = [1, 64], strides = [1, 1]} : vector<2x64xf32> to vector<1x64xf32>
    %cst_149 = arith.constant 7.812500e-03 : f32
    %471 = vector.broadcast %cst_149 : f32 to vector<1x64xf32>
    %472 = arith.mulf %470, %471 : vector<1x64xf32>
    %473 = arith.mulf %469, %469 : vector<1x64xf32>
    %474 = arith.subf %472, %473 : vector<1x64xf32>
    %cst_150 = arith.constant 0.000000e+00 : f32
    %475 = vector.broadcast %cst_150 : f32 to vector<1x64xf32>
    %476 = arith.maximumf %474, %475 : vector<1x64xf32>
    %477 = vector.broadcast %469 : vector<1x64xf32> to vector<16x64xf32>
    %478 = arith.subf %454, %477 : vector<16x64xf32>
    %cst_151 = arith.constant 9.99999974E-6 : f32
    %479 = vector.broadcast %cst_151 : f32 to vector<1x64xf32>
    %480 = arith.addf %476, %479 : vector<1x64xf32>
    %481 = math.rsqrt %480 : vector<1x64xf32>
    %482 = vector.broadcast %481 : vector<1x64xf32> to vector<16x64xf32>
    %483 = arith.mulf %478, %482 : vector<16x64xf32>
    %484 = vector.broadcast %16 : f32 to vector<16x64xf32>
    %485 = arith.mulf %484, %483 : vector<16x64xf32>
    %486 = arith.addf %273, %485 : vector<16x64xf32>
    %c0_152 = arith.constant 0 : index
    %c0_153 = arith.constant 0 : index
    %c0_154 = arith.constant 0 : index
    %c0_155 = arith.constant 0 : index
    %c0_156 = arith.constant 0 : index
    %487 = vector.load %arg5[%c0_152, %c0_153, %c0_154, %c0_155, %c0_156] : memref<1x3x3x3x128xf32, #tpu.memory_space<vmem>>, vector<1x1x3x3x128xf32>
    %488 = vector.shape_cast %487 : vector<1x1x3x3x128xf32> to vector<3x3x128xf32>
    %c0_157 = arith.constant 0 : index
    %c3_158 = arith.constant 3 : index
    %c0_159 = arith.constant 0 : index
    %489 = vector.load %arg9[%c0_157, %c3_158, %c0_159] : memref<2x16x128xf32, #tpu.memory_space<vmem>>, vector<2x8x128xf32>
    %c8_i32_160 = arith.constant 8 : i32
    %490 = tpu.dynamic_rotate %489 by %c8_i32_160 dim 2 : vector<2x8x128xf32>, i32 -> vector<2x8x128xf32>
    %491 = vector.extract_strided_slice %488 {offsets = [0, 0, 0], sizes = [1, 1, 128], strides = [1, 1, 1]} : vector<3x3x128xf32> to vector<1x1x128xf32>
    %492 = vector.shape_cast %491 : vector<1x1x128xf32> to vector<128xf32>
    %493 = vector.shape_cast %492 : vector<128xf32> to vector<1x1x128xf32>
    %494 = vector.broadcast %493 : vector<1x1x128xf32> to vector<2x8x128xf32>
    %495 = arith.mulf %490, %494 : vector<2x8x128xf32>
    %496 = vector.extract_strided_slice %488 {offsets = [0, 1, 0], sizes = [1, 1, 128], strides = [1, 1, 1]} : vector<3x3x128xf32> to vector<1x1x128xf32>
    %497 = vector.shape_cast %496 : vector<1x1x128xf32> to vector<128xf32>
    %498 = vector.shape_cast %497 : vector<128xf32> to vector<1x1x128xf32>
    %499 = vector.broadcast %498 : vector<1x1x128xf32> to vector<2x8x128xf32>
    %500 = arith.mulf %489, %499 : vector<2x8x128xf32>
    %501 = arith.addf %495, %500 : vector<2x8x128xf32>
    %c120_i32_161 = arith.constant 120 : i32
    %502 = tpu.dynamic_rotate %489 by %c120_i32_161 dim 2 : vector<2x8x128xf32>, i32 -> vector<2x8x128xf32>
    %503 = vector.extract_strided_slice %488 {offsets = [0, 2, 0], sizes = [1, 1, 128], strides = [1, 1, 1]} : vector<3x3x128xf32> to vector<1x1x128xf32>
    %504 = vector.shape_cast %503 : vector<1x1x128xf32> to vector<128xf32>
    %505 = vector.shape_cast %504 : vector<128xf32> to vector<1x1x128xf32>
    %506 = vector.broadcast %505 : vector<1x1x128xf32> to vector<2x8x128xf32>
    %507 = arith.mulf %502, %506 : vector<2x8x128xf32>
    %508 = arith.addf %501, %507 : vector<2x8x128xf32>
    %c0_162 = arith.constant 0 : index
    %c4_163 = arith.constant 4 : index
    %c0_164 = arith.constant 0 : index
    %509 = vector.load %arg9[%c0_162, %c4_163, %c0_164] : memref<2x16x128xf32, #tpu.memory_space<vmem>>, vector<2x8x128xf32>
    %c8_i32_165 = arith.constant 8 : i32
    %510 = tpu.dynamic_rotate %509 by %c8_i32_165 dim 2 : vector<2x8x128xf32>, i32 -> vector<2x8x128xf32>
    %511 = vector.extract_strided_slice %488 {offsets = [1, 0, 0], sizes = [1, 1, 128], strides = [1, 1, 1]} : vector<3x3x128xf32> to vector<1x1x128xf32>
    %512 = vector.shape_cast %511 : vector<1x1x128xf32> to vector<128xf32>
    %513 = vector.shape_cast %512 : vector<128xf32> to vector<1x1x128xf32>
    %514 = vector.broadcast %513 : vector<1x1x128xf32> to vector<2x8x128xf32>
    %515 = arith.mulf %510, %514 : vector<2x8x128xf32>
    %516 = arith.addf %508, %515 : vector<2x8x128xf32>
    %517 = vector.extract_strided_slice %488 {offsets = [1, 1, 0], sizes = [1, 1, 128], strides = [1, 1, 1]} : vector<3x3x128xf32> to vector<1x1x128xf32>
    %518 = vector.shape_cast %517 : vector<1x1x128xf32> to vector<128xf32>
    %519 = vector.shape_cast %518 : vector<128xf32> to vector<1x1x128xf32>
    %520 = vector.broadcast %519 : vector<1x1x128xf32> to vector<2x8x128xf32>
    %521 = arith.mulf %509, %520 : vector<2x8x128xf32>
    %522 = arith.addf %516, %521 : vector<2x8x128xf32>
    %c120_i32_166 = arith.constant 120 : i32
    %523 = tpu.dynamic_rotate %509 by %c120_i32_166 dim 2 : vector<2x8x128xf32>, i32 -> vector<2x8x128xf32>
    %524 = vector.extract_strided_slice %488 {offsets = [1, 2, 0], sizes = [1, 1, 128], strides = [1, 1, 1]} : vector<3x3x128xf32> to vector<1x1x128xf32>
    %525 = vector.shape_cast %524 : vector<1x1x128xf32> to vector<128xf32>
    %526 = vector.shape_cast %525 : vector<128xf32> to vector<1x1x128xf32>
    %527 = vector.broadcast %526 : vector<1x1x128xf32> to vector<2x8x128xf32>
    %528 = arith.mulf %523, %527 : vector<2x8x128xf32>
    %529 = arith.addf %522, %528 : vector<2x8x128xf32>
    %c0_167 = arith.constant 0 : index
    %c5_168 = arith.constant 5 : index
    %c0_169 = arith.constant 0 : index
    %530 = vector.load %arg9[%c0_167, %c5_168, %c0_169] : memref<2x16x128xf32, #tpu.memory_space<vmem>>, vector<2x8x128xf32>
    %c8_i32_170 = arith.constant 8 : i32
    %531 = tpu.dynamic_rotate %530 by %c8_i32_170 dim 2 : vector<2x8x128xf32>, i32 -> vector<2x8x128xf32>
    %532 = vector.extract_strided_slice %488 {offsets = [2, 0, 0], sizes = [1, 1, 128], strides = [1, 1, 1]} : vector<3x3x128xf32> to vector<1x1x128xf32>
    %533 = vector.shape_cast %532 : vector<1x1x128xf32> to vector<128xf32>
    %534 = vector.shape_cast %533 : vector<128xf32> to vector<1x1x128xf32>
    %535 = vector.broadcast %534 : vector<1x1x128xf32> to vector<2x8x128xf32>
    %536 = arith.mulf %531, %535 : vector<2x8x128xf32>
    %537 = arith.addf %529, %536 : vector<2x8x128xf32>
    %538 = vector.extract_strided_slice %488 {offsets = [2, 1, 0], sizes = [1, 1, 128], strides = [1, 1, 1]} : vector<3x3x128xf32> to vector<1x1x128xf32>
    %539 = vector.shape_cast %538 : vector<1x1x128xf32> to vector<128xf32>
    %540 = vector.shape_cast %539 : vector<128xf32> to vector<1x1x128xf32>
    %541 = vector.broadcast %540 : vector<1x1x128xf32> to vector<2x8x128xf32>
    %542 = arith.mulf %530, %541 : vector<2x8x128xf32>
    %543 = arith.addf %537, %542 : vector<2x8x128xf32>
    %c120_i32_171 = arith.constant 120 : i32
    %544 = tpu.dynamic_rotate %530 by %c120_i32_171 dim 2 : vector<2x8x128xf32>, i32 -> vector<2x8x128xf32>
    %545 = vector.extract_strided_slice %488 {offsets = [2, 2, 0], sizes = [1, 1, 128], strides = [1, 1, 1]} : vector<3x3x128xf32> to vector<1x1x128xf32>
    %546 = vector.shape_cast %545 : vector<1x1x128xf32> to vector<128xf32>
    %547 = vector.shape_cast %546 : vector<128xf32> to vector<1x1x128xf32>
    %548 = vector.broadcast %547 : vector<1x1x128xf32> to vector<2x8x128xf32>
    %549 = arith.mulf %544, %548 : vector<2x8x128xf32>
    %550 = arith.addf %543, %549 : vector<2x8x128xf32>
    %551 = vector.extract_strided_slice %550 {offsets = [0, 0, 32], sizes = [2, 8, 64], strides = [1, 1, 1]} : vector<2x8x128xf32> to vector<2x8x64xf32>
    %552 = vector.shape_cast %551 : vector<2x8x64xf32> to vector<16x64xf32>
    %c0_172 = arith.constant 0 : index
    %c0_173 = arith.constant 0 : index
    %c0_174 = arith.constant 0 : index
    %c0_175 = arith.constant 0 : index
    %553 = vector.load %arg7[%c0_172, %c0_173, %c0_174, %c0_175] : memref<1x6x64x64xf32, #tpu.memory_space<vmem>>, vector<1x1x64x64xf32>
    %554 = vector.shape_cast %553 : vector<1x1x64x64xf32> to vector<64x64xf32>
    %cst_176 = arith.constant dense<0.000000e+00> : vector<16x64xf32>
    %555 = tpu.matmul %552, %554, %cst_176 {dimension_numbers = #tpu.dot_dimension_numbers<[1], [0], [0], [1], [0, 0, 1, 1], [], []>} : vector<16x64xf32>, vector<64x64xf32>, vector<16x64xf32> -> vector<16x64xf32>
    %cst_177 = arith.constant dense<0.000000e+00> : vector<64xf32>
    %556 = vector.multi_reduction <add>, %555, %cst_177 [0] : vector<16x64xf32> to vector<64xf32>
    %557 = vector.shape_cast %556 : vector<64xf32> to vector<1x64xf32>
    %558 = arith.mulf %555, %555 : vector<16x64xf32>
    %cst_178 = arith.constant dense<0.000000e+00> : vector<64xf32>
    %559 = vector.multi_reduction <add>, %558, %cst_178 [0] : vector<16x64xf32> to vector<64xf32>
    %560 = vector.shape_cast %559 : vector<64xf32> to vector<1x64xf32>
    %561 = tpu.concatenate %557, %560 in 0 : vector<1x64xf32>, vector<1x64xf32> -> vector<2x64xf32>
    %c8_i32_179 = arith.constant 8 : i32
    %562 = tpu.dynamic_rotate %561 by %c8_i32_179 dim 1 : vector<2x64xf32>, i32 -> vector<2x64xf32>
    %563 = arith.addf %561, %562 : vector<2x64xf32>
    %c16_i32_180 = arith.constant 16 : i32
    %564 = tpu.dynamic_rotate %563 by %c16_i32_180 dim 1 : vector<2x64xf32>, i32 -> vector<2x64xf32>
    %565 = arith.addf %563, %564 : vector<2x64xf32>
    %c32_i32_181 = arith.constant 32 : i32
    %566 = tpu.dynamic_rotate %565 by %c32_i32_181 dim 1 : vector<2x64xf32>, i32 -> vector<2x64xf32>
    %567 = arith.addf %565, %566 : vector<2x64xf32>
    %568 = vector.extract_strided_slice %567 {offsets = [0, 0], sizes = [1, 64], strides = [1, 1]} : vector<2x64xf32> to vector<1x64xf32>
    %cst_182 = arith.constant 7.812500e-03 : f32
    %569 = vector.broadcast %cst_182 : f32 to vector<1x64xf32>
    %570 = arith.mulf %568, %569 : vector<1x64xf32>
    %571 = vector.extract_strided_slice %567 {offsets = [1, 0], sizes = [1, 64], strides = [1, 1]} : vector<2x64xf32> to vector<1x64xf32>
    %cst_183 = arith.constant 7.812500e-03 : f32
    %572 = vector.broadcast %cst_183 : f32 to vector<1x64xf32>
    %573 = arith.mulf %571, %572 : vector<1x64xf32>
    %574 = arith.mulf %570, %570 : vector<1x64xf32>
    %575 = arith.subf %573, %574 : vector<1x64xf32>
    %cst_184 = arith.constant 0.000000e+00 : f32
    %576 = vector.broadcast %cst_184 : f32 to vector<1x64xf32>
    %577 = arith.maximumf %575, %576 : vector<1x64xf32>
    %578 = vector.broadcast %570 : vector<1x64xf32> to vector<16x64xf32>
    %579 = arith.subf %555, %578 : vector<16x64xf32>
    %cst_185 = arith.constant 9.99999974E-6 : f32
    %580 = vector.broadcast %cst_185 : f32 to vector<1x64xf32>
    %581 = arith.addf %577, %580 : vector<1x64xf32>
    %582 = math.rsqrt %581 : vector<1x64xf32>
    %583 = vector.broadcast %582 : vector<1x64xf32> to vector<16x64xf32>
    %584 = arith.mulf %579, %583 : vector<16x64xf32>
    %cst_186 = arith.constant 0.000000e+00 : f32
    %585 = vector.broadcast %cst_186 : f32 to vector<16x64xf32>
    %586 = arith.maximumf %584, %585 : vector<16x64xf32>
    %c0_187 = arith.constant 0 : index
    %c0_188 = arith.constant 0 : index
    %c0_189 = arith.constant 0 : index
    %c0_190 = arith.constant 0 : index
    %c0_191 = arith.constant 0 : index
    %587 = vector.load %arg6[%c0_187, %c0_188, %c0_189, %c0_190, %c0_191] : memref<1x3x5x5x128xf32, #tpu.memory_space<vmem>>, vector<1x1x5x5x128xf32>
    %588 = vector.shape_cast %587 : vector<1x1x5x5x128xf32> to vector<5x5x128xf32>
    %c0_192 = arith.constant 0 : index
    %c2_193 = arith.constant 2 : index
    %c0_194 = arith.constant 0 : index
    %589 = vector.load %arg9[%c0_192, %c2_193, %c0_194] : memref<2x16x128xf32, #tpu.memory_space<vmem>>, vector<2x8x128xf32>
    %c16_i32_195 = arith.constant 16 : i32
    %590 = tpu.dynamic_rotate %589 by %c16_i32_195 dim 2 : vector<2x8x128xf32>, i32 -> vector<2x8x128xf32>
    %591 = vector.extract_strided_slice %588 {offsets = [0, 0, 0], sizes = [1, 1, 128], strides = [1, 1, 1]} : vector<5x5x128xf32> to vector<1x1x128xf32>
    %592 = vector.shape_cast %591 : vector<1x1x128xf32> to vector<128xf32>
    %593 = vector.shape_cast %592 : vector<128xf32> to vector<1x1x128xf32>
    %594 = vector.broadcast %593 : vector<1x1x128xf32> to vector<2x8x128xf32>
    %595 = arith.mulf %590, %594 : vector<2x8x128xf32>
    %c8_i32_196 = arith.constant 8 : i32
    %596 = tpu.dynamic_rotate %589 by %c8_i32_196 dim 2 : vector<2x8x128xf32>, i32 -> vector<2x8x128xf32>
    %597 = vector.extract_strided_slice %588 {offsets = [0, 1, 0], sizes = [1, 1, 128], strides = [1, 1, 1]} : vector<5x5x128xf32> to vector<1x1x128xf32>
    %598 = vector.shape_cast %597 : vector<1x1x128xf32> to vector<128xf32>
    %599 = vector.shape_cast %598 : vector<128xf32> to vector<1x1x128xf32>
    %600 = vector.broadcast %599 : vector<1x1x128xf32> to vector<2x8x128xf32>
    %601 = arith.mulf %596, %600 : vector<2x8x128xf32>
    %602 = arith.addf %595, %601 : vector<2x8x128xf32>
    %603 = vector.extract_strided_slice %588 {offsets = [0, 2, 0], sizes = [1, 1, 128], strides = [1, 1, 1]} : vector<5x5x128xf32> to vector<1x1x128xf32>
    %604 = vector.shape_cast %603 : vector<1x1x128xf32> to vector<128xf32>
    %605 = vector.shape_cast %604 : vector<128xf32> to vector<1x1x128xf32>
    %606 = vector.broadcast %605 : vector<1x1x128xf32> to vector<2x8x128xf32>
    %607 = arith.mulf %589, %606 : vector<2x8x128xf32>
    %608 = arith.addf %602, %607 : vector<2x8x128xf32>
    %c120_i32_197 = arith.constant 120 : i32
    %609 = tpu.dynamic_rotate %589 by %c120_i32_197 dim 2 : vector<2x8x128xf32>, i32 -> vector<2x8x128xf32>
    %610 = vector.extract_strided_slice %588 {offsets = [0, 3, 0], sizes = [1, 1, 128], strides = [1, 1, 1]} : vector<5x5x128xf32> to vector<1x1x128xf32>
    %611 = vector.shape_cast %610 : vector<1x1x128xf32> to vector<128xf32>
    %612 = vector.shape_cast %611 : vector<128xf32> to vector<1x1x128xf32>
    %613 = vector.broadcast %612 : vector<1x1x128xf32> to vector<2x8x128xf32>
    %614 = arith.mulf %609, %613 : vector<2x8x128xf32>
    %615 = arith.addf %608, %614 : vector<2x8x128xf32>
    %c112_i32_198 = arith.constant 112 : i32
    %616 = tpu.dynamic_rotate %589 by %c112_i32_198 dim 2 : vector<2x8x128xf32>, i32 -> vector<2x8x128xf32>
    %617 = vector.extract_strided_slice %588 {offsets = [0, 4, 0], sizes = [1, 1, 128], strides = [1, 1, 1]} : vector<5x5x128xf32> to vector<1x1x128xf32>
    %618 = vector.shape_cast %617 : vector<1x1x128xf32> to vector<128xf32>
    %619 = vector.shape_cast %618 : vector<128xf32> to vector<1x1x128xf32>
    %620 = vector.broadcast %619 : vector<1x1x128xf32> to vector<2x8x128xf32>
    %621 = arith.mulf %616, %620 : vector<2x8x128xf32>
    %622 = arith.addf %615, %621 : vector<2x8x128xf32>
    %c0_199 = arith.constant 0 : index
    %c3_200 = arith.constant 3 : index
    %c0_201 = arith.constant 0 : index
    %623 = vector.load %arg9[%c0_199, %c3_200, %c0_201] : memref<2x16x128xf32, #tpu.memory_space<vmem>>, vector<2x8x128xf32>
    %c16_i32_202 = arith.constant 16 : i32
    %624 = tpu.dynamic_rotate %623 by %c16_i32_202 dim 2 : vector<2x8x128xf32>, i32 -> vector<2x8x128xf32>
    %625 = vector.extract_strided_slice %588 {offsets = [1, 0, 0], sizes = [1, 1, 128], strides = [1, 1, 1]} : vector<5x5x128xf32> to vector<1x1x128xf32>
    %626 = vector.shape_cast %625 : vector<1x1x128xf32> to vector<128xf32>
    %627 = vector.shape_cast %626 : vector<128xf32> to vector<1x1x128xf32>
    %628 = vector.broadcast %627 : vector<1x1x128xf32> to vector<2x8x128xf32>
    %629 = arith.mulf %624, %628 : vector<2x8x128xf32>
    %630 = arith.addf %622, %629 : vector<2x8x128xf32>
    %c8_i32_203 = arith.constant 8 : i32
    %631 = tpu.dynamic_rotate %623 by %c8_i32_203 dim 2 : vector<2x8x128xf32>, i32 -> vector<2x8x128xf32>
    %632 = vector.extract_strided_slice %588 {offsets = [1, 1, 0], sizes = [1, 1, 128], strides = [1, 1, 1]} : vector<5x5x128xf32> to vector<1x1x128xf32>
    %633 = vector.shape_cast %632 : vector<1x1x128xf32> to vector<128xf32>
    %634 = vector.shape_cast %633 : vector<128xf32> to vector<1x1x128xf32>
    %635 = vector.broadcast %634 : vector<1x1x128xf32> to vector<2x8x128xf32>
    %636 = arith.mulf %631, %635 : vector<2x8x128xf32>
    %637 = arith.addf %630, %636 : vector<2x8x128xf32>
    %638 = vector.extract_strided_slice %588 {offsets = [1, 2, 0], sizes = [1, 1, 128], strides = [1, 1, 1]} : vector<5x5x128xf32> to vector<1x1x128xf32>
    %639 = vector.shape_cast %638 : vector<1x1x128xf32> to vector<128xf32>
    %640 = vector.shape_cast %639 : vector<128xf32> to vector<1x1x128xf32>
    %641 = vector.broadcast %640 : vector<1x1x128xf32> to vector<2x8x128xf32>
    %642 = arith.mulf %623, %641 : vector<2x8x128xf32>
    %643 = arith.addf %637, %642 : vector<2x8x128xf32>
    %c120_i32_204 = arith.constant 120 : i32
    %644 = tpu.dynamic_rotate %623 by %c120_i32_204 dim 2 : vector<2x8x128xf32>, i32 -> vector<2x8x128xf32>
    %645 = vector.extract_strided_slice %588 {offsets = [1, 3, 0], sizes = [1, 1, 128], strides = [1, 1, 1]} : vector<5x5x128xf32> to vector<1x1x128xf32>
    %646 = vector.shape_cast %645 : vector<1x1x128xf32> to vector<128xf32>
    %647 = vector.shape_cast %646 : vector<128xf32> to vector<1x1x128xf32>
    %648 = vector.broadcast %647 : vector<1x1x128xf32> to vector<2x8x128xf32>
    %649 = arith.mulf %644, %648 : vector<2x8x128xf32>
    %650 = arith.addf %643, %649 : vector<2x8x128xf32>
    %c112_i32_205 = arith.constant 112 : i32
    %651 = tpu.dynamic_rotate %623 by %c112_i32_205 dim 2 : vector<2x8x128xf32>, i32 -> vector<2x8x128xf32>
    %652 = vector.extract_strided_slice %588 {offsets = [1, 4, 0], sizes = [1, 1, 128], strides = [1, 1, 1]} : vector<5x5x128xf32> to vector<1x1x128xf32>
    %653 = vector.shape_cast %652 : vector<1x1x128xf32> to vector<128xf32>
    %654 = vector.shape_cast %653 : vector<128xf32> to vector<1x1x128xf32>
    %655 = vector.broadcast %654 : vector<1x1x128xf32> to vector<2x8x128xf32>
    %656 = arith.mulf %651, %655 : vector<2x8x128xf32>
    %657 = arith.addf %650, %656 : vector<2x8x128xf32>
    %c0_206 = arith.constant 0 : index
    %c4_207 = arith.constant 4 : index
    %c0_208 = arith.constant 0 : index
    %658 = vector.load %arg9[%c0_206, %c4_207, %c0_208] : memref<2x16x128xf32, #tpu.memory_space<vmem>>, vector<2x8x128xf32>
    %c16_i32_209 = arith.constant 16 : i32
    %659 = tpu.dynamic_rotate %658 by %c16_i32_209 dim 2 : vector<2x8x128xf32>, i32 -> vector<2x8x128xf32>
    %660 = vector.extract_strided_slice %588 {offsets = [2, 0, 0], sizes = [1, 1, 128], strides = [1, 1, 1]} : vector<5x5x128xf32> to vector<1x1x128xf32>
    %661 = vector.shape_cast %660 : vector<1x1x128xf32> to vector<128xf32>
    %662 = vector.shape_cast %661 : vector<128xf32> to vector<1x1x128xf32>
    %663 = vector.broadcast %662 : vector<1x1x128xf32> to vector<2x8x128xf32>
    %664 = arith.mulf %659, %663 : vector<2x8x128xf32>
    %665 = arith.addf %657, %664 : vector<2x8x128xf32>
    %c8_i32_210 = arith.constant 8 : i32
    %666 = tpu.dynamic_rotate %658 by %c8_i32_210 dim 2 : vector<2x8x128xf32>, i32 -> vector<2x8x128xf32>
    %667 = vector.extract_strided_slice %588 {offsets = [2, 1, 0], sizes = [1, 1, 128], strides = [1, 1, 1]} : vector<5x5x128xf32> to vector<1x1x128xf32>
    %668 = vector.shape_cast %667 : vector<1x1x128xf32> to vector<128xf32>
    %669 = vector.shape_cast %668 : vector<128xf32> to vector<1x1x128xf32>
    %670 = vector.broadcast %669 : vector<1x1x128xf32> to vector<2x8x128xf32>
    %671 = arith.mulf %666, %670 : vector<2x8x128xf32>
    %672 = arith.addf %665, %671 : vector<2x8x128xf32>
    %673 = vector.extract_strided_slice %588 {offsets = [2, 2, 0], sizes = [1, 1, 128], strides = [1, 1, 1]} : vector<5x5x128xf32> to vector<1x1x128xf32>
    %674 = vector.shape_cast %673 : vector<1x1x128xf32> to vector<128xf32>
    %675 = vector.shape_cast %674 : vector<128xf32> to vector<1x1x128xf32>
    %676 = vector.broadcast %675 : vector<1x1x128xf32> to vector<2x8x128xf32>
    %677 = arith.mulf %658, %676 : vector<2x8x128xf32>
    %678 = arith.addf %672, %677 : vector<2x8x128xf32>
    %c120_i32_211 = arith.constant 120 : i32
    %679 = tpu.dynamic_rotate %658 by %c120_i32_211 dim 2 : vector<2x8x128xf32>, i32 -> vector<2x8x128xf32>
    %680 = vector.extract_strided_slice %588 {offsets = [2, 3, 0], sizes = [1, 1, 128], strides = [1, 1, 1]} : vector<5x5x128xf32> to vector<1x1x128xf32>
    %681 = vector.shape_cast %680 : vector<1x1x128xf32> to vector<128xf32>
    %682 = vector.shape_cast %681 : vector<128xf32> to vector<1x1x128xf32>
    %683 = vector.broadcast %682 : vector<1x1x128xf32> to vector<2x8x128xf32>
    %684 = arith.mulf %679, %683 : vector<2x8x128xf32>
    %685 = arith.addf %678, %684 : vector<2x8x128xf32>
    %c112_i32_212 = arith.constant 112 : i32
    %686 = tpu.dynamic_rotate %658 by %c112_i32_212 dim 2 : vector<2x8x128xf32>, i32 -> vector<2x8x128xf32>
    %687 = vector.extract_strided_slice %588 {offsets = [2, 4, 0], sizes = [1, 1, 128], strides = [1, 1, 1]} : vector<5x5x128xf32> to vector<1x1x128xf32>
    %688 = vector.shape_cast %687 : vector<1x1x128xf32> to vector<128xf32>
    %689 = vector.shape_cast %688 : vector<128xf32> to vector<1x1x128xf32>
    %690 = vector.broadcast %689 : vector<1x1x128xf32> to vector<2x8x128xf32>
    %691 = arith.mulf %686, %690 : vector<2x8x128xf32>
    %692 = arith.addf %685, %691 : vector<2x8x128xf32>
    %c0_213 = arith.constant 0 : index
    %c5_214 = arith.constant 5 : index
    %c0_215 = arith.constant 0 : index
    %693 = vector.load %arg9[%c0_213, %c5_214, %c0_215] : memref<2x16x128xf32, #tpu.memory_space<vmem>>, vector<2x8x128xf32>
    %c16_i32_216 = arith.constant 16 : i32
    %694 = tpu.dynamic_rotate %693 by %c16_i32_216 dim 2 : vector<2x8x128xf32>, i32 -> vector<2x8x128xf32>
    %695 = vector.extract_strided_slice %588 {offsets = [3, 0, 0], sizes = [1, 1, 128], strides = [1, 1, 1]} : vector<5x5x128xf32> to vector<1x1x128xf32>
    %696 = vector.shape_cast %695 : vector<1x1x128xf32> to vector<128xf32>
    %697 = vector.shape_cast %696 : vector<128xf32> to vector<1x1x128xf32>
    %698 = vector.broadcast %697 : vector<1x1x128xf32> to vector<2x8x128xf32>
    %699 = arith.mulf %694, %698 : vector<2x8x128xf32>
    %700 = arith.addf %692, %699 : vector<2x8x128xf32>
    %c8_i32_217 = arith.constant 8 : i32
    %701 = tpu.dynamic_rotate %693 by %c8_i32_217 dim 2 : vector<2x8x128xf32>, i32 -> vector<2x8x128xf32>
    %702 = vector.extract_strided_slice %588 {offsets = [3, 1, 0], sizes = [1, 1, 128], strides = [1, 1, 1]} : vector<5x5x128xf32> to vector<1x1x128xf32>
    %703 = vector.shape_cast %702 : vector<1x1x128xf32> to vector<128xf32>
    %704 = vector.shape_cast %703 : vector<128xf32> to vector<1x1x128xf32>
    %705 = vector.broadcast %704 : vector<1x1x128xf32> to vector<2x8x128xf32>
    %706 = arith.mulf %701, %705 : vector<2x8x128xf32>
    %707 = arith.addf %700, %706 : vector<2x8x128xf32>
    %708 = vector.extract_strided_slice %588 {offsets = [3, 2, 0], sizes = [1, 1, 128], strides = [1, 1, 1]} : vector<5x5x128xf32> to vector<1x1x128xf32>
    %709 = vector.shape_cast %708 : vector<1x1x128xf32> to vector<128xf32>
    %710 = vector.shape_cast %709 : vector<128xf32> to vector<1x1x128xf32>
    %711 = vector.broadcast %710 : vector<1x1x128xf32> to vector<2x8x128xf32>
    %712 = arith.mulf %693, %711 : vector<2x8x128xf32>
    %713 = arith.addf %707, %712 : vector<2x8x128xf32>
    %c120_i32_218 = arith.constant 120 : i32
    %714 = tpu.dynamic_rotate %693 by %c120_i32_218 dim 2 : vector<2x8x128xf32>, i32 -> vector<2x8x128xf32>
    %715 = vector.extract_strided_slice %588 {offsets = [3, 3, 0], sizes = [1, 1, 128], strides = [1, 1, 1]} : vector<5x5x128xf32> to vector<1x1x128xf32>
    %716 = vector.shape_cast %715 : vector<1x1x128xf32> to vector<128xf32>
    %717 = vector.shape_cast %716 : vector<128xf32> to vector<1x1x128xf32>
    %718 = vector.broadcast %717 : vector<1x1x128xf32> to vector<2x8x128xf32>
    %719 = arith.mulf %714, %718 : vector<2x8x128xf32>
    %720 = arith.addf %713, %719 : vector<2x8x128xf32>
    %c112_i32_219 = arith.constant 112 : i32
    %721 = tpu.dynamic_rotate %693 by %c112_i32_219 dim 2 : vector<2x8x128xf32>, i32 -> vector<2x8x128xf32>
    %722 = vector.extract_strided_slice %588 {offsets = [3, 4, 0], sizes = [1, 1, 128], strides = [1, 1, 1]} : vector<5x5x128xf32> to vector<1x1x128xf32>
    %723 = vector.shape_cast %722 : vector<1x1x128xf32> to vector<128xf32>
    %724 = vector.shape_cast %723 : vector<128xf32> to vector<1x1x128xf32>
    %725 = vector.broadcast %724 : vector<1x1x128xf32> to vector<2x8x128xf32>
    %726 = arith.mulf %721, %725 : vector<2x8x128xf32>
    %727 = arith.addf %720, %726 : vector<2x8x128xf32>
    %c0_220 = arith.constant 0 : index
    %c6_221 = arith.constant 6 : index
    %c0_222 = arith.constant 0 : index
    %728 = vector.load %arg9[%c0_220, %c6_221, %c0_222] : memref<2x16x128xf32, #tpu.memory_space<vmem>>, vector<2x8x128xf32>
    %c16_i32_223 = arith.constant 16 : i32
    %729 = tpu.dynamic_rotate %728 by %c16_i32_223 dim 2 : vector<2x8x128xf32>, i32 -> vector<2x8x128xf32>
    %730 = vector.extract_strided_slice %588 {offsets = [4, 0, 0], sizes = [1, 1, 128], strides = [1, 1, 1]} : vector<5x5x128xf32> to vector<1x1x128xf32>
    %731 = vector.shape_cast %730 : vector<1x1x128xf32> to vector<128xf32>
    %732 = vector.shape_cast %731 : vector<128xf32> to vector<1x1x128xf32>
    %733 = vector.broadcast %732 : vector<1x1x128xf32> to vector<2x8x128xf32>
    %734 = arith.mulf %729, %733 : vector<2x8x128xf32>
    %735 = arith.addf %727, %734 : vector<2x8x128xf32>
    %c8_i32_224 = arith.constant 8 : i32
    %736 = tpu.dynamic_rotate %728 by %c8_i32_224 dim 2 : vector<2x8x128xf32>, i32 -> vector<2x8x128xf32>
    %737 = vector.extract_strided_slice %588 {offsets = [4, 1, 0], sizes = [1, 1, 128], strides = [1, 1, 1]} : vector<5x5x128xf32> to vector<1x1x128xf32>
    %738 = vector.shape_cast %737 : vector<1x1x128xf32> to vector<128xf32>
    %739 = vector.shape_cast %738 : vector<128xf32> to vector<1x1x128xf32>
    %740 = vector.broadcast %739 : vector<1x1x128xf32> to vector<2x8x128xf32>
    %741 = arith.mulf %736, %740 : vector<2x8x128xf32>
    %742 = arith.addf %735, %741 : vector<2x8x128xf32>
    %743 = vector.extract_strided_slice %588 {offsets = [4, 2, 0], sizes = [1, 1, 128], strides = [1, 1, 1]} : vector<5x5x128xf32> to vector<1x1x128xf32>
    %744 = vector.shape_cast %743 : vector<1x1x128xf32> to vector<128xf32>
    %745 = vector.shape_cast %744 : vector<128xf32> to vector<1x1x128xf32>
    %746 = vector.broadcast %745 : vector<1x1x128xf32> to vector<2x8x128xf32>
    %747 = arith.mulf %728, %746 : vector<2x8x128xf32>
    %748 = arith.addf %742, %747 : vector<2x8x128xf32>
    %c120_i32_225 = arith.constant 120 : i32
    %749 = tpu.dynamic_rotate %728 by %c120_i32_225 dim 2 : vector<2x8x128xf32>, i32 -> vector<2x8x128xf32>
    %750 = vector.extract_strided_slice %588 {offsets = [4, 3, 0], sizes = [1, 1, 128], strides = [1, 1, 1]} : vector<5x5x128xf32> to vector<1x1x128xf32>
    %751 = vector.shape_cast %750 : vector<1x1x128xf32> to vector<128xf32>
    %752 = vector.shape_cast %751 : vector<128xf32> to vector<1x1x128xf32>
    %753 = vector.broadcast %752 : vector<1x1x128xf32> to vector<2x8x128xf32>
    %754 = arith.mulf %749, %753 : vector<2x8x128xf32>
    %755 = arith.addf %748, %754 : vector<2x8x128xf32>
    %c112_i32_226 = arith.constant 112 : i32
    %756 = tpu.dynamic_rotate %728 by %c112_i32_226 dim 2 : vector<2x8x128xf32>, i32 -> vector<2x8x128xf32>
    %757 = vector.extract_strided_slice %588 {offsets = [4, 4, 0], sizes = [1, 1, 128], strides = [1, 1, 1]} : vector<5x5x128xf32> to vector<1x1x128xf32>
    %758 = vector.shape_cast %757 : vector<1x1x128xf32> to vector<128xf32>
    %759 = vector.shape_cast %758 : vector<128xf32> to vector<1x1x128xf32>
    %760 = vector.broadcast %759 : vector<1x1x128xf32> to vector<2x8x128xf32>
    %761 = arith.mulf %756, %760 : vector<2x8x128xf32>
    %762 = arith.addf %755, %761 : vector<2x8x128xf32>
    %763 = vector.extract_strided_slice %762 {offsets = [0, 0, 32], sizes = [2, 8, 64], strides = [1, 1, 1]} : vector<2x8x128xf32> to vector<2x8x64xf32>
    %764 = vector.shape_cast %763 : vector<2x8x64xf32> to vector<16x64xf32>
    %c0_227 = arith.constant 0 : index
    %c2_228 = arith.constant 2 : index
    %c0_229 = arith.constant 0 : index
    %c0_230 = arith.constant 0 : index
    %765 = vector.load %arg7[%c0_227, %c2_228, %c0_229, %c0_230] : memref<1x6x64x64xf32, #tpu.memory_space<vmem>>, vector<1x1x64x64xf32>
    %766 = vector.shape_cast %765 : vector<1x1x64x64xf32> to vector<64x64xf32>
    %cst_231 = arith.constant dense<0.000000e+00> : vector<16x64xf32>
    %767 = tpu.matmul %764, %766, %cst_231 {dimension_numbers = #tpu.dot_dimension_numbers<[1], [0], [0], [1], [0, 0, 1, 1], [], []>} : vector<16x64xf32>, vector<64x64xf32>, vector<16x64xf32> -> vector<16x64xf32>
    %cst_232 = arith.constant dense<0.000000e+00> : vector<64xf32>
    %768 = vector.multi_reduction <add>, %767, %cst_232 [0] : vector<16x64xf32> to vector<64xf32>
    %769 = vector.shape_cast %768 : vector<64xf32> to vector<1x64xf32>
    %770 = arith.mulf %767, %767 : vector<16x64xf32>
    %cst_233 = arith.constant dense<0.000000e+00> : vector<64xf32>
    %771 = vector.multi_reduction <add>, %770, %cst_233 [0] : vector<16x64xf32> to vector<64xf32>
    %772 = vector.shape_cast %771 : vector<64xf32> to vector<1x64xf32>
    %773 = tpu.concatenate %769, %772 in 0 : vector<1x64xf32>, vector<1x64xf32> -> vector<2x64xf32>
    %c8_i32_234 = arith.constant 8 : i32
    %774 = tpu.dynamic_rotate %773 by %c8_i32_234 dim 1 : vector<2x64xf32>, i32 -> vector<2x64xf32>
    %775 = arith.addf %773, %774 : vector<2x64xf32>
    %c16_i32_235 = arith.constant 16 : i32
    %776 = tpu.dynamic_rotate %775 by %c16_i32_235 dim 1 : vector<2x64xf32>, i32 -> vector<2x64xf32>
    %777 = arith.addf %775, %776 : vector<2x64xf32>
    %c32_i32_236 = arith.constant 32 : i32
    %778 = tpu.dynamic_rotate %777 by %c32_i32_236 dim 1 : vector<2x64xf32>, i32 -> vector<2x64xf32>
    %779 = arith.addf %777, %778 : vector<2x64xf32>
    %780 = vector.extract_strided_slice %779 {offsets = [0, 0], sizes = [1, 64], strides = [1, 1]} : vector<2x64xf32> to vector<1x64xf32>
    %cst_237 = arith.constant 7.812500e-03 : f32
    %781 = vector.broadcast %cst_237 : f32 to vector<1x64xf32>
    %782 = arith.mulf %780, %781 : vector<1x64xf32>
    %783 = vector.extract_strided_slice %779 {offsets = [1, 0], sizes = [1, 64], strides = [1, 1]} : vector<2x64xf32> to vector<1x64xf32>
    %cst_238 = arith.constant 7.812500e-03 : f32
    %784 = vector.broadcast %cst_238 : f32 to vector<1x64xf32>
    %785 = arith.mulf %783, %784 : vector<1x64xf32>
    %786 = arith.mulf %782, %782 : vector<1x64xf32>
    %787 = arith.subf %785, %786 : vector<1x64xf32>
    %cst_239 = arith.constant 0.000000e+00 : f32
    %788 = vector.broadcast %cst_239 : f32 to vector<1x64xf32>
    %789 = arith.maximumf %787, %788 : vector<1x64xf32>
    %790 = vector.broadcast %782 : vector<1x64xf32> to vector<16x64xf32>
    %791 = arith.subf %767, %790 : vector<16x64xf32>
    %cst_240 = arith.constant 9.99999974E-6 : f32
    %792 = vector.broadcast %cst_240 : f32 to vector<1x64xf32>
    %793 = arith.addf %789, %792 : vector<1x64xf32>
    %794 = math.rsqrt %793 : vector<1x64xf32>
    %795 = vector.broadcast %794 : vector<1x64xf32> to vector<16x64xf32>
    %796 = arith.mulf %791, %795 : vector<16x64xf32>
    %cst_241 = arith.constant 0.000000e+00 : f32
    %797 = vector.broadcast %cst_241 : f32 to vector<16x64xf32>
    %798 = arith.maximumf %796, %797 : vector<16x64xf32>
    %799 = vector.shape_cast %586 : vector<16x64xf32> to vector<2x8x64xf32>
    %c0_242 = arith.constant 0 : index
    %c4_243 = arith.constant 4 : index
    %c32_244 = arith.constant 32 : index
    %800 = vector.load %arg9[%c0_242, %c4_243, %c32_244] : memref<2x16x128xf32, #tpu.memory_space<vmem>>, vector<2x8x64xf32>
    tpu.vector_store %arg9[%c0_242, %c4_243, %c32_244], %799 {strides = array<i32>} : memref<2x16x128xf32, #tpu.memory_space<vmem>>, vector<2x8x64xf32>,
    %c0_245 = arith.constant 0 : index
    %c1_246 = arith.constant 1 : index
    %c0_247 = arith.constant 0 : index
    %c0_248 = arith.constant 0 : index
    %c0_249 = arith.constant 0 : index
    %801 = vector.load %arg5[%c0_245, %c1_246, %c0_247, %c0_248, %c0_249] : memref<1x3x3x3x128xf32, #tpu.memory_space<vmem>>, vector<1x1x3x3x128xf32>
    %802 = vector.shape_cast %801 : vector<1x1x3x3x128xf32> to vector<3x3x128xf32>
    %c0_250 = arith.constant 0 : index
    %c3_251 = arith.constant 3 : index
    %c0_252 = arith.constant 0 : index
    %803 = vector.load %arg9[%c0_250, %c3_251, %c0_252] : memref<2x16x128xf32, #tpu.memory_space<vmem>>, vector<2x8x128xf32>
    %c8_i32_253 = arith.constant 8 : i32
    %804 = tpu.dynamic_rotate %803 by %c8_i32_253 dim 2 : vector<2x8x128xf32>, i32 -> vector<2x8x128xf32>
    %805 = vector.extract_strided_slice %802 {offsets = [0, 0, 0], sizes = [1, 1, 128], strides = [1, 1, 1]} : vector<3x3x128xf32> to vector<1x1x128xf32>
    %806 = vector.shape_cast %805 : vector<1x1x128xf32> to vector<128xf32>
    %807 = vector.shape_cast %806 : vector<128xf32> to vector<1x1x128xf32>
    %808 = vector.broadcast %807 : vector<1x1x128xf32> to vector<2x8x128xf32>
    %809 = arith.mulf %804, %808 : vector<2x8x128xf32>
    %810 = vector.extract_strided_slice %802 {offsets = [0, 1, 0], sizes = [1, 1, 128], strides = [1, 1, 1]} : vector<3x3x128xf32> to vector<1x1x128xf32>
    %811 = vector.shape_cast %810 : vector<1x1x128xf32> to vector<128xf32>
    %812 = vector.shape_cast %811 : vector<128xf32> to vector<1x1x128xf32>
    %813 = vector.broadcast %812 : vector<1x1x128xf32> to vector<2x8x128xf32>
    %814 = arith.mulf %803, %813 : vector<2x8x128xf32>
    %815 = arith.addf %809, %814 : vector<2x8x128xf32>
    %c120_i32_254 = arith.constant 120 : i32
    %816 = tpu.dynamic_rotate %803 by %c120_i32_254 dim 2 : vector<2x8x128xf32>, i32 -> vector<2x8x128xf32>
    %817 = vector.extract_strided_slice %802 {offsets = [0, 2, 0], sizes = [1, 1, 128], strides = [1, 1, 1]} : vector<3x3x128xf32> to vector<1x1x128xf32>
    %818 = vector.shape_cast %817 : vector<1x1x128xf32> to vector<128xf32>
    %819 = vector.shape_cast %818 : vector<128xf32> to vector<1x1x128xf32>
    %820 = vector.broadcast %819 : vector<1x1x128xf32> to vector<2x8x128xf32>
    %821 = arith.mulf %816, %820 : vector<2x8x128xf32>
    %822 = arith.addf %815, %821 : vector<2x8x128xf32>
    %c0_255 = arith.constant 0 : index
    %c4_256 = arith.constant 4 : index
    %c0_257 = arith.constant 0 : index
    %823 = vector.load %arg9[%c0_255, %c4_256, %c0_257] : memref<2x16x128xf32, #tpu.memory_space<vmem>>, vector<2x8x128xf32>
    %c8_i32_258 = arith.constant 8 : i32
    %824 = tpu.dynamic_rotate %823 by %c8_i32_258 dim 2 : vector<2x8x128xf32>, i32 -> vector<2x8x128xf32>
    %825 = vector.extract_strided_slice %802 {offsets = [1, 0, 0], sizes = [1, 1, 128], strides = [1, 1, 1]} : vector<3x3x128xf32> to vector<1x1x128xf32>
    %826 = vector.shape_cast %825 : vector<1x1x128xf32> to vector<128xf32>
    %827 = vector.shape_cast %826 : vector<128xf32> to vector<1x1x128xf32>
    %828 = vector.broadcast %827 : vector<1x1x128xf32> to vector<2x8x128xf32>
    %829 = arith.mulf %824, %828 : vector<2x8x128xf32>
    %830 = arith.addf %822, %829 : vector<2x8x128xf32>
    %831 = vector.extract_strided_slice %802 {offsets = [1, 1, 0], sizes = [1, 1, 128], strides = [1, 1, 1]} : vector<3x3x128xf32> to vector<1x1x128xf32>
    %832 = vector.shape_cast %831 : vector<1x1x128xf32> to vector<128xf32>
    %833 = vector.shape_cast %832 : vector<128xf32> to vector<1x1x128xf32>
    %834 = vector.broadcast %833 : vector<1x1x128xf32> to vector<2x8x128xf32>
    %835 = arith.mulf %823, %834 : vector<2x8x128xf32>
    %836 = arith.addf %830, %835 : vector<2x8x128xf32>
    %c120_i32_259 = arith.constant 120 : i32
    %837 = tpu.dynamic_rotate %823 by %c120_i32_259 dim 2 : vector<2x8x128xf32>, i32 -> vector<2x8x128xf32>
    %838 = vector.extract_strided_slice %802 {offsets = [1, 2, 0], sizes = [1, 1, 128], strides = [1, 1, 1]} : vector<3x3x128xf32> to vector<1x1x128xf32>
    %839 = vector.shape_cast %838 : vector<1x1x128xf32> to vector<128xf32>
    %840 = vector.shape_cast %839 : vector<128xf32> to vector<1x1x128xf32>
    %841 = vector.broadcast %840 : vector<1x1x128xf32> to vector<2x8x128xf32>
    %842 = arith.mulf %837, %841 : vector<2x8x128xf32>
    %843 = arith.addf %836, %842 : vector<2x8x128xf32>
    %c0_260 = arith.constant 0 : index
    %c5_261 = arith.constant 5 : index
    %c0_262 = arith.constant 0 : index
    %844 = vector.load %arg9[%c0_260, %c5_261, %c0_262] : memref<2x16x128xf32, #tpu.memory_space<vmem>>, vector<2x8x128xf32>
    %c8_i32_263 = arith.constant 8 : i32
    %845 = tpu.dynamic_rotate %844 by %c8_i32_263 dim 2 : vector<2x8x128xf32>, i32 -> vector<2x8x128xf32>
    %846 = vector.extract_strided_slice %802 {offsets = [2, 0, 0], sizes = [1, 1, 128], strides = [1, 1, 1]} : vector<3x3x128xf32> to vector<1x1x128xf32>
    %847 = vector.shape_cast %846 : vector<1x1x128xf32> to vector<128xf32>
    %848 = vector.shape_cast %847 : vector<128xf32> to vector<1x1x128xf32>
    %849 = vector.broadcast %848 : vector<1x1x128xf32> to vector<2x8x128xf32>
    %850 = arith.mulf %845, %849 : vector<2x8x128xf32>
    %851 = arith.addf %843, %850 : vector<2x8x128xf32>
    %852 = vector.extract_strided_slice %802 {offsets = [2, 1, 0], sizes = [1, 1, 128], strides = [1, 1, 1]} : vector<3x3x128xf32> to vector<1x1x128xf32>
    %853 = vector.shape_cast %852 : vector<1x1x128xf32> to vector<128xf32>
    %854 = vector.shape_cast %853 : vector<128xf32> to vector<1x1x128xf32>
    %855 = vector.broadcast %854 : vector<1x1x128xf32> to vector<2x8x128xf32>
    %856 = arith.mulf %844, %855 : vector<2x8x128xf32>
    %857 = arith.addf %851, %856 : vector<2x8x128xf32>
    %c120_i32_264 = arith.constant 120 : i32
    %858 = tpu.dynamic_rotate %844 by %c120_i32_264 dim 2 : vector<2x8x128xf32>, i32 -> vector<2x8x128xf32>
    %859 = vector.extract_strided_slice %802 {offsets = [2, 2, 0], sizes = [1, 1, 128], strides = [1, 1, 1]} : vector<3x3x128xf32> to vector<1x1x128xf32>
    %860 = vector.shape_cast %859 : vector<1x1x128xf32> to vector<128xf32>
    %861 = vector.shape_cast %860 : vector<128xf32> to vector<1x1x128xf32>
    %862 = vector.broadcast %861 : vector<1x1x128xf32> to vector<2x8x128xf32>
    %863 = arith.mulf %858, %862 : vector<2x8x128xf32>
    %864 = arith.addf %857, %863 : vector<2x8x128xf32>
    %865 = vector.extract_strided_slice %864 {offsets = [0, 0, 32], sizes = [2, 8, 64], strides = [1, 1, 1]} : vector<2x8x128xf32> to vector<2x8x64xf32>
    %866 = vector.shape_cast %865 : vector<2x8x64xf32> to vector<16x64xf32>
    %c0_265 = arith.constant 0 : index
    %c1_266 = arith.constant 1 : index
    %c0_267 = arith.constant 0 : index
    %c0_268 = arith.constant 0 : index
    %867 = vector.load %arg7[%c0_265, %c1_266, %c0_267, %c0_268] : memref<1x6x64x64xf32, #tpu.memory_space<vmem>>, vector<1x1x64x64xf32>
    %868 = vector.shape_cast %867 : vector<1x1x64x64xf32> to vector<64x64xf32>
    %cst_269 = arith.constant dense<0.000000e+00> : vector<16x64xf32>
    %869 = tpu.matmul %866, %868, %cst_269 {dimension_numbers = #tpu.dot_dimension_numbers<[1], [0], [0], [1], [0, 0, 1, 1], [], []>} : vector<16x64xf32>, vector<64x64xf32>, vector<16x64xf32> -> vector<16x64xf32>
    %cst_270 = arith.constant dense<0.000000e+00> : vector<64xf32>
    %870 = vector.multi_reduction <add>, %869, %cst_270 [0] : vector<16x64xf32> to vector<64xf32>
    %871 = vector.shape_cast %870 : vector<64xf32> to vector<1x64xf32>
    %872 = arith.mulf %869, %869 : vector<16x64xf32>
    %cst_271 = arith.constant dense<0.000000e+00> : vector<64xf32>
    %873 = vector.multi_reduction <add>, %872, %cst_271 [0] : vector<16x64xf32> to vector<64xf32>
    %874 = vector.shape_cast %873 : vector<64xf32> to vector<1x64xf32>
    %875 = tpu.concatenate %871, %874 in 0 : vector<1x64xf32>, vector<1x64xf32> -> vector<2x64xf32>
    %c8_i32_272 = arith.constant 8 : i32
    %876 = tpu.dynamic_rotate %875 by %c8_i32_272 dim 1 : vector<2x64xf32>, i32 -> vector<2x64xf32>
    %877 = arith.addf %875, %876 : vector<2x64xf32>
    %c16_i32_273 = arith.constant 16 : i32
    %878 = tpu.dynamic_rotate %877 by %c16_i32_273 dim 1 : vector<2x64xf32>, i32 -> vector<2x64xf32>
    %879 = arith.addf %877, %878 : vector<2x64xf32>
    %c32_i32_274 = arith.constant 32 : i32
    %880 = tpu.dynamic_rotate %879 by %c32_i32_274 dim 1 : vector<2x64xf32>, i32 -> vector<2x64xf32>
    %881 = arith.addf %879, %880 : vector<2x64xf32>
    %882 = vector.extract_strided_slice %881 {offsets = [0, 0], sizes = [1, 64], strides = [1, 1]} : vector<2x64xf32> to vector<1x64xf32>
    %cst_275 = arith.constant 7.812500e-03 : f32
    %883 = vector.broadcast %cst_275 : f32 to vector<1x64xf32>
    %884 = arith.mulf %882, %883 : vector<1x64xf32>
    %885 = vector.extract_strided_slice %881 {offsets = [1, 0], sizes = [1, 64], strides = [1, 1]} : vector<2x64xf32> to vector<1x64xf32>
    %cst_276 = arith.constant 7.812500e-03 : f32
    %886 = vector.broadcast %cst_276 : f32 to vector<1x64xf32>
    %887 = arith.mulf %885, %886 : vector<1x64xf32>
    %888 = arith.mulf %884, %884 : vector<1x64xf32>
    %889 = arith.subf %887, %888 : vector<1x64xf32>
    %cst_277 = arith.constant 0.000000e+00 : f32
    %890 = vector.broadcast %cst_277 : f32 to vector<1x64xf32>
    %891 = arith.maximumf %889, %890 : vector<1x64xf32>
    %892 = vector.broadcast %884 : vector<1x64xf32> to vector<16x64xf32>
    %893 = arith.subf %869, %892 : vector<16x64xf32>
    %cst_278 = arith.constant 9.99999974E-6 : f32
    %894 = vector.broadcast %cst_278 : f32 to vector<1x64xf32>
    %895 = arith.addf %891, %894 : vector<1x64xf32>
    %896 = math.rsqrt %895 : vector<1x64xf32>
    %897 = vector.broadcast %896 : vector<1x64xf32> to vector<16x64xf32>
    %898 = arith.mulf %893, %897 : vector<16x64xf32>
    %899 = vector.broadcast %10 : f32 to vector<16x64xf32>
    %900 = arith.mulf %899, %898 : vector<16x64xf32>
    %901 = arith.addf %486, %900 : vector<16x64xf32>
    %902 = vector.shape_cast %798 : vector<16x64xf32> to vector<2x8x64xf32>
    %c0_279 = arith.constant 0 : index
    %c4_280 = arith.constant 4 : index
    %c32_281 = arith.constant 32 : index
    %903 = vector.load %arg9[%c0_279, %c4_280, %c32_281] : memref<2x16x128xf32, #tpu.memory_space<vmem>>, vector<2x8x64xf32>
    tpu.vector_store %arg9[%c0_279, %c4_280, %c32_281], %902 {strides = array<i32>} : memref<2x16x128xf32, #tpu.memory_space<vmem>>, vector<2x8x64xf32>,
    %c0_282 = arith.constant 0 : index
    %c1_283 = arith.constant 1 : index
    %c0_284 = arith.constant 0 : index
    %c0_285 = arith.constant 0 : index
    %c0_286 = arith.constant 0 : index
    %904 = vector.load %arg6[%c0_282, %c1_283, %c0_284, %c0_285, %c0_286] : memref<1x3x5x5x128xf32, #tpu.memory_space<vmem>>, vector<1x1x5x5x128xf32>
    %905 = vector.shape_cast %904 : vector<1x1x5x5x128xf32> to vector<5x5x128xf32>
    %c0_287 = arith.constant 0 : index
    %c2_288 = arith.constant 2 : index
    %c0_289 = arith.constant 0 : index
    %906 = vector.load %arg9[%c0_287, %c2_288, %c0_289] : memref<2x16x128xf32, #tpu.memory_space<vmem>>, vector<2x8x128xf32>
    %c16_i32_290 = arith.constant 16 : i32
    %907 = tpu.dynamic_rotate %906 by %c16_i32_290 dim 2 : vector<2x8x128xf32>, i32 -> vector<2x8x128xf32>
    %908 = vector.extract_strided_slice %905 {offsets = [0, 0, 0], sizes = [1, 1, 128], strides = [1, 1, 1]} : vector<5x5x128xf32> to vector<1x1x128xf32>
    %909 = vector.shape_cast %908 : vector<1x1x128xf32> to vector<128xf32>
    %910 = vector.shape_cast %909 : vector<128xf32> to vector<1x1x128xf32>
    %911 = vector.broadcast %910 : vector<1x1x128xf32> to vector<2x8x128xf32>
    %912 = arith.mulf %907, %911 : vector<2x8x128xf32>
    %c8_i32_291 = arith.constant 8 : i32
    %913 = tpu.dynamic_rotate %906 by %c8_i32_291 dim 2 : vector<2x8x128xf32>, i32 -> vector<2x8x128xf32>
    %914 = vector.extract_strided_slice %905 {offsets = [0, 1, 0], sizes = [1, 1, 128], strides = [1, 1, 1]} : vector<5x5x128xf32> to vector<1x1x128xf32>
    %915 = vector.shape_cast %914 : vector<1x1x128xf32> to vector<128xf32>
    %916 = vector.shape_cast %915 : vector<128xf32> to vector<1x1x128xf32>
    %917 = vector.broadcast %916 : vector<1x1x128xf32> to vector<2x8x128xf32>
    %918 = arith.mulf %913, %917 : vector<2x8x128xf32>
    %919 = arith.addf %912, %918 : vector<2x8x128xf32>
    %920 = vector.extract_strided_slice %905 {offsets = [0, 2, 0], sizes = [1, 1, 128], strides = [1, 1, 1]} : vector<5x5x128xf32> to vector<1x1x128xf32>
    %921 = vector.shape_cast %920 : vector<1x1x128xf32> to vector<128xf32>
    %922 = vector.shape_cast %921 : vector<128xf32> to vector<1x1x128xf32>
    %923 = vector.broadcast %922 : vector<1x1x128xf32> to vector<2x8x128xf32>
    %924 = arith.mulf %906, %923 : vector<2x8x128xf32>
    %925 = arith.addf %919, %924 : vector<2x8x128xf32>
    %c120_i32_292 = arith.constant 120 : i32
    %926 = tpu.dynamic_rotate %906 by %c120_i32_292 dim 2 : vector<2x8x128xf32>, i32 -> vector<2x8x128xf32>
    %927 = vector.extract_strided_slice %905 {offsets = [0, 3, 0], sizes = [1, 1, 128], strides = [1, 1, 1]} : vector<5x5x128xf32> to vector<1x1x128xf32>
    %928 = vector.shape_cast %927 : vector<1x1x128xf32> to vector<128xf32>
    %929 = vector.shape_cast %928 : vector<128xf32> to vector<1x1x128xf32>
    %930 = vector.broadcast %929 : vector<1x1x128xf32> to vector<2x8x128xf32>
    %931 = arith.mulf %926, %930 : vector<2x8x128xf32>
    %932 = arith.addf %925, %931 : vector<2x8x128xf32>
    %c112_i32_293 = arith.constant 112 : i32
    %933 = tpu.dynamic_rotate %906 by %c112_i32_293 dim 2 : vector<2x8x128xf32>, i32 -> vector<2x8x128xf32>
    %934 = vector.extract_strided_slice %905 {offsets = [0, 4, 0], sizes = [1, 1, 128], strides = [1, 1, 1]} : vector<5x5x128xf32> to vector<1x1x128xf32>
    %935 = vector.shape_cast %934 : vector<1x1x128xf32> to vector<128xf32>
    %936 = vector.shape_cast %935 : vector<128xf32> to vector<1x1x128xf32>
    %937 = vector.broadcast %936 : vector<1x1x128xf32> to vector<2x8x128xf32>
    %938 = arith.mulf %933, %937 : vector<2x8x128xf32>
    %939 = arith.addf %932, %938 : vector<2x8x128xf32>
    %c0_294 = arith.constant 0 : index
    %c3_295 = arith.constant 3 : index
    %c0_296 = arith.constant 0 : index
    %940 = vector.load %arg9[%c0_294, %c3_295, %c0_296] : memref<2x16x128xf32, #tpu.memory_space<vmem>>, vector<2x8x128xf32>
    %c16_i32_297 = arith.constant 16 : i32
    %941 = tpu.dynamic_rotate %940 by %c16_i32_297 dim 2 : vector<2x8x128xf32>, i32 -> vector<2x8x128xf32>
    %942 = vector.extract_strided_slice %905 {offsets = [1, 0, 0], sizes = [1, 1, 128], strides = [1, 1, 1]} : vector<5x5x128xf32> to vector<1x1x128xf32>
    %943 = vector.shape_cast %942 : vector<1x1x128xf32> to vector<128xf32>
    %944 = vector.shape_cast %943 : vector<128xf32> to vector<1x1x128xf32>
    %945 = vector.broadcast %944 : vector<1x1x128xf32> to vector<2x8x128xf32>
    %946 = arith.mulf %941, %945 : vector<2x8x128xf32>
    %947 = arith.addf %939, %946 : vector<2x8x128xf32>
    %c8_i32_298 = arith.constant 8 : i32
    %948 = tpu.dynamic_rotate %940 by %c8_i32_298 dim 2 : vector<2x8x128xf32>, i32 -> vector<2x8x128xf32>
    %949 = vector.extract_strided_slice %905 {offsets = [1, 1, 0], sizes = [1, 1, 128], strides = [1, 1, 1]} : vector<5x5x128xf32> to vector<1x1x128xf32>
    %950 = vector.shape_cast %949 : vector<1x1x128xf32> to vector<128xf32>
    %951 = vector.shape_cast %950 : vector<128xf32> to vector<1x1x128xf32>
    %952 = vector.broadcast %951 : vector<1x1x128xf32> to vector<2x8x128xf32>
    %953 = arith.mulf %948, %952 : vector<2x8x128xf32>
    %954 = arith.addf %947, %953 : vector<2x8x128xf32>
    %955 = vector.extract_strided_slice %905 {offsets = [1, 2, 0], sizes = [1, 1, 128], strides = [1, 1, 1]} : vector<5x5x128xf32> to vector<1x1x128xf32>
    %956 = vector.shape_cast %955 : vector<1x1x128xf32> to vector<128xf32>
    %957 = vector.shape_cast %956 : vector<128xf32> to vector<1x1x128xf32>
    %958 = vector.broadcast %957 : vector<1x1x128xf32> to vector<2x8x128xf32>
    %959 = arith.mulf %940, %958 : vector<2x8x128xf32>
    %960 = arith.addf %954, %959 : vector<2x8x128xf32>
    %c120_i32_299 = arith.constant 120 : i32
    %961 = tpu.dynamic_rotate %940 by %c120_i32_299 dim 2 : vector<2x8x128xf32>, i32 -> vector<2x8x128xf32>
    %962 = vector.extract_strided_slice %905 {offsets = [1, 3, 0], sizes = [1, 1, 128], strides = [1, 1, 1]} : vector<5x5x128xf32> to vector<1x1x128xf32>
    %963 = vector.shape_cast %962 : vector<1x1x128xf32> to vector<128xf32>
    %964 = vector.shape_cast %963 : vector<128xf32> to vector<1x1x128xf32>
    %965 = vector.broadcast %964 : vector<1x1x128xf32> to vector<2x8x128xf32>
    %966 = arith.mulf %961, %965 : vector<2x8x128xf32>
    %967 = arith.addf %960, %966 : vector<2x8x128xf32>
    %c112_i32_300 = arith.constant 112 : i32
    %968 = tpu.dynamic_rotate %940 by %c112_i32_300 dim 2 : vector<2x8x128xf32>, i32 -> vector<2x8x128xf32>
    %969 = vector.extract_strided_slice %905 {offsets = [1, 4, 0], sizes = [1, 1, 128], strides = [1, 1, 1]} : vector<5x5x128xf32> to vector<1x1x128xf32>
    %970 = vector.shape_cast %969 : vector<1x1x128xf32> to vector<128xf32>
    %971 = vector.shape_cast %970 : vector<128xf32> to vector<1x1x128xf32>
    %972 = vector.broadcast %971 : vector<1x1x128xf32> to vector<2x8x128xf32>
    %973 = arith.mulf %968, %972 : vector<2x8x128xf32>
    %974 = arith.addf %967, %973 : vector<2x8x128xf32>
    %c0_301 = arith.constant 0 : index
    %c4_302 = arith.constant 4 : index
    %c0_303 = arith.constant 0 : index
    %975 = vector.load %arg9[%c0_301, %c4_302, %c0_303] : memref<2x16x128xf32, #tpu.memory_space<vmem>>, vector<2x8x128xf32>
    %c16_i32_304 = arith.constant 16 : i32
    %976 = tpu.dynamic_rotate %975 by %c16_i32_304 dim 2 : vector<2x8x128xf32>, i32 -> vector<2x8x128xf32>
    %977 = vector.extract_strided_slice %905 {offsets = [2, 0, 0], sizes = [1, 1, 128], strides = [1, 1, 1]} : vector<5x5x128xf32> to vector<1x1x128xf32>
    %978 = vector.shape_cast %977 : vector<1x1x128xf32> to vector<128xf32>
    %979 = vector.shape_cast %978 : vector<128xf32> to vector<1x1x128xf32>
    %980 = vector.broadcast %979 : vector<1x1x128xf32> to vector<2x8x128xf32>
    %981 = arith.mulf %976, %980 : vector<2x8x128xf32>
    %982 = arith.addf %974, %981 : vector<2x8x128xf32>
    %c8_i32_305 = arith.constant 8 : i32
    %983 = tpu.dynamic_rotate %975 by %c8_i32_305 dim 2 : vector<2x8x128xf32>, i32 -> vector<2x8x128xf32>
    %984 = vector.extract_strided_slice %905 {offsets = [2, 1, 0], sizes = [1, 1, 128], strides = [1, 1, 1]} : vector<5x5x128xf32> to vector<1x1x128xf32>
    %985 = vector.shape_cast %984 : vector<1x1x128xf32> to vector<128xf32>
    %986 = vector.shape_cast %985 : vector<128xf32> to vector<1x1x128xf32>
    %987 = vector.broadcast %986 : vector<1x1x128xf32> to vector<2x8x128xf32>
    %988 = arith.mulf %983, %987 : vector<2x8x128xf32>
    %989 = arith.addf %982, %988 : vector<2x8x128xf32>
    %990 = vector.extract_strided_slice %905 {offsets = [2, 2, 0], sizes = [1, 1, 128], strides = [1, 1, 1]} : vector<5x5x128xf32> to vector<1x1x128xf32>
    %991 = vector.shape_cast %990 : vector<1x1x128xf32> to vector<128xf32>
    %992 = vector.shape_cast %991 : vector<128xf32> to vector<1x1x128xf32>
    %993 = vector.broadcast %992 : vector<1x1x128xf32> to vector<2x8x128xf32>
    %994 = arith.mulf %975, %993 : vector<2x8x128xf32>
    %995 = arith.addf %989, %994 : vector<2x8x128xf32>
    %c120_i32_306 = arith.constant 120 : i32
    %996 = tpu.dynamic_rotate %975 by %c120_i32_306 dim 2 : vector<2x8x128xf32>, i32 -> vector<2x8x128xf32>
    %997 = vector.extract_strided_slice %905 {offsets = [2, 3, 0], sizes = [1, 1, 128], strides = [1, 1, 1]} : vector<5x5x128xf32> to vector<1x1x128xf32>
    %998 = vector.shape_cast %997 : vector<1x1x128xf32> to vector<128xf32>
    %999 = vector.shape_cast %998 : vector<128xf32> to vector<1x1x128xf32>
    %1000 = vector.broadcast %999 : vector<1x1x128xf32> to vector<2x8x128xf32>
    %1001 = arith.mulf %996, %1000 : vector<2x8x128xf32>
    %1002 = arith.addf %995, %1001 : vector<2x8x128xf32>
    %c112_i32_307 = arith.constant 112 : i32
    %1003 = tpu.dynamic_rotate %975 by %c112_i32_307 dim 2 : vector<2x8x128xf32>, i32 -> vector<2x8x128xf32>
    %1004 = vector.extract_strided_slice %905 {offsets = [2, 4, 0], sizes = [1, 1, 128], strides = [1, 1, 1]} : vector<5x5x128xf32> to vector<1x1x128xf32>
    %1005 = vector.shape_cast %1004 : vector<1x1x128xf32> to vector<128xf32>
    %1006 = vector.shape_cast %1005 : vector<128xf32> to vector<1x1x128xf32>
    %1007 = vector.broadcast %1006 : vector<1x1x128xf32> to vector<2x8x128xf32>
    %1008 = arith.mulf %1003, %1007 : vector<2x8x128xf32>
    %1009 = arith.addf %1002, %1008 : vector<2x8x128xf32>
    %c0_308 = arith.constant 0 : index
    %c5_309 = arith.constant 5 : index
    %c0_310 = arith.constant 0 : index
    %1010 = vector.load %arg9[%c0_308, %c5_309, %c0_310] : memref<2x16x128xf32, #tpu.memory_space<vmem>>, vector<2x8x128xf32>
    %c16_i32_311 = arith.constant 16 : i32
    %1011 = tpu.dynamic_rotate %1010 by %c16_i32_311 dim 2 : vector<2x8x128xf32>, i32 -> vector<2x8x128xf32>
    %1012 = vector.extract_strided_slice %905 {offsets = [3, 0, 0], sizes = [1, 1, 128], strides = [1, 1, 1]} : vector<5x5x128xf32> to vector<1x1x128xf32>
    %1013 = vector.shape_cast %1012 : vector<1x1x128xf32> to vector<128xf32>
    %1014 = vector.shape_cast %1013 : vector<128xf32> to vector<1x1x128xf32>
    %1015 = vector.broadcast %1014 : vector<1x1x128xf32> to vector<2x8x128xf32>
    %1016 = arith.mulf %1011, %1015 : vector<2x8x128xf32>
    %1017 = arith.addf %1009, %1016 : vector<2x8x128xf32>
    %c8_i32_312 = arith.constant 8 : i32
    %1018 = tpu.dynamic_rotate %1010 by %c8_i32_312 dim 2 : vector<2x8x128xf32>, i32 -> vector<2x8x128xf32>
    %1019 = vector.extract_strided_slice %905 {offsets = [3, 1, 0], sizes = [1, 1, 128], strides = [1, 1, 1]} : vector<5x5x128xf32> to vector<1x1x128xf32>
    %1020 = vector.shape_cast %1019 : vector<1x1x128xf32> to vector<128xf32>
    %1021 = vector.shape_cast %1020 : vector<128xf32> to vector<1x1x128xf32>
    %1022 = vector.broadcast %1021 : vector<1x1x128xf32> to vector<2x8x128xf32>
    %1023 = arith.mulf %1018, %1022 : vector<2x8x128xf32>
    %1024 = arith.addf %1017, %1023 : vector<2x8x128xf32>
    %1025 = vector.extract_strided_slice %905 {offsets = [3, 2, 0], sizes = [1, 1, 128], strides = [1, 1, 1]} : vector<5x5x128xf32> to vector<1x1x128xf32>
    %1026 = vector.shape_cast %1025 : vector<1x1x128xf32> to vector<128xf32>
    %1027 = vector.shape_cast %1026 : vector<128xf32> to vector<1x1x128xf32>
    %1028 = vector.broadcast %1027 : vector<1x1x128xf32> to vector<2x8x128xf32>
    %1029 = arith.mulf %1010, %1028 : vector<2x8x128xf32>
    %1030 = arith.addf %1024, %1029 : vector<2x8x128xf32>
    %c120_i32_313 = arith.constant 120 : i32
    %1031 = tpu.dynamic_rotate %1010 by %c120_i32_313 dim 2 : vector<2x8x128xf32>, i32 -> vector<2x8x128xf32>
    %1032 = vector.extract_strided_slice %905 {offsets = [3, 3, 0], sizes = [1, 1, 128], strides = [1, 1, 1]} : vector<5x5x128xf32> to vector<1x1x128xf32>
    %1033 = vector.shape_cast %1032 : vector<1x1x128xf32> to vector<128xf32>
    %1034 = vector.shape_cast %1033 : vector<128xf32> to vector<1x1x128xf32>
    %1035 = vector.broadcast %1034 : vector<1x1x128xf32> to vector<2x8x128xf32>
    %1036 = arith.mulf %1031, %1035 : vector<2x8x128xf32>
    %1037 = arith.addf %1030, %1036 : vector<2x8x128xf32>
    %c112_i32_314 = arith.constant 112 : i32
    %1038 = tpu.dynamic_rotate %1010 by %c112_i32_314 dim 2 : vector<2x8x128xf32>, i32 -> vector<2x8x128xf32>
    %1039 = vector.extract_strided_slice %905 {offsets = [3, 4, 0], sizes = [1, 1, 128], strides = [1, 1, 1]} : vector<5x5x128xf32> to vector<1x1x128xf32>
    %1040 = vector.shape_cast %1039 : vector<1x1x128xf32> to vector<128xf32>
    %1041 = vector.shape_cast %1040 : vector<128xf32> to vector<1x1x128xf32>
    %1042 = vector.broadcast %1041 : vector<1x1x128xf32> to vector<2x8x128xf32>
    %1043 = arith.mulf %1038, %1042 : vector<2x8x128xf32>
    %1044 = arith.addf %1037, %1043 : vector<2x8x128xf32>
    %c0_315 = arith.constant 0 : index
    %c6_316 = arith.constant 6 : index
    %c0_317 = arith.constant 0 : index
    %1045 = vector.load %arg9[%c0_315, %c6_316, %c0_317] : memref<2x16x128xf32, #tpu.memory_space<vmem>>, vector<2x8x128xf32>
    %c16_i32_318 = arith.constant 16 : i32
    %1046 = tpu.dynamic_rotate %1045 by %c16_i32_318 dim 2 : vector<2x8x128xf32>, i32 -> vector<2x8x128xf32>
    %1047 = vector.extract_strided_slice %905 {offsets = [4, 0, 0], sizes = [1, 1, 128], strides = [1, 1, 1]} : vector<5x5x128xf32> to vector<1x1x128xf32>
    %1048 = vector.shape_cast %1047 : vector<1x1x128xf32> to vector<128xf32>
    %1049 = vector.shape_cast %1048 : vector<128xf32> to vector<1x1x128xf32>
    %1050 = vector.broadcast %1049 : vector<1x1x128xf32> to vector<2x8x128xf32>
    %1051 = arith.mulf %1046, %1050 : vector<2x8x128xf32>
    %1052 = arith.addf %1044, %1051 : vector<2x8x128xf32>
    %c8_i32_319 = arith.constant 8 : i32
    %1053 = tpu.dynamic_rotate %1045 by %c8_i32_319 dim 2 : vector<2x8x128xf32>, i32 -> vector<2x8x128xf32>
    %1054 = vector.extract_strided_slice %905 {offsets = [4, 1, 0], sizes = [1, 1, 128], strides = [1, 1, 1]} : vector<5x5x128xf32> to vector<1x1x128xf32>
    %1055 = vector.shape_cast %1054 : vector<1x1x128xf32> to vector<128xf32>
    %1056 = vector.shape_cast %1055 : vector<128xf32> to vector<1x1x128xf32>
    %1057 = vector.broadcast %1056 : vector<1x1x128xf32> to vector<2x8x128xf32>
    %1058 = arith.mulf %1053, %1057 : vector<2x8x128xf32>
    %1059 = arith.addf %1052, %1058 : vector<2x8x128xf32>
    %1060 = vector.extract_strided_slice %905 {offsets = [4, 2, 0], sizes = [1, 1, 128], strides = [1, 1, 1]} : vector<5x5x128xf32> to vector<1x1x128xf32>
    %1061 = vector.shape_cast %1060 : vector<1x1x128xf32> to vector<128xf32>
    %1062 = vector.shape_cast %1061 : vector<128xf32> to vector<1x1x128xf32>
    %1063 = vector.broadcast %1062 : vector<1x1x128xf32> to vector<2x8x128xf32>
    %1064 = arith.mulf %1045, %1063 : vector<2x8x128xf32>
    %1065 = arith.addf %1059, %1064 : vector<2x8x128xf32>
    %c120_i32_320 = arith.constant 120 : i32
    %1066 = tpu.dynamic_rotate %1045 by %c120_i32_320 dim 2 : vector<2x8x128xf32>, i32 -> vector<2x8x128xf32>
    %1067 = vector.extract_strided_slice %905 {offsets = [4, 3, 0], sizes = [1, 1, 128], strides = [1, 1, 1]} : vector<5x5x128xf32> to vector<1x1x128xf32>
    %1068 = vector.shape_cast %1067 : vector<1x1x128xf32> to vector<128xf32>
    %1069 = vector.shape_cast %1068 : vector<128xf32> to vector<1x1x128xf32>
    %1070 = vector.broadcast %1069 : vector<1x1x128xf32> to vector<2x8x128xf32>
    %1071 = arith.mulf %1066, %1070 : vector<2x8x128xf32>
    %1072 = arith.addf %1065, %1071 : vector<2x8x128xf32>
    %c112_i32_321 = arith.constant 112 : i32
    %1073 = tpu.dynamic_rotate %1045 by %c112_i32_321 dim 2 : vector<2x8x128xf32>, i32 -> vector<2x8x128xf32>
    %1074 = vector.extract_strided_slice %905 {offsets = [4, 4, 0], sizes = [1, 1, 128], strides = [1, 1, 1]} : vector<5x5x128xf32> to vector<1x1x128xf32>
    %1075 = vector.shape_cast %1074 : vector<1x1x128xf32> to vector<128xf32>
    %1076 = vector.shape_cast %1075 : vector<128xf32> to vector<1x1x128xf32>
    %1077 = vector.broadcast %1076 : vector<1x1x128xf32> to vector<2x8x128xf32>
    %1078 = arith.mulf %1073, %1077 : vector<2x8x128xf32>
    %1079 = arith.addf %1072, %1078 : vector<2x8x128xf32>
    %1080 = vector.extract_strided_slice %1079 {offsets = [0, 0, 32], sizes = [2, 8, 64], strides = [1, 1, 1]} : vector<2x8x128xf32> to vector<2x8x64xf32>
    %1081 = vector.shape_cast %1080 : vector<2x8x64xf32> to vector<16x64xf32>
    %c0_322 = arith.constant 0 : index
    %c3_323 = arith.constant 3 : index
    %c0_324 = arith.constant 0 : index
    %c0_325 = arith.constant 0 : index
    %1082 = vector.load %arg7[%c0_322, %c3_323, %c0_324, %c0_325] : memref<1x6x64x64xf32, #tpu.memory_space<vmem>>, vector<1x1x64x64xf32>
    %1083 = vector.shape_cast %1082 : vector<1x1x64x64xf32> to vector<64x64xf32>
    %cst_326 = arith.constant dense<0.000000e+00> : vector<16x64xf32>
    %1084 = tpu.matmul %1081, %1083, %cst_326 {dimension_numbers = #tpu.dot_dimension_numbers<[1], [0], [0], [1], [0, 0, 1, 1], [], []>} : vector<16x64xf32>, vector<64x64xf32>, vector<16x64xf32> -> vector<16x64xf32>
    %cst_327 = arith.constant dense<0.000000e+00> : vector<64xf32>
    %1085 = vector.multi_reduction <add>, %1084, %cst_327 [0] : vector<16x64xf32> to vector<64xf32>
    %1086 = vector.shape_cast %1085 : vector<64xf32> to vector<1x64xf32>
    %1087 = arith.mulf %1084, %1084 : vector<16x64xf32>
    %cst_328 = arith.constant dense<0.000000e+00> : vector<64xf32>
    %1088 = vector.multi_reduction <add>, %1087, %cst_328 [0] : vector<16x64xf32> to vector<64xf32>
    %1089 = vector.shape_cast %1088 : vector<64xf32> to vector<1x64xf32>
    %1090 = tpu.concatenate %1086, %1089 in 0 : vector<1x64xf32>, vector<1x64xf32> -> vector<2x64xf32>
    %c8_i32_329 = arith.constant 8 : i32
    %1091 = tpu.dynamic_rotate %1090 by %c8_i32_329 dim 1 : vector<2x64xf32>, i32 -> vector<2x64xf32>
    %1092 = arith.addf %1090, %1091 : vector<2x64xf32>
    %c16_i32_330 = arith.constant 16 : i32
    %1093 = tpu.dynamic_rotate %1092 by %c16_i32_330 dim 1 : vector<2x64xf32>, i32 -> vector<2x64xf32>
    %1094 = arith.addf %1092, %1093 : vector<2x64xf32>
    %c32_i32_331 = arith.constant 32 : i32
    %1095 = tpu.dynamic_rotate %1094 by %c32_i32_331 dim 1 : vector<2x64xf32>, i32 -> vector<2x64xf32>
    %1096 = arith.addf %1094, %1095 : vector<2x64xf32>
    %1097 = vector.extract_strided_slice %1096 {offsets = [0, 0], sizes = [1, 64], strides = [1, 1]} : vector<2x64xf32> to vector<1x64xf32>
    %cst_332 = arith.constant 7.812500e-03 : f32
    %1098 = vector.broadcast %cst_332 : f32 to vector<1x64xf32>
    %1099 = arith.mulf %1097, %1098 : vector<1x64xf32>
    %1100 = vector.extract_strided_slice %1096 {offsets = [1, 0], sizes = [1, 64], strides = [1, 1]} : vector<2x64xf32> to vector<1x64xf32>
    %cst_333 = arith.constant 7.812500e-03 : f32
    %1101 = vector.broadcast %cst_333 : f32 to vector<1x64xf32>
    %1102 = arith.mulf %1100, %1101 : vector<1x64xf32>
    %1103 = arith.mulf %1099, %1099 : vector<1x64xf32>
    %1104 = arith.subf %1102, %1103 : vector<1x64xf32>
    %cst_334 = arith.constant 0.000000e+00 : f32
    %1105 = vector.broadcast %cst_334 : f32 to vector<1x64xf32>
    %1106 = arith.maximumf %1104, %1105 : vector<1x64xf32>
    %1107 = vector.broadcast %1099 : vector<1x64xf32> to vector<16x64xf32>
    %1108 = arith.subf %1084, %1107 : vector<16x64xf32>
    %cst_335 = arith.constant 9.99999974E-6 : f32
    %1109 = vector.broadcast %cst_335 : f32 to vector<1x64xf32>
    %1110 = arith.addf %1106, %1109 : vector<1x64xf32>
    %1111 = math.rsqrt %1110 : vector<1x64xf32>
    %1112 = vector.broadcast %1111 : vector<1x64xf32> to vector<16x64xf32>
    %1113 = arith.mulf %1108, %1112 : vector<16x64xf32>
    %1114 = vector.broadcast %12 : f32 to vector<16x64xf32>
    %1115 = arith.mulf %1114, %1113 : vector<16x64xf32>
    %1116 = arith.addf %901, %1115 : vector<16x64xf32>
    %c0_336 = arith.constant 0 : index
    %c0_337 = arith.constant 0 : index
    %c0_338 = arith.constant 0 : index
    %1117 = vector.load %arg8[%c0_336, %c0_337, %c0_338] : memref<2x8x64xf32, #tpu.memory_space<vmem>>, vector<2x8x64xf32>
    %1118 = vector.broadcast %18 : f32 to vector<16x64xf32>
    %1119 = arith.mulf %1118, %1116 : vector<16x64xf32>
    %1120 = vector.shape_cast %1119 : vector<16x64xf32> to vector<2x8x64xf32>
    %1121 = arith.addf %1117, %1120 : vector<2x8x64xf32>
    %c0_339 = arith.constant 0 : index
    %c0_340 = arith.constant 0 : index
    %c0_341 = arith.constant 0 : index
    %1122 = vector.load %arg8[%c0_339, %c0_340, %c0_341] : memref<2x8x64xf32, #tpu.memory_space<vmem>>, vector<2x8x64xf32>
    tpu.vector_store %arg8[%c0_339, %c0_340, %c0_341], %1121 {strides = array<i32>} : memref<2x8x64xf32, #tpu.memory_space<vmem>>, vector<2x8x64xf32>,
    return
  }
  func.func @transform_0(%arg0: i32, %arg1: memref<2x8xf32, #tpu.memory_space<smem>>, %arg2: memref<2xf32, #tpu.memory_space<smem>>) -> (i32, i32, i32, i32) {
    %c0_i32 = arith.constant 0 : i32
    %c0_i32_0 = arith.constant 0 : i32
    %c0_i32_1 = arith.constant 0 : i32
    %c0_i32_2 = arith.constant 0 : i32
    return %arg0, %c0_i32, %c0_i32_0, %c0_i32_1 : i32, i32, i32, i32
  }
  func.func @transform_1(%arg0: i32, %arg1: memref<2x8xf32, #tpu.memory_space<smem>>, %arg2: memref<2xf32, #tpu.memory_space<smem>>) -> (i32, i32, i32) {
    %c0_i32 = arith.constant 0 : i32
    %c0_i32_0 = arith.constant 0 : i32
    %c0_i32_1 = arith.constant 0 : i32
    %c0_i32_2 = arith.constant 0 : i32
    return %c0_i32, %c0_i32_0, %c0_i32_1 : i32, i32, i32
  }
  func.func @transform_2(%arg0: i32, %arg1: memref<2x8xf32, #tpu.memory_space<smem>>, %arg2: memref<2xf32, #tpu.memory_space<smem>>) -> (i32, i32, i32, i32, i32) {
    %c0_i32 = arith.constant 0 : i32
    %c0_i32_0 = arith.constant 0 : i32
    %c0_i32_1 = arith.constant 0 : i32
    %c0_i32_2 = arith.constant 0 : i32
    %c0_i32_3 = arith.constant 0 : i32
    return %arg0, %c0_i32, %c0_i32_0, %c0_i32_1, %c0_i32_2 : i32, i32, i32, i32, i32
  }
  func.func @transform_3(%arg0: i32, %arg1: memref<2x8xf32, #tpu.memory_space<smem>>, %arg2: memref<2xf32, #tpu.memory_space<smem>>) -> (i32, i32, i32, i32, i32) {
    %c0_i32 = arith.constant 0 : i32
    %c0_i32_0 = arith.constant 0 : i32
    %c0_i32_1 = arith.constant 0 : i32
    %c0_i32_2 = arith.constant 0 : i32
    %c0_i32_3 = arith.constant 0 : i32
    return %arg0, %c0_i32, %c0_i32_0, %c0_i32_1, %c0_i32_2 : i32, i32, i32, i32, i32
  }
  func.func @transform_4(%arg0: i32, %arg1: memref<2x8xf32, #tpu.memory_space<smem>>, %arg2: memref<2xf32, #tpu.memory_space<smem>>) -> (i32, i32, i32, i32) {
    %c0_i32 = arith.constant 0 : i32
    %c0_i32_0 = arith.constant 0 : i32
    %c0_i32_1 = arith.constant 0 : i32
    %c0_i32_2 = arith.constant 0 : i32
    return %arg0, %c0_i32, %c0_i32_0, %c0_i32_1 : i32, i32, i32, i32
  }
  func.func @transform_5(%arg0: i32, %arg1: memref<2x8xf32, #tpu.memory_space<smem>>, %arg2: memref<2xf32, #tpu.memory_space<smem>>) -> (i32, i32, i32) {
    %c0_i32 = arith.constant 0 : i32
    %c0_i32_0 = arith.constant 0 : i32
    %c0_i32_1 = arith.constant 0 : i32
    %c0_i32_2 = arith.constant 0 : i32
    return %c0_i32, %c0_i32_0, %c0_i32_1 : i32, i32, i32
  }
}

</mosaic_0001>

<llo_original>
// kernel: tpu_custom_call.1
$region0: #{tpu_custom_call.1}
  #allocation0 [shape = 'u32[]', space=smem, size = 0x4, offset = 0x4, fixed_abs, tag = 'smem constant byte address 0x4 - core index']
  #allocation1 [shape = 'u32[144,128]{1,0:T(1,128)}', space=vmem, size = 0x12000, scoped, tag = 'internal scratch']
  #allocation2 [shape = 'f32[2,16,128]{2,1,0:T(8,128)}', space=vmem, size = 0x4000, scoped, tag = 'scratch operand']
  #allocation3 [shape = 's32[1]{0}', space=sflag, size = 0x4, scoped, tag = 'scoped memory for tpu_custom_call.1']
  #allocation4 [shape = 'u8[1024]{0}', space=smem, size = 0x400, scoped, tag = 'prefetched SMEM operand 0']
  #allocation5 [shape = 'u8[512]{0}', space=smem, size = 0x200, scoped, tag = 'prefetched SMEM operand 1']
  %s0 = inlined_call_operand.vmem [shape: f32[2,8], index: 0, kind: input, shape index: {}]
  %s1 = inlined_call_operand.vmem [shape: f32[2], index: 1, kind: input, shape index: {}]
  %s2 = inlined_call_operand.vmem [shape: f32[2,2,8,64], index: 2, kind: input, shape index: {}]
  %s3 = inlined_call_operand.vmem [shape: f32[10,8,128], index: 3, kind: input, shape index: {}]
  %s4 = inlined_call_operand.vmem [shape: f32[2,3,3,3,128], index: 4, kind: input, shape index: {}]
  %s5 = inlined_call_operand.vmem [shape: f32[2,3,5,5,128], index: 5, kind: input, shape index: {}]
  %s6 = inlined_call_operand.hbm [shape: f32[2,6,64,64], index: 6, kind: input, shape index: {}]
  %s7 = inlined_call_operand.hbm [shape: f32[2,8,64], index: 7, kind: output, shape index: {}]
  %s8 = sld [smem:[#allocation0]]
  $region61: #{tpu_custom_call.1} parent=0
    _
  %s10 = ssub.s32 1, %s8
  %s11 = scalar_select 0, %s10, %s8
  %s12 = sshll.u32 %s0, 4
  %s13 = int_to_ptr.vmem [resolvable:$true] %s12
  %15 = dma.vmem_to_smem %s13, 32, [#allocation4], [#allocation3]
  %s16 = sshll.u32 %s1, 4
  %s17 = int_to_ptr.vmem [resolvable:$true] %s16
  %19 = dma.vmem_to_smem %s17, 16, [#allocation5], [#allocation3]
  %20 = dma.done [#allocation3], 48
  %21 = sfence
  $region1: #{tpu_custom_call.1} parent=0
    #allocation6 [shape = 'u8[393216]{0}', space=vmem, size = 0x60000, scoped, tag = 'input window, operand 6']
    #allocation7 [shape = 's32[2]{0}', space=sflag, size = 0x8, scoped, tag = 'scoped memory for tpu_custom_call.1']
    #allocation8 [shape = 's32[2]{0}', space=sflag, size = 0x8, scoped, tag = 'scoped memory for tpu_custom_call.1']
    #allocation9 [shape = 'u8[8192]{0}', space=vmem, size = 0x2000, scoped, tag = 'output window, operand 0, single buffered']
    %22 = vsyncpa [#allocation7], 0
    %s23 = scalar_lea.sflag [#allocation7], 1
    %24 = vsyncpa %s23, 0
    %25 = vsyncpa [#allocation8], 0
    loop: start=0, step=1, limit=4
    $region2: #{tpu_custom_call.1} parent=1 // loop_pre_header
      _
    $region3: #{tpu_custom_call.1} parent=1 // loop_header
      %s27 = sphi 0, %s31
      %p28 = scmp.ge.s32.totalorder %s27, 4
      %s37 = sphi 0, %s39
      %s40 = sphi 0, %s37
      %s41 = sphi 0, %s40
      %s57 = sphi 0, %s41
      %s61 = sphi 0, %s61
      %s63 = sphi 0, %s61
      %s64 = sphi 0, %s63
      %s78 = sphi 0, %s64
      %s84 = sphi 0, %s86
      %s87 = sphi 0, %s84
      %s88 = sphi 0, %s87
      %s104 = sphi 0, %s88
      %s110 = sphi 0, %s112
      %s113 = sphi 0, %s110
      %s114 = sphi 0, %s113
      %s130 = sphi 0, %s114
      %s136 = sphi 0, %s138
      %s139 = sphi 0, %s136
      %s140 = sphi 0, %s139
      %s156 = sphi 0, %s140
      %s160 = sphi 0, %s160
      %s162 = sphi 0, %s160
      %s163 = sphi 0, %s162
      %s177 = sphi 0, %s163
    $region4: #{tpu_custom_call.1} parent=1 // loop_header_branch
      %30 = sbr.rel (%p28) target = $region8
    $region5: #{tpu_custom_call.1} parent=1 // loop_body
      %s32 = ssub.s32 %s27, 1
      %s33 = ssub.s32 %s27, 2
      %s34 = sadd.s32 %s27, 1
      %s35 = ssub.s32 %s27, %s34
      %p36 = scmp.eq.s32.totalorder %s35, 0
      %s38 = sadd.s32 %s37, 1
      %s39 = scalar_select %p36, %s37, %s38
      %p42 = pneg %p36
      %p43 = scmp.eq.s32.totalorder %s27, 1
      %p44 = por %p42, %p43
      %p45 = scmp.ne.s32.totalorder %s37, %s40
      %p46 = scmp.eq.s32.totalorder %s27, 0
      %p47 = por %p45, %p46
      %p48 = scmp.ne.s32.totalorder %s37, %s40
      %p49 = scmp.eq.s32.totalorder %s32, 1
      %p50 = por %p48, %p49
      %p51 = scmp.ne.s32.totalorder %s40, %s41
      %p52 = scmp.eq.s32.totalorder %s32, 0
      %p53 = por %p51, %p52
      %p54 = scmp.ne.s32.totalorder %s40, %s41
      %p55 = scmp.eq.s32.totalorder %s33, 1
      %p56 = por %p54, %p55
      %p58 = scmp.ne.s32.totalorder %s41, %s57
      %p59 = scmp.eq.s32.totalorder %s33, 0
      %p60 = por %p58, %p59
      %s62 = sadd.s32 %s61, 1
      %p65 = scmp.eq.s32.totalorder %s27, 1
      %p66 = scmp.ne.s32.totalorder %s61, %s63
      %p67 = scmp.eq.s32.totalorder %s27, 0
      %p68 = por %p66, %p67
      %p69 = scmp.ne.s32.totalorder %s61, %s63
      %p70 = scmp.eq.s32.totalorder %s32, 1
      %p71 = por %p69, %p70
      %p72 = scmp.ne.s32.totalorder %s63, %s64
      %p73 = scmp.eq.s32.totalorder %s32, 0
      %p74 = por %p72, %p73
      %p75 = scmp.ne.s32.totalorder %s63, %s64
      %p76 = scmp.eq.s32.totalorder %s33, 1
      %p77 = por %p75, %p76
      %p79 = scmp.ne.s32.totalorder %s64, %s78
      %p80 = scmp.eq.s32.totalorder %s33, 0
      %p81 = por %p79, %p80
      %s82 = ssub.s32 %s27, %s34
      %p83 = scmp.eq.s32.totalorder %s82, 0
      %s85 = sadd.s32 %s84, 1
      %s86 = scalar_select %p83, %s84, %s85
      %p89 = pneg %p83
      %p90 = scmp.eq.s32.totalorder %s27, 1
      %p91 = por %p89, %p90
      %p92 = scmp.ne.s32.totalorder %s84, %s87
      %p93 = scmp.eq.s32.totalorder %s27, 0
      %p94 = por %p92, %p93
      %p95 = scmp.ne.s32.totalorder %s84, %s87
      %p96 = scmp.eq.s32.totalorder %s32, 1
      %p97 = por %p95, %p96
      %p98 = scmp.ne.s32.totalorder %s87, %s88
      %p99 = scmp.eq.s32.totalorder %s32, 0
      %p100 = por %p98, %p99
      %p101 = scmp.ne.s32.totalorder %s87, %s88
      %p102 = scmp.eq.s32.totalorder %s33, 1
      %p103 = por %p101, %p102
      %p105 = scmp.ne.s32.totalorder %s88, %s104
      %p106 = scmp.eq.s32.totalorder %s33, 0
      %p107 = por %p105, %p106
      %s108 = ssub.s32 %s27, %s34
      %p109 = scmp.eq.s32.totalorder %s108, 0
      %s111 = sadd.s32 %s110, 1
      %s112 = scalar_select %p109, %s110, %s111
      %p115 = pneg %p109
      %p116 = scmp.eq.s32.totalorder %s27, 1
      %p117 = por %p115, %p116
      %p118 = scmp.ne.s32.totalorder %s110, %s113
      %p119 = scmp.eq.s32.totalorder %s27, 0
      %p120 = por %p118, %p119
      %p121 = scmp.ne.s32.totalorder %s110, %s113
      %p122 = scmp.eq.s32.totalorder %s32, 1
      %p123 = por %p121, %p122
      %p124 = scmp.ne.s32.totalorder %s113, %s114
      %p125 = scmp.eq.s32.totalorder %s32, 0
      %p126 = por %p124, %p125
      %p127 = scmp.ne.s32.totalorder %s113, %s114
      %p128 = scmp.eq.s32.totalorder %s33, 1
      %p129 = por %p127, %p128
      %p131 = scmp.ne.s32.totalorder %s114, %s130
      %p132 = scmp.eq.s32.totalorder %s33, 0
      %p133 = por %p131, %p132
      %s134 = ssub.s32 %s27, %s34
      %p135 = scmp.eq.s32.totalorder %s134, 0
      %s137 = sadd.s32 %s136, 1
      %s138 = scalar_select %p135, %s136, %s137
      %p141 = pneg %p135
      %p142 = scmp.eq.s32.totalorder %s27, 1
      %p143 = por %p141, %p142
      %p144 = scmp.ne.s32.totalorder %s136, %s139
      %p145 = scmp.eq.s32.totalorder %s27, 0
      %p146 = por %p144, %p145
      %p147 = scmp.ne.s32.totalorder %s136, %s139
      %p148 = scmp.eq.s32.totalorder %s32, 1
      %p149 = por %p147, %p148
      %p150 = scmp.ne.s32.totalorder %s139, %s140
      %p151 = scmp.eq.s32.totalorder %s32, 0
      %p152 = por %p150, %p151
      %p153 = scmp.ne.s32.totalorder %s139, %s140
      %p154 = scmp.eq.s32.totalorder %s33, 1
      %p155 = por %p153, %p154
      %p157 = scmp.ne.s32.totalorder %s140, %s156
      %p158 = scmp.eq.s32.totalorder %s33, 0
      %p159 = por %p157, %p158
      %s161 = sadd.s32 %s160, 1
      %p164 = scmp.eq.s32.totalorder %s27, 1
      %p165 = scmp.ne.s32.totalorder %s160, %s162
      %p166 = scmp.eq.s32.totalorder %s27, 0
      %p167 = por %p165, %p166
      %p168 = scmp.ne.s32.totalorder %s160, %s162
      %p169 = scmp.eq.s32.totalorder %s32, 1
      %p170 = por %p168, %p169
      %p171 = scmp.ne.s32.totalorder %s162, %s163
      %p172 = scmp.eq.s32.totalorder %s32, 0
      %p173 = por %p171, %p172
      %p174 = scmp.ne.s32.totalorder %s162, %s163
      %p175 = scmp.eq.s32.totalorder %s33, 1
      %p176 = por %p174, %p175
      %p178 = scmp.ne.s32.totalorder %s163, %s177
      %p179 = scmp.eq.s32.totalorder %s33, 0
      %p180 = por %p178, %p179
      %p181 = scmp.le.s32.totalorder 1, %s27
      %p182 = scmp.lt.s32.totalorder %s27, 3
      %p183 = pnand %p181, %p182
      %p184 = pneg %p183
      // Predicated region
      $region9: #{tpu_custom_call.1} parent=5 // pred_check
        _
      $region10: #{tpu_custom_call.1} parent=5 // pred_check_branch
        %186 = sbr.rel (%p183) target = $region12
      $region11: #{tpu_custom_call.1} parent=5 // pred_region
        %s187 = ssub.s32 %s27, 1
        // Predicated region
        $region13: #{tpu_custom_call.1} parent=11 // pred_check
          %p188 = pneg %p74
        $region14: #{tpu_custom_call.1} parent=11 // pred_check_branch
          %190 = sbr.rel (%p188) target = $region16
        $region15: #{tpu_custom_call.1} parent=11 // pred_region
          _
        $region16: #{tpu_custom_call.1} parent=11 // pred_fallthru
          _
      $region12: #{tpu_custom_call.1} parent=5 // pred_fallthru
        _
      %p191 = scmp.lt.s32.totalorder %s27, 2
      // Predicated region
      $region17: #{tpu_custom_call.1} parent=5 // pred_check
        %p192 = pneg %p191
      $region18: #{tpu_custom_call.1} parent=5 // pred_check_branch
        %194 = sbr.rel (%p192) target = $region20
      $region19: #{tpu_custom_call.1} parent=5 // pred_region
        // Predicated region
        $region21: #{tpu_custom_call.1} parent=19 // pred_check
          %p195 = pneg %p47
        $region22: #{tpu_custom_call.1} parent=19 // pred_check_branch
          %197 = sbr.rel (%p195) target = $region24
        $region23: #{tpu_custom_call.1} parent=19 // pred_region
          %p198 = scmp.lt.s32.totalorder %s27, 1
          %s199 = scalar_select %p198, %s27, 1
          %s200 = smul.addr %s199, 2
          %s201 = smul.addr %s200, 8
          %s202 = scalar_lea.vmem %s2, %s201
        $region24: #{tpu_custom_call.1} parent=19 // pred_fallthru
          _
        // Predicated region
        $region25: #{tpu_custom_call.1} parent=19 // pred_check
          %p203 = pneg %p94
        $region26: #{tpu_custom_call.1} parent=19 // pred_check_branch
          %205 = sbr.rel (%p203) target = $region28
        $region27: #{tpu_custom_call.1} parent=19 // pred_region
          %p206 = scmp.lt.s32.totalorder %s27, 1
          %s207 = scalar_select %p206, %s27, 1
          %s208 = smul.addr %s207, 9
          %s209 = smul.addr %s208, 4
          %s210 = scalar_lea.vmem %s4, %s209
        $region28: #{tpu_custom_call.1} parent=19 // pred_fallthru
          _
        // Predicated region
        $region29: #{tpu_custom_call.1} parent=19 // pred_check
          %p211 = pneg %p120
        $region30: #{tpu_custom_call.1} parent=19 // pred_check_branch
          %213 = sbr.rel (%p211) target = $region32
        $region31: #{tpu_custom_call.1} parent=19 // pred_region
          %p214 = scmp.lt.s32.totalorder %s27, 1
          %s215 = scalar_select %p214, %s27, 1
          %s216 = smul.addr %s215, 15
          %s217 = smul.addr %s216, 8
          %s218 = scalar_lea.vmem %s5, %s217
        $region32: #{tpu_custom_call.1} parent=19 // pred_fallthru
          _
        // Predicated region
        $region33: #{tpu_custom_call.1} parent=19 // pred_check
          %p219 = pneg %p146
        $region34: #{tpu_custom_call.1} parent=19 // pred_check_branch
          %221 = sbr.rel (%p219) target = $region36
        $region35: #{tpu_custom_call.1} parent=19 // pred_region
          %s222 = sand.u32 %s136, 1
          %s223 = scalar_lea.sflag [#allocation7], %s222
          %s224 = sand.u32 %s136, 1
          %s225 = smul.addr %s224, 384
          %s226 = scalar_lea.vmem [#allocation6], %s225
          %s228 = ssub.s32 6144, 6144
          %229 = vsyncadd %s223, %s228
          %s230 = smul.addr %s27, 48
          %s231 = smul.addr %s230, 128
          %s232 = scalar_lea.hbm %s6, %s231
          %s233 = sshll.u32 %s226, 4
          %s234 = int_to_ptr.vmem [resolvable:$true] %s233
          %239 = dma.hbm_to_vmem [thread:$0]  %s232, 6144, %s234, %s223, 128, 128, 8
        $region36: #{tpu_custom_call.1} parent=19 // pred_fallthru
          _
      $region20: #{tpu_custom_call.1} parent=5 // pred_fallthru
        _
      %p240 = scmp.le.s32.totalorder 1, %s27
      %p241 = scmp.lt.s32.totalorder %s27, 3
      %p242 = pnand %p240, %p241
      %p243 = pneg %p242
      // Predicated region
      $region37: #{tpu_custom_call.1} parent=5 // pred_check
        _
      $region38: #{tpu_custom_call.1} parent=5 // pred_check_branch
        %245 = sbr.rel (%p242) target = $region40
      $region39: #{tpu_custom_call.1} parent=5 // pred_region
        %s246 = ssub.s32 %s27, 1
        %s247 = sand.u32 %s139, 1
        %s248 = scalar_lea.sflag [#allocation7], %s247
        %s249 = sand.u32 %s139, 1
        %s250 = smul.addr %s249, 384
        %s251 = scalar_lea.vmem [#allocation6], %s250
        // Predicated region
        $region41: #{tpu_custom_call.1} parent=39 // pred_check
          %p252 = pneg %p152
        $region42: #{tpu_custom_call.1} parent=39 // pred_check_branch
          %254 = sbr.rel (%p252) target = $region44
        $region43: #{tpu_custom_call.1} parent=39 // pred_region
          %255 = dma.done %s248, 6144
        $region44: #{tpu_custom_call.1} parent=39 // pred_fallthru
          _
        %p256 = scmp.lt.s32.totalorder %s32, 1
        %s257 = scalar_select %p256, %s32, 1
        %s258 = smul.addr %s257, 2
        %s259 = smul.addr %s258, 8
        %s260 = scalar_lea.vmem %s2, %s259
        %p261 = pneg %p53
        %p262 = pneg %p50
        %p263 = pneg %p74
        %p264 = pneg %p71
        %p265 = scmp.lt.s32.totalorder %s32, 1
        %s266 = scalar_select %p265, %s32, 1
        %s267 = smul.addr %s266, 9
        %s268 = smul.addr %s267, 4
        %s269 = scalar_lea.vmem %s4, %s268
        %p270 = pneg %p100
        %p271 = pneg %p97
        %p272 = scmp.lt.s32.totalorder %s32, 1
        %s273 = scalar_select %p272, %s32, 1
        %s274 = smul.addr %s273, 15
        %s275 = smul.addr %s274, 8
        %s276 = scalar_lea.vmem %s5, %s275
        %p277 = pneg %p126
        %p278 = pneg %p123
        %s279 = sand.u32 %s139, 1
        %s280 = scalar_lea.sflag [#allocation7], %s279
        %s281 = sand.u32 %s139, 1
        %s282 = smul.addr %s281, 384
        %s283 = scalar_lea.vmem [#allocation6], %s282
        %p284 = pneg %p152
        %p285 = pneg %p149
        %p286 = pneg %p173
        %p287 = pneg %p170
        %p288 = scmp.lt.s32.totalorder %s32, 1
        %s289 = scalar_select %p288, %s32, 1
        %s290 = smul.addr %s289, 2
        %s291 = smul.addr %s290, 8
        %s292 = scalar_lea.vmem %s2, %s291
        %p293 = scmp.lt.s32.totalorder %s32, 1
        %s294 = scalar_select %p293, %s32, 1
        %s295 = smul.addr %s294, 9
        %s296 = smul.addr %s295, 4
        %s297 = scalar_lea.vmem %s4, %s296
        %p298 = scmp.lt.s32.totalorder %s32, 1
        %s299 = scalar_select %p298, %s32, 1
        %s300 = smul.addr %s299, 15
        %s301 = smul.addr %s300, 8
        %s302 = scalar_lea.vmem %s5, %s301
        %p303 = scmp.eq.s32.totalorder %s32, 0
        // Predicated region
        $region45: #{tpu_custom_call.1} parent=39 // pred_check
          %p304 = pneg %p303
        $region46: #{tpu_custom_call.1} parent=39 // pred_check_branch
          %306 = sbr.rel (%p304) target = $region48
        $region47: #{tpu_custom_call.1} parent=39 // pred_region
          %vm307 = vcmask 523264
          %308 = vst.msk [vmem:[#allocation9] sm:$0xff] %vm307, 0.0
          %309 = vst.msk [vmem:[#allocation9 + $0x8] sm:$0xff] %vm307, 0.0
          %310 = vst [vmem:[#allocation2] sm:$0xff] 0.0
          %311 = vst [vmem:[#allocation2 + $0x8] sm:$0xff] 0.0
          %312 = vst [vmem:[#allocation2 + $0x10] sm:$0xff] 0.0
          %313 = vst [vmem:[#allocation2 + $0x18] sm:$0xff] 0.0
        $region48: #{tpu_custom_call.1} parent=39 // pred_fallthru
          _
        %s314 = smul.u32 %s32, 128
        %s315 = sadd.s32 %s314, 1
        %s316 = sld [smem:[#allocation4 + %s315]]
        %s317 = sadd.s32 %s314, 2
        %s318 = sld [smem:[#allocation4 + %s317]]
        %s319 = sadd.s32 %s314, 3
        %s320 = sld [smem:[#allocation4 + %s319]]
        %s321 = sadd.s32 %s314, 4
        %s322 = sld [smem:[#allocation4 + %s321]]
        %s323 = sadd.s32 %s314, 5
        %s324 = sld [smem:[#allocation4 + %s323]]
        %s325 = sadd.s32 %s314, 6
        %s326 = sld [smem:[#allocation4 + %s325]]
        %s327 = sadd.s32 %s314, 7
        %s328 = sld [smem:[#allocation4 + %s327]]
        %s329 = sld [smem:[#allocation5 + %s32]]
        %v330 = vld [vmem:[%s292] sm:$0xff]
        %v331 = vld [vmem:[%s292 + $0x8] sm:$0xff]
        %v332 = vstv %s320
        %v333 = vmul.f32 %v332, %v330
        %v334 = vmul.f32 %v332, %v331
        %337 = vrot.lane.b32.xlu0 %v330, 32
        %v338 = vpop.permute.xlu0 %337
        %339 = vrot.lane.b32.xlu0 %v331, 32
        %v340 = vpop.permute.xlu0 %339
        %vm343 = vcmask 785664
        %344 = vst.msk [vmem:[#allocation2 + $0x4] sm:$0xff] %vm343, %v338
        %345 = vst.msk [vmem:[#allocation2 + $0x14] sm:$0xff] %vm343, %v340
        %v346 = vld [vmem:[#allocation2 + $0x3] sm:$0xff]
        %v347 = vld [vmem:[#allocation2 + $0x13] sm:$0xff]
        %348 = vrot.lane.b32.xlu0 %v346, 8
        %v349 = vpop.permute.xlu0 %348
        %350 = vrot.lane.b32.xlu0 %v347, 8
        %v351 = vpop.permute.xlu0 %350
        %v352 = vld [vmem:[%s3] sm:$0xff]
        %v353 = vadd.f32 %v349, %v352
        %v354 = vadd.f32 %v351, %v352
        %v355 = vadd.f32 %v349, %v346
        %v356 = vadd.f32 %v351, %v347
        %s357 = scalar_lea.vmem %s3, 8
        %v358 = vld [vmem:[%s357] sm:$0xff]
        %v359 = vadd.f32 %v346, %v358
        %v360 = vadd.f32 %v347, %v358
        %v361 = vmax.f32 %v353, %v359
        %v362 = vmax.f32 %v354, %v360
        %363 = vrot.lane.b32.xlu0 %v346, 120
        %v364 = vpop.permute.xlu0 %363
        %365 = vrot.lane.b32.xlu0 %v347, 120
        %v366 = vpop.permute.xlu0 %365
        %v367 = vadd.f32 %v355, %v364
        %v368 = vadd.f32 %v356, %v366
        %s369 = scalar_lea.vmem %s3, 16
        %v370 = vld [vmem:[%s369] sm:$0xff]
        %v371 = vadd.f32 %v364, %v370
        %v372 = vadd.f32 %v366, %v370
        %v373 = vmax.f32 %v361, %v371
        %v374 = vmax.f32 %v362, %v372
        %v375 = vld [vmem:[#allocation2 + $0x4] sm:$0xff]
        %v376 = vld [vmem:[#allocation2 + $0x14] sm:$0xff]
        %377 = vrot.lane.b32.xlu0 %v375, 8
        %v378 = vpop.permute.xlu0 %377
        %379 = vrot.lane.b32.xlu0 %v376, 8
        %v380 = vpop.permute.xlu0 %379
        %v381 = vadd.f32 %v367, %v378
        %v382 = vadd.f32 %v368, %v380
        %s383 = scalar_lea.vmem %s3, 24
        %v384 = vld [vmem:[%s383] sm:$0xff]
        %v385 = vadd.f32 %v378, %v384
        %v386 = vadd.f32 %v380, %v384
        %v387 = vmax.f32 %v373, %v385
        %v388 = vmax.f32 %v374, %v386
        %v389 = vadd.f32 %v381, %v375
        %v390 = vadd.f32 %v382, %v376
        %s391 = scalar_lea.vmem %s3, 32
        %v392 = vld [vmem:[%s391] sm:$0xff]
        %v393 = vadd.f32 %v375, %v392
        %v394 = vadd.f32 %v376, %v392
        %v395 = vmax.f32 %v387, %v393
        %v396 = vmax.f32 %v388, %v394
        %397 = vrot.lane.b32.xlu0 %v375, 120
        %v398 = vpop.permute.xlu0 %397
        %399 = vrot.lane.b32.xlu0 %v376, 120
        %v400 = vpop.permute.xlu0 %399
        %v401 = vadd.f32 %v389, %v398
        %v402 = vadd.f32 %v390, %v400
        %s403 = scalar_lea.vmem %s3, 40
        %v404 = vld [vmem:[%s403] sm:$0xff]
        %v405 = vadd.f32 %v398, %v404
        %v406 = vadd.f32 %v400, %v404
        %v407 = vmax.f32 %v395, %v405
        %v408 = vmax.f32 %v396, %v406
        %v409 = vld [vmem:[#allocation2 + $0x5] sm:$0xff]
        %v410 = vld [vmem:[#allocation2 + $0x15] sm:$0xff]
        %411 = vrot.lane.b32.xlu0 %v409, 8
        %v412 = vpop.permute.xlu0 %411
        %413 = vrot.lane.b32.xlu0 %v410, 8
        %v414 = vpop.permute.xlu0 %413
        %v415 = vadd.f32 %v401, %v412
        %v416 = vadd.f32 %v402, %v414
        %s417 = scalar_lea.vmem %s3, 48
        %v418 = vld [vmem:[%s417] sm:$0xff]
        %v419 = vadd.f32 %v412, %v418
        %v420 = vadd.f32 %v414, %v418
        %v421 = vmax.f32 %v407, %v419
        %v422 = vmax.f32 %v408, %v420
        %v423 = vadd.f32 %v415, %v409
        %v424 = vadd.f32 %v416, %v410
        %s425 = scalar_lea.vmem %s3, 56
        %v426 = vld [vmem:[%s425] sm:$0xff]
        %v427 = vadd.f32 %v409, %v426
        %v428 = vadd.f32 %v410, %v426
        %v429 = vmax.f32 %v421, %v427
        %v430 = vmax.f32 %v422, %v428
        %431 = vrot.lane.b32.xlu0 %v409, 120
        %v432 = vpop.permute.xlu0 %431
        %433 = vrot.lane.b32.xlu0 %v410, 120
        %v434 = vpop.permute.xlu0 %433
        %v435 = vadd.f32 %v423, %v432
        %v436 = vadd.f32 %v424, %v434
        %s437 = scalar_lea.vmem %s3, 64
        %v438 = vld [vmem:[%s437] sm:$0xff]
        %v439 = vadd.f32 %v432, %v438
        %v440 = vadd.f32 %v434, %v438
        %v441 = vmax.f32 %v429, %v439
        %v442 = vmax.f32 %v430, %v440
        %v443 = vsel %vm343, %v441, 0.0
        %v444 = vsel %vm343, %v442, 0.0
        %v445 = vadd.f32 %v443, %v444
        %v446 = vrot.slane %v445, 4
        %v447 = vadd.f32 %v445, %v446
        %v448 = vrot.slane %v447, 2
        %v449 = vadd.f32 %v447, %v448
        %v450 = vrot.slane %v449, 1
        %v451 = vadd.f32 %v449, %v450
        %v452 = vmul.f32 %v441, %v441
        %v453 = vmul.f32 %v442, %v442
        %v454 = vsel %vm343, %v452, 0.0
        %v455 = vsel %vm343, %v453, 0.0
        %v456 = vadd.f32 %v454, %v455
        %v457 = vrot.slane %v456, 4
        %v458 = vadd.f32 %v456, %v457
        %v459 = vrot.slane %v458, 2
        %v460 = vadd.f32 %v458, %v459
        %v461 = vrot.slane %v460, 1
        %v462 = vadd.f32 %v460, %v461
        %vm463 = vcmask 1040384
        %v464 = vsel %vm463, %v451, %v462
        %466 = vrot.lane.b32.xlu0 %v464, 96
        %v467 = vpop.permute.xlu0 %466
        %vm469 = vcmask 1048064
        %470 = vrot.lane.b32.xlu0 %v467, 64
        %v471 = vpop.permute.xlu0 %470
        %v472 = vsel %vm469, %v471, %v467
        %473 = vrot.lane.b32.xlu0 %v472, 64
        %v474 = vpop.permute.xlu0 %473
        %v475 = vsel %vm469, %v474, %v467
        %477 = vrot.lane.b32.xlu0 %v475, 104
        %v478 = vpop.permute.xlu0 %477
        %v480 = vadd.f32 %v464, %v478
        %482 = vrot.lane.b32.xlu0 %v480, 96
        %v483 = vpop.permute.xlu0 %482
        %485 = vrot.lane.b32.xlu0 %v483, 64
        %v486 = vpop.permute.xlu0 %485
        %v487 = vsel %vm469, %v486, %v483
        %488 = vrot.lane.b32.xlu0 %v487, 64
        %v489 = vpop.permute.xlu0 %488
        %v490 = vsel %vm469, %v489, %v483
        %492 = vrot.lane.b32.xlu0 %v490, 112
        %v493 = vpop.permute.xlu0 %492
        %v495 = vadd.f32 %v480, %v493
        %497 = vrot.lane.b32.xlu0 %v495, 96
        %v498 = vpop.permute.xlu0 %497
        %500 = vrot.lane.b32.xlu0 %v498, 64
        %v501 = vpop.permute.xlu0 %500
        %v502 = vsel %vm469, %v501, %v498
        %503 = vrot.lane.b32.xlu0 %v502, 64
        %v504 = vpop.permute.xlu0 %503
        %v505 = vsel %vm469, %v504, %v498
        %v506 = vadd.f32 %v495, %v505
        %v507 = vmul.f32 %v506, 0.0078125
        %v508 = vmul.f32 %v507, %v507
        %v510 = vrot.slane %v508, 7
        %v512 = vsub.f32 %v507, %v510
        %v513 = vmax.f32 %v512, 0.0
        %v514 = vlaneseq
        %v515 = vshrl.u32 %v514, 7
        %v516 = vsub.s32 0, %v515
        %v517 = vrot.slane %v507, %v516
        %v518 = vsub.f32 %v441, %v517
        %v519 = vsub.f32 %v442, %v517
        %v520 = vadd.f32 %v513, 1e-05
        %v521 = vrsqrt.pop %v520
        %v522 = vlaneseq
        %v523 = vshrl.u32 %v522, 7
        %v524 = vsub.s32 1, %v523
        %v525 = vrot.slane %v521, %v524
        %v526 = vmul.f32 %v518, %v525
        %v527 = vmul.f32 %v519, %v525
        %v528 = vstv %s316
        %v529 = vmul.f32 %v528, %v526
        %v530 = vmul.f32 %v528, %v527
        %533 = vrot.lane.b32.xlu0 %v529, 96
        %v534 = vpop.permute.xlu0 %533
        %535 = vrot.lane.b32.xlu0 %v530, 96
        %v536 = vpop.permute.xlu0 %535
        %v539 = vadd.f32 %v333, %v534
        %v540 = vadd.f32 %v334, %v536
        %s541 = scalar_lea.vmem %s3, 72
        %v542 = vld [vmem:[%s541] sm:$0xff]
        %v543 = vmul.f32 %v435, %v542
        %v544 = vmul.f32 %v436, %v542
        %v545 = vsel %vm343, %v543, 0.0
        %v546 = vsel %vm343, %v544, 0.0
        %v547 = vadd.f32 %v545, %v546
        %v548 = vrot.slane %v547, 4
        %v549 = vadd.f32 %v547, %v548
        %v550 = vrot.slane %v549, 2
        %v551 = vadd.f32 %v549, %v550
        %v552 = vrot.slane %v551, 1
        %v553 = vadd.f32 %v551, %v552
        %v554 = vmul.f32 %v543, %v543
        %v555 = vmul.f32 %v544, %v544
        %v556 = vsel %vm343, %v554, 0.0
        %v557 = vsel %vm343, %v555, 0.0
        %v558 = vadd.f32 %v556, %v557
        %v559 = vrot.slane %v558, 4
        %v560 = vadd.f32 %v558, %v559
        %v561 = vrot.slane %v560, 2
        %v562 = vadd.f32 %v560, %v561
        %v563 = vrot.slane %v562, 1
        %v564 = vadd.f32 %v562, %v563
        %v565 = vsel %vm463, %v553, %v564
        %567 = vrot.lane.b32.xlu0 %v565, 96
        %v568 = vpop.permute.xlu0 %567
        %570 = vrot.lane.b32.xlu0 %v568, 64
        %v571 = vpop.permute.xlu0 %570
        %v572 = vsel %vm469, %v571, %v568
        %573 = vrot.lane.b32.xlu0 %v572, 64
        %v574 = vpop.permute.xlu0 %573
        %v575 = vsel %vm469, %v574, %v568
        %577 = vrot.lane.b32.xlu0 %v575, 104
        %v578 = vpop.permute.xlu0 %577
        %v580 = vadd.f32 %v565, %v578
        %582 = vrot.lane.b32.xlu0 %v580, 96
        %v583 = vpop.permute.xlu0 %582
        %585 = vrot.lane.b32.xlu0 %v583, 64
        %v586 = vpop.permute.xlu0 %585
        %v587 = vsel %vm469, %v586, %v583
        %588 = vrot.lane.b32.xlu0 %v587, 64
        %v589 = vpop.permute.xlu0 %588
        %v590 = vsel %vm469, %v589, %v583
        %592 = vrot.lane.b32.xlu0 %v590, 112
        %v593 = vpop.permute.xlu0 %592
        %v595 = vadd.f32 %v580, %v593
        %597 = vrot.lane.b32.xlu0 %v595, 96
        %v598 = vpop.permute.xlu0 %597
        %600 = vrot.lane.b32.xlu0 %v598, 64
        %v601 = vpop.permute.xlu0 %600
        %v602 = vsel %vm469, %v601, %v598
        %603 = vrot.lane.b32.xlu0 %v602, 64
        %v604 = vpop.permute.xlu0 %603
        %v605 = vsel %vm469, %v604, %v598
        %v606 = vadd.f32 %v595, %v605
        %v607 = vmul.f32 %v606, 0.0078125
        %v608 = vmul.f32 %v607, %v607
        %v610 = vrot.slane %v608, 7
        %v612 = vsub.f32 %v607, %v610
        %v613 = vmax.f32 %v612, 0.0
        %v614 = vlaneseq
        %v615 = vshrl.u32 %v614, 7
        %v616 = vsub.s32 0, %v615
        %v617 = vrot.slane %v607, %v616
        %v618 = vsub.f32 %v543, %v617
        %v619 = vsub.f32 %v544, %v617
        %v620 = vadd.f32 %v613, 1e-05
        %v621 = vrsqrt.pop %v620
        %v622 = vlaneseq
        %v623 = vshrl.u32 %v622, 7
        %v624 = vsub.s32 1, %v623
        %v625 = vrot.slane %v621, %v624
        %v626 = vmul.f32 %v618, %v625
        %v627 = vmul.f32 %v619, %v625
        %v628 = vstv %s318
        %v629 = vmul.f32 %v628, %v626
        %v630 = vmul.f32 %v628, %v627
        %633 = vrot.lane.b32.xlu0 %v629, 96
        %v634 = vpop.permute.xlu0 %633
        %635 = vrot.lane.b32.xlu0 %v630, 96
        %v636 = vpop.permute.xlu0 %635
        %v639 = vadd.f32 %v539, %v634
        %v640 = vadd.f32 %v540, %v636
        %v641 = vmax.f32 %v330, 0.0
        %v642 = vmax.f32 %v331, 0.0
        %645 = vrot.lane.b32.xlu0 %v641, 32
        %v646 = vpop.permute.xlu0 %645
        %647 = vrot.lane.b32.xlu0 %v642, 32
        %v648 = vpop.permute.xlu0 %647
        %651 = vst.msk [vmem:[#allocation2 + $0x4] sm:$0xff] %vm343, %v646
        %652 = vst.msk [vmem:[#allocation2 + $0x14] sm:$0xff] %vm343, %v648
        %s653 = scalar_lea.vmem %s297, 24
        %v654 = vld [vmem:[%s653] sm:$0x7]
        %v655 = vld [vmem:[%s653 + $0x4] sm:$0x7]
        %v656 = vld [vmem:[%s653 + $0x8] sm:$0x7]
        %v657 = vld [vmem:[#allocation2 + $0x2] sm:$0xff]
        %v658 = vld [vmem:[#allocation2 + $0x12] sm:$0xff]
        %659 = vrot.lane.b32.xlu0 %v657, 16
        %v660 = vpop.permute.xlu0 %659
        %661 = vrot.lane.b32.xlu0 %v658, 16
        %v662 = vpop.permute.xlu0 %661
        %v663 = vlaneseq
        %v664 = vshrl.u32 %v663, 7
        %v665 = vsub.s32 0, %v664
        %v666 = vrot.slane %v654, %v665
        %v667 = vmul.f32 %v660, %v666
        %v668 = vmul.f32 %v662, %v666
        %v669 = vlaneseq
        %v670 = vshrl.u32 %v669, 7
        %v671 = vsub.s32 1, %v670
        %v672 = vrot.slane %v654, %v671
        %v673 = vmul.f32 %v657, %v672
        %v674 = vmul.f32 %v658, %v672
        %v675 = vadd.f32 %v667, %v673
        %v676 = vadd.f32 %v668, %v674
        %677 = vrot.lane.b32.xlu0 %v657, 112
        %v678 = vpop.permute.xlu0 %677
        %679 = vrot.lane.b32.xlu0 %v658, 112
        %v680 = vpop.permute.xlu0 %679
        %v681 = vlaneseq
        %v682 = vshrl.u32 %v681, 7
        %v683 = vsub.s32 2, %v682
        %v684 = vrot.slane %v654, %v683
        %v685 = vmul.f32 %v678, %v684
        %v686 = vmul.f32 %v680, %v684
        %v687 = vadd.f32 %v675, %v685
        %v688 = vadd.f32 %v676, %v686
        %v689 = vld [vmem:[#allocation2 + $0x4] sm:$0xff]
        %v690 = vld [vmem:[#allocation2 + $0x14] sm:$0xff]
        %691 = vrot.lane.b32.xlu0 %v689, 16
        %v692 = vpop.permute.xlu0 %691
        %693 = vrot.lane.b32.xlu0 %v690, 16
        %v694 = vpop.permute.xlu0 %693
        %v695 = vlaneseq
        %v696 = vshrl.u32 %v695, 7
        %v697 = vsub.s32 0, %v696
        %v698 = vrot.slane %v655, %v697
        %v699 = vmul.f32 %v692, %v698
        %v700 = vmul.f32 %v694, %v698
        %v701 = vadd.f32 %v687, %v699
        %v702 = vadd.f32 %v688, %v700
        %v703 = vlaneseq
        %v704 = vshrl.u32 %v703, 7
        %v705 = vsub.s32 1, %v704
        %v706 = vrot.slane %v655, %v705
        %v707 = vmul.f32 %v689, %v706
        %v708 = vmul.f32 %v690, %v706
        %v709 = vadd.f32 %v701, %v707
        %v710 = vadd.f32 %v702, %v708
        %711 = vrot.lane.b32.xlu0 %v689, 112
        %v712 = vpop.permute.xlu0 %711
        %713 = vrot.lane.b32.xlu0 %v690, 112
        %v714 = vpop.permute.xlu0 %713
        %v715 = vlaneseq
        %v716 = vshrl.u32 %v715, 7
        %v717 = vsub.s32 2, %v716
        %v718 = vrot.slane %v655, %v717
        %v719 = vmul.f32 %v712, %v718
        %v720 = vmul.f32 %v714, %v718
        %v721 = vadd.f32 %v709, %v719
        %v722 = vadd.f32 %v710, %v720
        %v723 = vld [vmem:[#allocation2 + $0x6] sm:$0xff]
        %v724 = vld [vmem:[#allocation2 + $0x16] sm:$0xff]
        %725 = vrot.lane.b32.xlu0 %v723, 16
        %v726 = vpop.permute.xlu0 %725
        %727 = vrot.lane.b32.xlu0 %v724, 16
        %v728 = vpop.permute.xlu0 %727
        %v729 = vlaneseq
        %v730 = vshrl.u32 %v729, 7
        %v731 = vsub.s32 0, %v730
        %v732 = vrot.slane %v656, %v731
        %v733 = vmul.f32 %v726, %v732
        %v734 = vmul.f32 %v728, %v732
        %v735 = vadd.f32 %v721, %v733
        %v736 = vadd.f32 %v722, %v734
        %v737 = vlaneseq
        %v738 = vshrl.u32 %v737, 7
        %v739 = vsub.s32 1, %v738
        %v740 = vrot.slane %v656, %v739
        %v741 = vmul.f32 %v723, %v740
        %v742 = vmul.f32 %v724, %v740
        %v743 = vadd.f32 %v735, %v741
        %v744 = vadd.f32 %v736, %v742
        %745 = vrot.lane.b32.xlu0 %v723, 112
        %v746 = vpop.permute.xlu0 %745
        %747 = vrot.lane.b32.xlu0 %v724, 112
        %v748 = vpop.permute.xlu0 %747
        %v749 = vlaneseq
        %v750 = vshrl.u32 %v749, 7
        %v751 = vsub.s32 2, %v750
        %v752 = vrot.slane %v656, %v751
        %v753 = vmul.f32 %v746, %v752
        %v754 = vmul.f32 %v748, %v752
        %v755 = vadd.f32 %v743, %v753
        %v756 = vadd.f32 %v744, %v754
        %s757 = scalar_lea.vmem %s251, 256 [#allocation6]
        %v758 = vld [vmem:[%s757] sm:$0xff]
        %v759 = vld [vmem:[%s757 + $0x8] sm:$0xff]
        %v760 = vld [vmem:[%s757 + $0x10] sm:$0xff]
        %v761 = vld [vmem:[%s757 + $0x18] sm:$0xff]
        %v762 = vld [vmem:[%s757 + $0x20] sm:$0xff]
        %v763 = vld [vmem:[%s757 + $0x28] sm:$0xff]
        %v764 = vld [vmem:[%s757 + $0x30] sm:$0xff]
        %v765 = vld [vmem:[%s757 + $0x38] sm:$0xff]
        %768 = vrot.lane.b32.xlu0 %v755, 96
        %v769 = vpop.permute.xlu0 %768
        %770 = vrot.lane.b32.xlu0 %v756, 96
        %v771 = vpop.permute.xlu0 %770
        %vm772 = vcmask 523264
        %v773 = vsel %vm772, %v769, 0
        %v775 = vsel %vm772, %v771, 0
        %777 = vmatprep.subr.mxu0 0.0
        %778 = vmatpush1.msra.mxu0 %v758
        %779 = vmatprep.subr.mxu0 0.0
        %780 = vmatpush1.msra.mxu0 %v759
        %781 = vmatprep.subr.mxu0 0.0
        %782 = vmatpush1.msra.mxu0 %v760
        %783 = vmatprep.subr.mxu0 0.0
        %784 = vmatpush1.msra.mxu0 %v761
        %785 = vmatprep.subr.mxu0 0.0
        %786 = vmatpush1.msra.mxu0 %v762
        %787 = vmatprep.subr.mxu0 0.0
        %788 = vmatpush1.msra.mxu0 %v763
        %789 = vmatprep.subr.mxu0 0.0
        %790 = vmatpush1.msra.mxu0 %v764
        %791 = vmatprep.subr.mxu0 0.0
        %792 = vmatpush1.msra.mxu0 %v765
        %793 = vmatprep.subr.mxu0 0.0
        %794 = vmatpush1.msra.mxu0 0.0
        %795 = vmatprep.subr.mxu0 0.0
        %796 = vmatpush1.msra.mxu0 0.0
        %797 = vmatprep.subr.mxu0 0.0
        %798 = vmatpush1.msra.mxu0 0.0
        %799 = vmatprep.subr.mxu0 0.0
        %800 = vmatpush1.msra.mxu0 0.0
        %801 = vmatprep.subr.mxu0 0.0
        %802 = vmatpush1.msra.mxu0 0.0
        %803 = vmatprep.subr.mxu0 0.0
        %804 = vmatpush1.msra.mxu0 0.0
        %805 = vmatprep.subr.mxu0 0.0
        %806 = vmatpush1.msra.mxu0 0.0
        %807 = vmatprep.subr.mxu0 0.0
        %808 = vmatpush1.msra.mxu0 0.0
        %809 = vmatprep.subr.mxu0 0.0
        %810 = vmatpush1.msra.mxu0 0.0
        %811 = vmatprep.subr.mxu0 0.0
        %812 = vmatpush1.msra.mxu0 0.0
        %813 = vmatprep.subr.mxu0 0.0
        %814 = vmatpush1.msra.mxu0 0.0
        %815 = vmatprep.subr.mxu0 0.0
        %816 = vmatpush1.msra.mxu0 0.0
        %817 = vmatprep.subr.mxu0 0.0
        %818 = vmatpush1.msra.mxu0 0.0
        %819 = vmatprep.subr.mxu0 0.0
        %820 = vmatpush1.msra.mxu0 0.0
        %821 = vmatprep.subr.mxu0 0.0
        %822 = vmatpush1.msra.mxu0 0.0
        %823 = vmatprep.subr.mxu0 0.0
        %824 = vmatpush1.msra.mxu0 0.0
        %825 = vmatprep.subr.mxu0 0.0
        %826 = vmatpush1.msra.mxu0 0.0
        %827 = vmatprep.subr.mxu0 0.0
        %828 = vmatpush1.msra.mxu0 0.0
        %829 = vmatprep.subr.mxu0 0.0
        %830 = vmatpush1.msra.mxu0 0.0
        %831 = vmatprep.subr.mxu0 0.0
        %832 = vmatpush1.msra.mxu0 0.0
        %833 = vmatprep.subr.mxu0 0.0
        %834 = vmatpush1.msra.mxu0 0.0
        %835 = vmatprep.subr.mxu0 0.0
        %836 = vmatpush1.msra.mxu0 0.0
        %837 = vmatprep.subr.mxu0 0.0
        %838 = vmatpush1.msra.mxu0 0.0
        %839 = vmatprep.subr.mxu0 0.0
        %840 = vmatpush1.msra.mxu0 0.0
        %841 = vmatprep.mubr.f32.mxu0 0.0
        %842 = vmatmul.mubr.f32.gmra.mrb[0].mxu0 %v773
        %v843 = vpop.f32.mrb[0].mxu0
        %v844 = vadd.f32 0.0, %v843
        %v845 = vpop.f32.mrb[0].mxu0
        %846 = vmatprep.mubr.f32.mxu0 0.0
        %847 = vmatmul.mubr.f32.gmra.mrb[0].mxu0 %v775
        %v848 = vpop.f32.mrb[0].mxu0
        %v849 = vadd.f32 0.0, %v848
        %v850 = vpop.f32.mrb[0].mxu0
        %851 = vdwg.mxu0
        %v852 = vsel %vm772, %v844, 0.0
        %v853 = vsel %vm772, %v849, 0.0
        %v854 = vadd.f32 %v852, %v853
        %v855 = vrot.slane %v854, 4
        %v856 = vadd.f32 %v854, %v855
        %v857 = vrot.slane %v856, 2
        %v858 = vadd.f32 %v856, %v857
        %v859 = vrot.slane %v858, 1
        %v860 = vadd.f32 %v858, %v859
        %v861 = vmul.f32 %v844, %v844
        %v862 = vmul.f32 %v849, %v849
        %v863 = vsel %vm772, %v861, 0.0
        %v864 = vsel %vm772, %v862, 0.0
        %v865 = vadd.f32 %v863, %v864
        %v866 = vrot.slane %v865, 4
        %v867 = vadd.f32 %v865, %v866
        %v868 = vrot.slane %v867, 2
        %v869 = vadd.f32 %v867, %v868
        %v870 = vrot.slane %v869, 1
        %v871 = vadd.f32 %v869, %v870
        %v872 = vsel %vm463, %v860, %v871
        %873 = vrot.lane.b32.xlu0 %v872, 64
        %v874 = vpop.permute.xlu0 %873
        %v875 = vsel %vm469, %v874, %v872
        %876 = vrot.lane.b32.xlu0 %v875, 64
        %v877 = vpop.permute.xlu0 %876
        %v878 = vsel %vm469, %v877, %v872
        %880 = vrot.lane.b32.xlu0 %v878, 72
        %v881 = vpop.permute.xlu0 %880
        %v883 = vadd.f32 %v872, %v881
        %884 = vrot.lane.b32.xlu0 %v883, 64
        %v885 = vpop.permute.xlu0 %884
        %v886 = vsel %vm469, %v885, %v883
        %887 = vrot.lane.b32.xlu0 %v886, 64
        %v888 = vpop.permute.xlu0 %887
        %v889 = vsel %vm469, %v888, %v883
        %891 = vrot.lane.b32.xlu0 %v889, 80
        %v892 = vpop.permute.xlu0 %891
        %v894 = vadd.f32 %v883, %v892
        %895 = vrot.lane.b32.xlu0 %v894, 64
        %v896 = vpop.permute.xlu0 %895
        %v897 = vsel %vm469, %v896, %v894
        %898 = vrot.lane.b32.xlu0 %v897, 64
        %v899 = vpop.permute.xlu0 %898
        %v900 = vsel %vm469, %v899, %v894
        %902 = vrot.lane.b32.xlu0 %v900, 96
        %v903 = vpop.permute.xlu0 %902
        %v905 = vadd.f32 %v894, %v903
        %v906 = vmul.f32 %v905, 0.0078125
        %v907 = vmul.f32 %v906, %v906
        %v909 = vrot.slane %v907, 7
        %v911 = vsub.f32 %v906, %v909
        %v912 = vmax.f32 %v911, 0.0
        %v913 = vlaneseq
        %v914 = vshrl.u32 %v913, 7
        %v915 = vsub.s32 0, %v914
        %v916 = vrot.slane %v906, %v915
        %v917 = vsub.f32 %v844, %v916
        %v918 = vsub.f32 %v849, %v916
        %v919 = vadd.f32 %v912, 1e-05
        %v920 = vrsqrt.pop %v919
        %v921 = vlaneseq
        %v922 = vshrl.u32 %v921, 7
        %v923 = vsub.s32 1, %v922
        %v924 = vrot.slane %v920, %v923
        %v925 = vmul.f32 %v917, %v924
        %v926 = vmul.f32 %v918, %v924
        %v927 = vstv %s326
        %v928 = vmul.f32 %v927, %v925
        %v929 = vmul.f32 %v927, %v926
        %v930 = vadd.f32 %v639, %v928
        %v931 = vadd.f32 %v640, %v929
        %s932 = scalar_lea.vmem %s302, 80
        %v933 = vld [vmem:[%s932] sm:$0x1f]
        %v934 = vld [vmem:[%s932 + $0x8] sm:$0x1f]
        %v935 = vld [vmem:[%s932 + $0x10] sm:$0x1f]
        %v936 = vld [vmem:[%s932 + $0x18] sm:$0x1f]
        %v937 = vld [vmem:[%s932 + $0x20] sm:$0x1f]
        %v938 = vld [vmem:[#allocation2] sm:$0xff]
        %v939 = vld [vmem:[#allocation2 + $0x10] sm:$0xff]
        %940 = vrot.lane.b32.xlu0 %v938, 32
        %v941 = vpop.permute.xlu0 %940
        %942 = vrot.lane.b32.xlu0 %v939, 32
        %v943 = vpop.permute.xlu0 %942
        %v944 = vlaneseq
        %v945 = vshrl.u32 %v944, 7
        %v946 = vsub.s32 0, %v945
        %v947 = vrot.slane %v933, %v946
        %v948 = vmul.f32 %v941, %v947
        %v949 = vmul.f32 %v943, %v947
        %950 = vrot.lane.b32.xlu0 %v938, 16
        %v951 = vpop.permute.xlu0 %950
        %952 = vrot.lane.b32.xlu0 %v939, 16
        %v953 = vpop.permute.xlu0 %952
        %v954 = vlaneseq
        %v955 = vshrl.u32 %v954, 7
        %v956 = vsub.s32 1, %v955
        %v957 = vrot.slane %v933, %v956
        %v958 = vmul.f32 %v951, %v957
        %v959 = vmul.f32 %v953, %v957
        %v960 = vadd.f32 %v948, %v958
        %v961 = vadd.f32 %v949, %v959
        %v962 = vlaneseq
        %v963 = vshrl.u32 %v962, 7
        %v964 = vsub.s32 2, %v963
        %v965 = vrot.slane %v933, %v964
        %v966 = vmul.f32 %v938, %v965
        %v967 = vmul.f32 %v939, %v965
        %v968 = vadd.f32 %v960, %v966
        %v969 = vadd.f32 %v961, %v967
        %970 = vrot.lane.b32.xlu0 %v938, 112
        %v971 = vpop.permute.xlu0 %970
        %972 = vrot.lane.b32.xlu0 %v939, 112
        %v973 = vpop.permute.xlu0 %972
        %v974 = vlaneseq
        %v975 = vshrl.u32 %v974, 7
        %v976 = vsub.s32 3, %v975
        %v977 = vrot.slane %v933, %v976
        %v978 = vmul.f32 %v971, %v977
        %v979 = vmul.f32 %v973, %v977
        %v980 = vadd.f32 %v968, %v978
        %v981 = vadd.f32 %v969, %v979
        %982 = vrot.lane.b32.xlu0 %v938, 96
        %v983 = vpop.permute.xlu0 %982
        %984 = vrot.lane.b32.xlu0 %v939, 96
        %v985 = vpop.permute.xlu0 %984
        %v986 = vlaneseq
        %v987 = vshrl.u32 %v986, 7
        %v988 = vsub.s32 4, %v987
        %v989 = vrot.slane %v933, %v988
        %v990 = vmul.f32 %v983, %v989
        %v991 = vmul.f32 %v985, %v989
        %v992 = vadd.f32 %v980, %v990
        %v993 = vadd.f32 %v981, %v991
        %994 = vrot.lane.b32.xlu0 %v657, 32
        %v995 = vpop.permute.xlu0 %994
        %996 = vrot.lane.b32.xlu0 %v658, 32
        %v997 = vpop.permute.xlu0 %996
        %v998 = vlaneseq
        %v999 = vshrl.u32 %v998, 7
        %v1000 = vsub.s32 0, %v999
        %v1001 = vrot.slane %v934, %v1000
        %v1002 = vmul.f32 %v995, %v1001
        %v1003 = vmul.f32 %v997, %v1001
        %v1004 = vadd.f32 %v992, %v1002
        %v1005 = vadd.f32 %v993, %v1003
        %v1006 = vlaneseq
        %v1007 = vshrl.u32 %v1006, 7
        %v1008 = vsub.s32 1, %v1007
        %v1009 = vrot.slane %v934, %v1008
        %v1010 = vmul.f32 %v660, %v1009
        %v1011 = vmul.f32 %v662, %v1009
        %v1012 = vadd.f32 %v1004, %v1010
        %v1013 = vadd.f32 %v1005, %v1011
        %v1014 = vlaneseq
        %v1015 = vshrl.u32 %v1014, 7
        %v1016 = vsub.s32 2, %v1015
        %v1017 = vrot.slane %v934, %v1016
        %v1018 = vmul.f32 %v657, %v1017
        %v1019 = vmul.f32 %v658, %v1017
        %v1020 = vadd.f32 %v1012, %v1018
        %v1021 = vadd.f32 %v1013, %v1019
        %v1022 = vlaneseq
        %v1023 = vshrl.u32 %v1022, 7
        %v1024 = vsub.s32 3, %v1023
        %v1025 = vrot.slane %v934, %v1024
        %v1026 = vmul.f32 %v678, %v1025
        %v1027 = vmul.f32 %v680, %v1025
        %v1028 = vadd.f32 %v1020, %v1026
        %v1029 = vadd.f32 %v1021, %v1027
        %1030 = vrot.lane.b32.xlu0 %v657, 96
        %v1031 = vpop.permute.xlu0 %1030
        %1032 = vrot.lane.b32.xlu0 %v658, 96
        %v1033 = vpop.permute.xlu0 %1032
        %v1034 = vlaneseq
        %v1035 = vshrl.u32 %v1034, 7
        %v1036 = vsub.s32 4, %v1035
        %v1037 = vrot.slane %v934, %v1036
        %v1038 = vmul.f32 %v1031, %v1037
        %v1039 = vmul.f32 %v1033, %v1037
        %v1040 = vadd.f32 %v1028, %v1038
        %v1041 = vadd.f32 %v1029, %v1039
        %1042 = vrot.lane.b32.xlu0 %v689, 32
        %v1043 = vpop.permute.xlu0 %1042
        %1044 = vrot.lane.b32.xlu0 %v690, 32
        %v1045 = vpop.permute.xlu0 %1044
        %v1046 = vlaneseq
        %v1047 = vshrl.u32 %v1046, 7
        %v1048 = vsub.s32 0, %v1047
        %v1049 = vrot.slane %v935, %v1048
        %v1050 = vmul.f32 %v1043, %v1049
        %v1051 = vmul.f32 %v1045, %v1049
        %v1052 = vadd.f32 %v1040, %v1050
        %v1053 = vadd.f32 %v1041, %v1051
        %v1054 = vlaneseq
        %v1055 = vshrl.u32 %v1054, 7
        %v1056 = vsub.s32 1, %v1055
        %v1057 = vrot.slane %v935, %v1056
        %v1058 = vmul.f32 %v692, %v1057
        %v1059 = vmul.f32 %v694, %v1057
        %v1060 = vadd.f32 %v1052, %v1058
        %v1061 = vadd.f32 %v1053, %v1059
        %v1062 = vlaneseq
        %v1063 = vshrl.u32 %v1062, 7
        %v1064 = vsub.s32 2, %v1063
        %v1065 = vrot.slane %v935, %v1064
        %v1066 = vmul.f32 %v689, %v1065
        %v1067 = vmul.f32 %v690, %v1065
        %v1068 = vadd.f32 %v1060, %v1066
        %v1069 = vadd.f32 %v1061, %v1067
        %v1070 = vlaneseq
        %v1071 = vshrl.u32 %v1070, 7
        %v1072 = vsub.s32 3, %v1071
        %v1073 = vrot.slane %v935, %v1072
        %v1074 = vmul.f32 %v712, %v1073
        %v1075 = vmul.f32 %v714, %v1073
        %v1076 = vadd.f32 %v1068, %v1074
        %v1077 = vadd.f32 %v1069, %v1075
        %1078 = vrot.lane.b32.xlu0 %v689, 96
        %v1079 = vpop.permute.xlu0 %1078
        %1080 = vrot.lane.b32.xlu0 %v690, 96
        %v1081 = vpop.permute.xlu0 %1080
        %v1082 = vlaneseq
        %v1083 = vshrl.u32 %v1082, 7
        %v1084 = vsub.s32 4, %v1083
        %v1085 = vrot.slane %v935, %v1084
        %v1086 = vmul.f32 %v1079, %v1085
        %v1087 = vmul.f32 %v1081, %v1085
        %v1088 = vadd.f32 %v1076, %v1086
        %v1089 = vadd.f32 %v1077, %v1087
        %1090 = vrot.lane.b32.xlu0 %v723, 32
        %v1091 = vpop.permute.xlu0 %1090
        %1092 = vrot.lane.b32.xlu0 %v724, 32
        %v1093 = vpop.permute.xlu0 %1092
        %v1094 = vlaneseq
        %v1095 = vshrl.u32 %v1094, 7
        %v1096 = vsub.s32 0, %v1095
        %v1097 = vrot.slane %v936, %v1096
        %v1098 = vmul.f32 %v1091, %v1097
        %v1099 = vmul.f32 %v1093, %v1097
        %v1100 = vadd.f32 %v1088, %v1098
        %v1101 = vadd.f32 %v1089, %v1099
        %v1102 = vlaneseq
        %v1103 = vshrl.u32 %v1102, 7
        %v1104 = vsub.s32 1, %v1103
        %v1105 = vrot.slane %v936, %v1104
        %v1106 = vmul.f32 %v726, %v1105
        %v1107 = vmul.f32 %v728, %v1105
        %v1108 = vadd.f32 %v1100, %v1106
        %v1109 = vadd.f32 %v1101, %v1107
        %v1110 = vlaneseq
        %v1111 = vshrl.u32 %v1110, 7
        %v1112 = vsub.s32 2, %v1111
        %v1113 = vrot.slane %v936, %v1112
        %v1114 = vmul.f32 %v723, %v1113
        %v1115 = vmul.f32 %v724, %v1113
        %v1116 = vadd.f32 %v1108, %v1114
        %v1117 = vadd.f32 %v1109, %v1115
        %v1118 = vlaneseq
        %v1119 = vshrl.u32 %v1118, 7
        %v1120 = vsub.s32 3, %v1119
        %v1121 = vrot.slane %v936, %v1120
        %v1122 = vmul.f32 %v746, %v1121
        %v1123 = vmul.f32 %v748, %v1121
        %v1124 = vadd.f32 %v1116, %v1122
        %v1125 = vadd.f32 %v1117, %v1123
        %1126 = vrot.lane.b32.xlu0 %v723, 96
        %v1127 = vpop.permute.xlu0 %1126
        %1128 = vrot.lane.b32.xlu0 %v724, 96
        %v1129 = vpop.permute.xlu0 %1128
        %v1130 = vlaneseq
        %v1131 = vshrl.u32 %v1130, 7
        %v1132 = vsub.s32 4, %v1131
        %v1133 = vrot.slane %v936, %v1132
        %v1134 = vmul.f32 %v1127, %v1133
        %v1135 = vmul.f32 %v1129, %v1133
        %v1136 = vadd.f32 %v1124, %v1134
        %v1137 = vadd.f32 %v1125, %v1135
        %v1138 = vld [vmem:[#allocation2 + $0x8] sm:$0xff]
        %v1139 = vld [vmem:[#allocation2 + $0x18] sm:$0xff]
        %1140 = vrot.lane.b32.xlu0 %v1138, 32
        %v1141 = vpop.permute.xlu0 %1140
        %1142 = vrot.lane.b32.xlu0 %v1139, 32
        %v1143 = vpop.permute.xlu0 %1142
        %v1144 = vlaneseq
        %v1145 = vshrl.u32 %v1144, 7
        %v1146 = vsub.s32 0, %v1145
        %v1147 = vrot.slane %v937, %v1146
        %v1148 = vmul.f32 %v1141, %v1147
        %v1149 = vmul.f32 %v1143, %v1147
        %v1150 = vadd.f32 %v1136, %v1148
        %v1151 = vadd.f32 %v1137, %v1149
        %1152 = vrot.lane.b32.xlu0 %v1138, 16
        %v1153 = vpop.permute.xlu0 %1152
        %1154 = vrot.lane.b32.xlu0 %v1139, 16
        %v1155 = vpop.permute.xlu0 %1154
        %v1156 = vlaneseq
        %v1157 = vshrl.u32 %v1156, 7
        %v1158 = vsub.s32 1, %v1157
        %v1159 = vrot.slane %v937, %v1158
        %v1160 = vmul.f32 %v1153, %v1159
        %v1161 = vmul.f32 %v1155, %v1159
        %v1162 = vadd.f32 %v1150, %v1160
        %v1163 = vadd.f32 %v1151, %v1161
        %v1164 = vlaneseq
        %v1165 = vshrl.u32 %v1164, 7
        %v1166 = vsub.s32 2, %v1165
        %v1167 = vrot.slane %v937, %v1166
        %v1168 = vmul.f32 %v1138, %v1167
        %v1169 = vmul.f32 %v1139, %v1167
        %v1170 = vadd.f32 %v1162, %v1168
        %v1171 = vadd.f32 %v1163, %v1169
        %1172 = vrot.lane.b32.xlu0 %v1138, 112
        %v1173 = vpop.permute.xlu0 %1172
        %1174 = vrot.lane.b32.xlu0 %v1139, 112
        %v1175 = vpop.permute.xlu0 %1174
        %v1176 = vlaneseq
        %v1177 = vshrl.u32 %v1176, 7
        %v1178 = vsub.s32 3, %v1177
        %v1179 = vrot.slane %v937, %v1178
        %v1180 = vmul.f32 %v1173, %v1179
        %v1181 = vmul.f32 %v1175, %v1179
        %v1182 = vadd.f32 %v1170, %v1180
        %v1183 = vadd.f32 %v1171, %v1181
        %1184 = vrot.lane.b32.xlu0 %v1138, 96
        %v1185 = vpop.permute.xlu0 %1184
        %1186 = vrot.lane.b32.xlu0 %v1139, 96
        %v1187 = vpop.permute.xlu0 %1186
        %v1188 = vlaneseq
        %v1189 = vshrl.u32 %v1188, 7
        %v1190 = vsub.s32 4, %v1189
        %v1191 = vrot.slane %v937, %v1190
        %v1192 = vmul.f32 %v1185, %v1191
        %v1193 = vmul.f32 %v1187, %v1191
        %v1194 = vadd.f32 %v1182, %v1192
        %v1195 = vadd.f32 %v1183, %v1193
        %s1196 = scalar_lea.vmem %s251, 320 [#allocation6]
        %v1197 = vld [vmem:[%s1196] sm:$0xff]
        %v1198 = vld [vmem:[%s1196 + $0x8] sm:$0xff]
        %v1199 = vld [vmem:[%s1196 + $0x10] sm:$0xff]
        %v1200 = vld [vmem:[%s1196 + $0x18] sm:$0xff]
        %v1201 = vld [vmem:[%s1196 + $0x20] sm:$0xff]
        %v1202 = vld [vmem:[%s1196 + $0x28] sm:$0xff]
        %v1203 = vld [vmem:[%s1196 + $0x30] sm:$0xff]
        %v1204 = vld [vmem:[%s1196 + $0x38] sm:$0xff]
        %1207 = vrot.lane.b32.xlu0 %v1194, 96
        %v1208 = vpop.permute.xlu0 %1207
        %1209 = vrot.lane.b32.xlu0 %v1195, 96
        %v1210 = vpop.permute.xlu0 %1209
        %v1211 = vsel %vm772, %v1208, 0
        %v1213 = vsel %vm772, %v1210, 0
        %1215 = vmatprep.subr.mxu0 0.0
        %1216 = vmatpush1.msra.mxu0 %v1197
        %1217 = vmatprep.subr.mxu0 0.0
        %1218 = vmatpush1.msra.mxu0 %v1198
        %1219 = vmatprep.subr.mxu0 0.0
        %1220 = vmatpush1.msra.mxu0 %v1199
        %1221 = vmatprep.subr.mxu0 0.0
        %1222 = vmatpush1.msra.mxu0 %v1200
        %1223 = vmatprep.subr.mxu0 0.0
        %1224 = vmatpush1.msra.mxu0 %v1201
        %1225 = vmatprep.subr.mxu0 0.0
        %1226 = vmatpush1.msra.mxu0 %v1202
        %1227 = vmatprep.subr.mxu0 0.0
        %1228 = vmatpush1.msra.mxu0 %v1203
        %1229 = vmatprep.subr.mxu0 0.0
        %1230 = vmatpush1.msra.mxu0 %v1204
        %1231 = vmatprep.subr.mxu0 0.0
        %1232 = vmatpush1.msra.mxu0 0.0
        %1233 = vmatprep.subr.mxu0 0.0
        %1234 = vmatpush1.msra.mxu0 0.0
        %1235 = vmatprep.subr.mxu0 0.0
        %1236 = vmatpush1.msra.mxu0 0.0
        %1237 = vmatprep.subr.mxu0 0.0
        %1238 = vmatpush1.msra.mxu0 0.0
        %1239 = vmatprep.subr.mxu0 0.0
        %1240 = vmatpush1.msra.mxu0 0.0
        %1241 = vmatprep.subr.mxu0 0.0
        %1242 = vmatpush1.msra.mxu0 0.0
        %1243 = vmatprep.subr.mxu0 0.0
        %1244 = vmatpush1.msra.mxu0 0.0
        %1245 = vmatprep.subr.mxu0 0.0
        %1246 = vmatpush1.msra.mxu0 0.0
        %1247 = vmatprep.subr.mxu0 0.0
        %1248 = vmatpush1.msra.mxu0 0.0
        %1249 = vmatprep.subr.mxu0 0.0
        %1250 = vmatpush1.msra.mxu0 0.0
        %1251 = vmatprep.subr.mxu0 0.0
        %1252 = vmatpush1.msra.mxu0 0.0
        %1253 = vmatprep.subr.mxu0 0.0
        %1254 = vmatpush1.msra.mxu0 0.0
        %1255 = vmatprep.subr.mxu0 0.0
        %1256 = vmatpush1.msra.mxu0 0.0
        %1257 = vmatprep.subr.mxu0 0.0
        %1258 = vmatpush1.msra.mxu0 0.0
        %1259 = vmatprep.subr.mxu0 0.0
        %1260 = vmatpush1.msra.mxu0 0.0
        %1261 = vmatprep.subr.mxu0 0.0
        %1262 = vmatpush1.msra.mxu0 0.0
        %1263 = vmatprep.subr.mxu0 0.0
        %1264 = vmatpush1.msra.mxu0 0.0
        %1265 = vmatprep.subr.mxu0 0.0
        %1266 = vmatpush1.msra.mxu0 0.0
        %1267 = vmatprep.subr.mxu0 0.0
        %1268 = vmatpush1.msra.mxu0 0.0
        %1269 = vmatprep.subr.mxu0 0.0
        %1270 = vmatpush1.msra.mxu0 0.0
        %1271 = vmatprep.subr.mxu0 0.0
        %1272 = vmatpush1.msra.mxu0 0.0
        %1273 = vmatprep.subr.mxu0 0.0
        %1274 = vmatpush1.msra.mxu0 0.0
        %1275 = vmatprep.subr.mxu0 0.0
        %1276 = vmatpush1.msra.mxu0 0.0
        %1277 = vmatprep.subr.mxu0 0.0
        %1278 = vmatpush1.msra.mxu0 0.0
        %1279 = vmatprep.mubr.f32.mxu0 0.0
        %1280 = vmatmul.mubr.f32.gmra.mrb[0].mxu0 %v1211
        %v1281 = vpop.f32.mrb[0].mxu0
        %v1282 = vadd.f32 0.0, %v1281
        %v1283 = vpop.f32.mrb[0].mxu0
        %1284 = vmatprep.mubr.f32.mxu0 0.0
        %1285 = vmatmul.mubr.f32.gmra.mrb[0].mxu0 %v1213
        %v1286 = vpop.f32.mrb[0].mxu0
        %v1287 = vadd.f32 0.0, %v1286
        %v1288 = vpop.f32.mrb[0].mxu0
        %1289 = vdwg.mxu0
        %v1290 = vsel %vm772, %v1282, 0.0
        %v1291 = vsel %vm772, %v1287, 0.0
        %v1292 = vadd.f32 %v1290, %v1291
        %v1293 = vrot.slane %v1292, 4
        %v1294 = vadd.f32 %v1292, %v1293
        %v1295 = vrot.slane %v1294, 2
        %v1296 = vadd.f32 %v1294, %v1295
        %v1297 = vrot.slane %v1296, 1
        %v1298 = vadd.f32 %v1296, %v1297
        %v1299 = vmul.f32 %v1282, %v1282
        %v1300 = vmul.f32 %v1287, %v1287
        %v1301 = vsel %vm772, %v1299, 0.0
        %v1302 = vsel %vm772, %v1300, 0.0
        %v1303 = vadd.f32 %v1301, %v1302
        %v1304 = vrot.slane %v1303, 4
        %v1305 = vadd.f32 %v1303, %v1304
        %v1306 = vrot.slane %v1305, 2
        %v1307 = vadd.f32 %v1305, %v1306
        %v1308 = vrot.slane %v1307, 1
        %v1309 = vadd.f32 %v1307, %v1308
        %v1310 = vsel %vm463, %v1298, %v1309
        %1311 = vrot.lane.b32.xlu0 %v1310, 64
        %v1312 = vpop.permute.xlu0 %1311
        %v1313 = vsel %vm469, %v1312, %v1310
        %1314 = vrot.lane.b32.xlu0 %v1313, 64
        %v1315 = vpop.permute.xlu0 %1314
        %v1316 = vsel %vm469, %v1315, %v1310
        %1318 = vrot.lane.b32.xlu0 %v1316, 72
        %v1319 = vpop.permute.xlu0 %1318
        %v1321 = vadd.f32 %v1310, %v1319
        %1322 = vrot.lane.b32.xlu0 %v1321, 64
        %v1323 = vpop.permute.xlu0 %1322
        %v1324 = vsel %vm469, %v1323, %v1321
        %1325 = vrot.lane.b32.xlu0 %v1324, 64
        %v1326 = vpop.permute.xlu0 %1325
        %v1327 = vsel %vm469, %v1326, %v1321
        %1329 = vrot.lane.b32.xlu0 %v1327, 80
        %v1330 = vpop.permute.xlu0 %1329
        %v1332 = vadd.f32 %v1321, %v1330
        %1333 = vrot.lane.b32.xlu0 %v1332, 64
        %v1334 = vpop.permute.xlu0 %1333
        %v1335 = vsel %vm469, %v1334, %v1332
        %1336 = vrot.lane.b32.xlu0 %v1335, 64
        %v1337 = vpop.permute.xlu0 %1336
        %v1338 = vsel %vm469, %v1337, %v1332
        %1340 = vrot.lane.b32.xlu0 %v1338, 96
        %v1341 = vpop.permute.xlu0 %1340
        %v1343 = vadd.f32 %v1332, %v1341
        %v1344 = vmul.f32 %v1343, 0.0078125
        %v1345 = vmul.f32 %v1344, %v1344
        %v1347 = vrot.slane %v1345, 7
        %v1349 = vsub.f32 %v1344, %v1347
        %v1350 = vmax.f32 %v1349, 0.0
        %v1351 = vlaneseq
        %v1352 = vshrl.u32 %v1351, 7
        %v1353 = vsub.s32 0, %v1352
        %v1354 = vrot.slane %v1344, %v1353
        %v1355 = vsub.f32 %v1282, %v1354
        %v1356 = vsub.f32 %v1287, %v1354
        %v1357 = vadd.f32 %v1350, 1e-05
        %v1358 = vrsqrt.pop %v1357
        %v1359 = vlaneseq
        %v1360 = vshrl.u32 %v1359, 7
        %v1361 = vsub.s32 1, %v1360
        %v1362 = vrot.slane %v1358, %v1361
        %v1363 = vmul.f32 %v1355, %v1362
        %v1364 = vmul.f32 %v1356, %v1362
        %v1365 = vstv %s328
        %v1366 = vmul.f32 %v1365, %v1363
        %v1367 = vmul.f32 %v1365, %v1364
        %v1368 = vadd.f32 %v930, %v1366
        %v1369 = vadd.f32 %v931, %v1367
        %v1370 = vld [vmem:[%s297] sm:$0x7]
        %v1371 = vld [vmem:[%s297 + $0x4] sm:$0x7]
        %v1372 = vld [vmem:[%s297 + $0x8] sm:$0x7]
        %v1373 = vld [vmem:[#allocation2 + $0x3] sm:$0xff]
        %v1374 = vld [vmem:[#allocation2 + $0x13] sm:$0xff]
        %1375 = vrot.lane.b32.xlu0 %v1373, 8
        %v1376 = vpop.permute.xlu0 %1375
        %1377 = vrot.lane.b32.xlu0 %v1374, 8
        %v1378 = vpop.permute.xlu0 %1377
        %v1379 = vlaneseq
        %v1380 = vshrl.u32 %v1379, 7
        %v1381 = vsub.s32 0, %v1380
        %v1382 = vrot.slane %v1370, %v1381
        %v1383 = vmul.f32 %v1376, %v1382
        %v1384 = vmul.f32 %v1378, %v1382
        %v1385 = vlaneseq
        %v1386 = vshrl.u32 %v1385, 7
        %v1387 = vsub.s32 1, %v1386
        %v1388 = vrot.slane %v1370, %v1387
        %v1389 = vmul.f32 %v1373, %v1388
        %v1390 = vmul.f32 %v1374, %v1388
        %v1391 = vadd.f32 %v1383, %v1389
        %v1392 = vadd.f32 %v1384, %v1390
        %1393 = vrot.lane.b32.xlu0 %v1373, 120
        %v1394 = vpop.permute.xlu0 %1393
        %1395 = vrot.lane.b32.xlu0 %v1374, 120
        %v1396 = vpop.permute.xlu0 %1395
        %v1397 = vlaneseq
        %v1398 = vshrl.u32 %v1397, 7
        %v1399 = vsub.s32 2, %v1398
        %v1400 = vrot.slane %v1370, %v1399
        %v1401 = vmul.f32 %v1394, %v1400
        %v1402 = vmul.f32 %v1396, %v1400
        %v1403 = vadd.f32 %v1391, %v1401
        %v1404 = vadd.f32 %v1392, %v1402
        %1405 = vrot.lane.b32.xlu0 %v689, 8
        %v1406 = vpop.permute.xlu0 %1405
        %1407 = vrot.lane.b32.xlu0 %v690, 8
        %v1408 = vpop.permute.xlu0 %1407
        %v1409 = vlaneseq
        %v1410 = vshrl.u32 %v1409, 7
        %v1411 = vsub.s32 0, %v1410
        %v1412 = vrot.slane %v1371, %v1411
        %v1413 = vmul.f32 %v1406, %v1412
        %v1414 = vmul.f32 %v1408, %v1412
        %v1415 = vadd.f32 %v1403, %v1413
        %v1416 = vadd.f32 %v1404, %v1414
        %v1417 = vlaneseq
        %v1418 = vshrl.u32 %v1417, 7
        %v1419 = vsub.s32 1, %v1418
        %v1420 = vrot.slane %v1371, %v1419
        %v1421 = vmul.f32 %v689, %v1420
        %v1422 = vmul.f32 %v690, %v1420
        %v1423 = vadd.f32 %v1415, %v1421
        %v1424 = vadd.f32 %v1416, %v1422
        %1425 = vrot.lane.b32.xlu0 %v689, 120
        %v1426 = vpop.permute.xlu0 %1425
        %1427 = vrot.lane.b32.xlu0 %v690, 120
        %v1428 = vpop.permute.xlu0 %1427
        %v1429 = vlaneseq
        %v1430 = vshrl.u32 %v1429, 7
        %v1431 = vsub.s32 2, %v1430
        %v1432 = vrot.slane %v1371, %v1431
        %v1433 = vmul.f32 %v1426, %v1432
        %v1434 = vmul.f32 %v1428, %v1432
        %v1435 = vadd.f32 %v1423, %v1433
        %v1436 = vadd.f32 %v1424, %v1434
        %v1437 = vld [vmem:[#allocation2 + $0x5] sm:$0xff]
        %v1438 = vld [vmem:[#allocation2 + $0x15] sm:$0xff]
        %1439 = vrot.lane.b32.xlu0 %v1437, 8
        %v1440 = vpop.permute.xlu0 %1439
        %1441 = vrot.lane.b32.xlu0 %v1438, 8
        %v1442 = vpop.permute.xlu0 %1441
        %v1443 = vlaneseq
        %v1444 = vshrl.u32 %v1443, 7
        %v1445 = vsub.s32 0, %v1444
        %v1446 = vrot.slane %v1372, %v1445
        %v1447 = vmul.f32 %v1440, %v1446
        %v1448 = vmul.f32 %v1442, %v1446
        %v1449 = vadd.f32 %v1435, %v1447
        %v1450 = vadd.f32 %v1436, %v1448
        %v1451 = vlaneseq
        %v1452 = vshrl.u32 %v1451, 7
        %v1453 = vsub.s32 1, %v1452
        %v1454 = vrot.slane %v1372, %v1453
        %v1455 = vmul.f32 %v1437, %v1454
        %v1456 = vmul.f32 %v1438, %v1454
        %v1457 = vadd.f32 %v1449, %v1455
        %v1458 = vadd.f32 %v1450, %v1456
        %1459 = vrot.lane.b32.xlu0 %v1437, 120
        %v1460 = vpop.permute.xlu0 %1459
        %1461 = vrot.lane.b32.xlu0 %v1438, 120
        %v1462 = vpop.permute.xlu0 %1461
        %v1463 = vlaneseq
        %v1464 = vshrl.u32 %v1463, 7
        %v1465 = vsub.s32 2, %v1464
        %v1466 = vrot.slane %v1372, %v1465
        %v1467 = vmul.f32 %v1460, %v1466
        %v1468 = vmul.f32 %v1462, %v1466
        %v1469 = vadd.f32 %v1457, %v1467
        %v1470 = vadd.f32 %v1458, %v1468
        %v1471 = vld [vmem:[%s251] sm:$0xff]
        %v1472 = vld [vmem:[%s251 + $0x8] sm:$0xff]
        %v1473 = vld [vmem:[%s251 + $0x10] sm:$0xff]
        %v1474 = vld [vmem:[%s251 + $0x18] sm:$0xff]
        %v1475 = vld [vmem:[%s251 + $0x20] sm:$0xff]
        %v1476 = vld [vmem:[%s251 + $0x28] sm:$0xff]
        %v1477 = vld [vmem:[%s251 + $0x30] sm:$0xff]
        %v1478 = vld [vmem:[%s251 + $0x38] sm:$0xff]
        %1481 = vrot.lane.b32.xlu0 %v1469, 96
        %v1482 = vpop.permute.xlu0 %1481
        %1483 = vrot.lane.b32.xlu0 %v1470, 96
        %v1484 = vpop.permute.xlu0 %1483
        %v1485 = vsel %vm772, %v1482, 0
        %v1487 = vsel %vm772, %v1484, 0
        %1489 = vmatprep.subr.mxu0 0.0
        %1490 = vmatpush1.msra.mxu0 %v1471
        %1491 = vmatprep.subr.mxu0 0.0
        %1492 = vmatpush1.msra.mxu0 %v1472
        %1493 = vmatprep.subr.mxu0 0.0
        %1494 = vmatpush1.msra.mxu0 %v1473
        %1495 = vmatprep.subr.mxu0 0.0
        %1496 = vmatpush1.msra.mxu0 %v1474
        %1497 = vmatprep.subr.mxu0 0.0
        %1498 = vmatpush1.msra.mxu0 %v1475
        %1499 = vmatprep.subr.mxu0 0.0
        %1500 = vmatpush1.msra.mxu0 %v1476
        %1501 = vmatprep.subr.mxu0 0.0
        %1502 = vmatpush1.msra.mxu0 %v1477
        %1503 = vmatprep.subr.mxu0 0.0
        %1504 = vmatpush1.msra.mxu0 %v1478
        %1505 = vmatprep.subr.mxu0 0.0
        %1506 = vmatpush1.msra.mxu0 0.0
        %1507 = vmatprep.subr.mxu0 0.0
        %1508 = vmatpush1.msra.mxu0 0.0
        %1509 = vmatprep.subr.mxu0 0.0
        %1510 = vmatpush1.msra.mxu0 0.0
        %1511 = vmatprep.subr.mxu0 0.0
        %1512 = vmatpush1.msra.mxu0 0.0
        %1513 = vmatprep.subr.mxu0 0.0
        %1514 = vmatpush1.msra.mxu0 0.0
        %1515 = vmatprep.subr.mxu0 0.0
        %1516 = vmatpush1.msra.mxu0 0.0
        %1517 = vmatprep.subr.mxu0 0.0
        %1518 = vmatpush1.msra.mxu0 0.0
        %1519 = vmatprep.subr.mxu0 0.0
        %1520 = vmatpush1.msra.mxu0 0.0
        %1521 = vmatprep.subr.mxu0 0.0
        %1522 = vmatpush1.msra.mxu0 0.0
        %1523 = vmatprep.subr.mxu0 0.0
        %1524 = vmatpush1.msra.mxu0 0.0
        %1525 = vmatprep.subr.mxu0 0.0
        %1526 = vmatpush1.msra.mxu0 0.0
        %1527 = vmatprep.subr.mxu0 0.0
        %1528 = vmatpush1.msra.mxu0 0.0
        %1529 = vmatprep.subr.mxu0 0.0
        %1530 = vmatpush1.msra.mxu0 0.0
        %1531 = vmatprep.subr.mxu0 0.0
        %1532 = vmatpush1.msra.mxu0 0.0
        %1533 = vmatprep.subr.mxu0 0.0
        %1534 = vmatpush1.msra.mxu0 0.0
        %1535 = vmatprep.subr.mxu0 0.0
        %1536 = vmatpush1.msra.mxu0 0.0
        %1537 = vmatprep.subr.mxu0 0.0
        %1538 = vmatpush1.msra.mxu0 0.0
        %1539 = vmatprep.subr.mxu0 0.0
        %1540 = vmatpush1.msra.mxu0 0.0
        %1541 = vmatprep.subr.mxu0 0.0
        %1542 = vmatpush1.msra.mxu0 0.0
        %1543 = vmatprep.subr.mxu0 0.0
        %1544 = vmatpush1.msra.mxu0 0.0
        %1545 = vmatprep.subr.mxu0 0.0
        %1546 = vmatpush1.msra.mxu0 0.0
        %1547 = vmatprep.subr.mxu0 0.0
        %1548 = vmatpush1.msra.mxu0 0.0
        %1549 = vmatprep.subr.mxu0 0.0
        %1550 = vmatpush1.msra.mxu0 0.0
        %1551 = vmatprep.subr.mxu0 0.0
        %1552 = vmatpush1.msra.mxu0 0.0
        %1553 = vmatprep.mubr.f32.mxu0 0.0
        %1554 = vmatmul.mubr.f32.gmra.mrb[0].mxu0 %v1485
        %v1555 = vpop.f32.mrb[0].mxu0
        %v1556 = vadd.f32 0.0, %v1555
        %v1557 = vpop.f32.mrb[0].mxu0
        %1558 = vmatprep.mubr.f32.mxu0 0.0
        %1559 = vmatmul.mubr.f32.gmra.mrb[0].mxu0 %v1487
        %v1560 = vpop.f32.mrb[0].mxu0
        %v1561 = vadd.f32 0.0, %v1560
        %v1562 = vpop.f32.mrb[0].mxu0
        %1563 = vdwg.mxu0
        %v1564 = vsel %vm772, %v1556, 0.0
        %v1565 = vsel %vm772, %v1561, 0.0
        %v1566 = vadd.f32 %v1564, %v1565
        %v1567 = vrot.slane %v1566, 4
        %v1568 = vadd.f32 %v1566, %v1567
        %v1569 = vrot.slane %v1568, 2
        %v1570 = vadd.f32 %v1568, %v1569
        %v1571 = vrot.slane %v1570, 1
        %v1572 = vadd.f32 %v1570, %v1571
        %v1573 = vmul.f32 %v1556, %v1556
        %v1574 = vmul.f32 %v1561, %v1561
        %v1575 = vsel %vm772, %v1573, 0.0
        %v1576 = vsel %vm772, %v1574, 0.0
        %v1577 = vadd.f32 %v1575, %v1576
        %v1578 = vrot.slane %v1577, 4
        %v1579 = vadd.f32 %v1577, %v1578
        %v1580 = vrot.slane %v1579, 2
        %v1581 = vadd.f32 %v1579, %v1580
        %v1582 = vrot.slane %v1581, 1
        %v1583 = vadd.f32 %v1581, %v1582
        %v1584 = vsel %vm463, %v1572, %v1583
        %1585 = vrot.lane.b32.xlu0 %v1584, 64
        %v1586 = vpop.permute.xlu0 %1585
        %v1587 = vsel %vm469, %v1586, %v1584
        %1588 = vrot.lane.b32.xlu0 %v1587, 64
        %v1589 = vpop.permute.xlu0 %1588
        %v1590 = vsel %vm469, %v1589, %v1584
        %1592 = vrot.lane.b32.xlu0 %v1590, 72
        %v1593 = vpop.permute.xlu0 %1592
        %v1595 = vadd.f32 %v1584, %v1593
        %1596 = vrot.lane.b32.xlu0 %v1595, 64
        %v1597 = vpop.permute.xlu0 %1596
        %v1598 = vsel %vm469, %v1597, %v1595
        %1599 = vrot.lane.b32.xlu0 %v1598, 64
        %v1600 = vpop.permute.xlu0 %1599
        %v1601 = vsel %vm469, %v1600, %v1595
        %1603 = vrot.lane.b32.xlu0 %v1601, 80
        %v1604 = vpop.permute.xlu0 %1603
        %v1606 = vadd.f32 %v1595, %v1604
        %1607 = vrot.lane.b32.xlu0 %v1606, 64
        %v1608 = vpop.permute.xlu0 %1607
        %v1609 = vsel %vm469, %v1608, %v1606
        %1610 = vrot.lane.b32.xlu0 %v1609, 64
        %v1611 = vpop.permute.xlu0 %1610
        %v1612 = vsel %vm469, %v1611, %v1606
        %1614 = vrot.lane.b32.xlu0 %v1612, 96
        %v1615 = vpop.permute.xlu0 %1614
        %v1617 = vadd.f32 %v1606, %v1615
        %v1618 = vmul.f32 %v1617, 0.0078125
        %v1619 = vmul.f32 %v1618, %v1618
        %v1621 = vrot.slane %v1619, 7
        %v1623 = vsub.f32 %v1618, %v1621
        %v1624 = vmax.f32 %v1623, 0.0
        %v1625 = vlaneseq
        %v1626 = vshrl.u32 %v1625, 7
        %v1627 = vsub.s32 0, %v1626
        %v1628 = vrot.slane %v1618, %v1627
        %v1629 = vsub.f32 %v1556, %v1628
        %v1630 = vsub.f32 %v1561, %v1628
        %v1631 = vadd.f32 %v1624, 1e-05
        %v1632 = vrsqrt.pop %v1631
        %v1633 = vlaneseq
        %v1634 = vshrl.u32 %v1633, 7
        %v1635 = vsub.s32 1, %v1634
        %v1636 = vrot.slane %v1632, %v1635
        %v1637 = vmul.f32 %v1629, %v1636
        %v1638 = vmul.f32 %v1630, %v1636
        %v1639 = vmax.f32 %v1637, 0.0
        %v1640 = vmax.f32 %v1638, 0.0
        %v1641 = vld [vmem:[%s302] sm:$0x1f]
        %v1642 = vld [vmem:[%s302 + $0x8] sm:$0x1f]
        %v1643 = vld [vmem:[%s302 + $0x10] sm:$0x1f]
        %v1644 = vld [vmem:[%s302 + $0x18] sm:$0x1f]
        %v1645 = vld [vmem:[%s302 + $0x20] sm:$0x1f]
        %v1646 = vlaneseq
        %v1647 = vshrl.u32 %v1646, 7
        %v1648 = vsub.s32 0, %v1647
        %v1649 = vrot.slane %v1641, %v1648
        %v1650 = vmul.f32 %v660, %v1649
        %v1651 = vmul.f32 %v662, %v1649
        %1652 = vrot.lane.b32.xlu0 %v657, 8
        %v1653 = vpop.permute.xlu0 %1652
        %1654 = vrot.lane.b32.xlu0 %v658, 8
        %v1655 = vpop.permute.xlu0 %1654
        %v1656 = vlaneseq
        %v1657 = vshrl.u32 %v1656, 7
        %v1658 = vsub.s32 1, %v1657
        %v1659 = vrot.slane %v1641, %v1658
        %v1660 = vmul.f32 %v1653, %v1659
        %v1661 = vmul.f32 %v1655, %v1659
        %v1662 = vadd.f32 %v1650, %v1660
        %v1663 = vadd.f32 %v1651, %v1661
        %v1664 = vlaneseq
        %v1665 = vshrl.u32 %v1664, 7
        %v1666 = vsub.s32 2, %v1665
        %v1667 = vrot.slane %v1641, %v1666
        %v1668 = vmul.f32 %v657, %v1667
        %v1669 = vmul.f32 %v658, %v1667
        %v1670 = vadd.f32 %v1662, %v1668
        %v1671 = vadd.f32 %v1663, %v1669
        %1672 = vrot.lane.b32.xlu0 %v657, 120
        %v1673 = vpop.permute.xlu0 %1672
        %1674 = vrot.lane.b32.xlu0 %v658, 120
        %v1675 = vpop.permute.xlu0 %1674
        %v1676 = vlaneseq
        %v1677 = vshrl.u32 %v1676, 7
        %v1678 = vsub.s32 3, %v1677
        %v1679 = vrot.slane %v1641, %v1678
        %v1680 = vmul.f32 %v1673, %v1679
        %v1681 = vmul.f32 %v1675, %v1679
        %v1682 = vadd.f32 %v1670, %v1680
        %v1683 = vadd.f32 %v1671, %v1681
        %v1684 = vlaneseq
        %v1685 = vshrl.u32 %v1684, 7
        %v1686 = vsub.s32 4, %v1685
        %v1687 = vrot.slane %v1641, %v1686
        %v1688 = vmul.f32 %v678, %v1687
        %v1689 = vmul.f32 %v680, %v1687
        %v1690 = vadd.f32 %v1682, %v1688
        %v1691 = vadd.f32 %v1683, %v1689
        %1692 = vrot.lane.b32.xlu0 %v1373, 16
        %v1693 = vpop.permute.xlu0 %1692
        %1694 = vrot.lane.b32.xlu0 %v1374, 16
        %v1695 = vpop.permute.xlu0 %1694
        %v1696 = vlaneseq
        %v1697 = vshrl.u32 %v1696, 7
        %v1698 = vsub.s32 0, %v1697
        %v1699 = vrot.slane %v1642, %v1698
        %v1700 = vmul.f32 %v1693, %v1699
        %v1701 = vmul.f32 %v1695, %v1699
        %v1702 = vadd.f32 %v1690, %v1700
        %v1703 = vadd.f32 %v1691, %v1701
        %v1704 = vlaneseq
        %v1705 = vshrl.u32 %v1704, 7
        %v1706 = vsub.s32 1, %v1705
        %v1707 = vrot.slane %v1642, %v1706
        %v1708 = vmul.f32 %v1376, %v1707
        %v1709 = vmul.f32 %v1378, %v1707
        %v1710 = vadd.f32 %v1702, %v1708
        %v1711 = vadd.f32 %v1703, %v1709
        %v1712 = vlaneseq
        %v1713 = vshrl.u32 %v1712, 7
        %v1714 = vsub.s32 2, %v1713
        %v1715 = vrot.slane %v1642, %v1714
        %v1716 = vmul.f32 %v1373, %v1715
        %v1717 = vmul.f32 %v1374, %v1715
        %v1718 = vadd.f32 %v1710, %v1716
        %v1719 = vadd.f32 %v1711, %v1717
        %v1720 = vlaneseq
        %v1721 = vshrl.u32 %v1720, 7
        %v1722 = vsub.s32 3, %v1721
        %v1723 = vrot.slane %v1642, %v1722
        %v1724 = vmul.f32 %v1394, %v1723
        %v1725 = vmul.f32 %v1396, %v1723
        %v1726 = vadd.f32 %v1718, %v1724
        %v1727 = vadd.f32 %v1719, %v1725
        %1728 = vrot.lane.b32.xlu0 %v1373, 112
        %v1729 = vpop.permute.xlu0 %1728
        %1730 = vrot.lane.b32.xlu0 %v1374, 112
        %v1731 = vpop.permute.xlu0 %1730
        %v1732 = vlaneseq
        %v1733 = vshrl.u32 %v1732, 7
        %v1734 = vsub.s32 4, %v1733
        %v1735 = vrot.slane %v1642, %v1734
        %v1736 = vmul.f32 %v1729, %v1735
        %v1737 = vmul.f32 %v1731, %v1735
        %v1738 = vadd.f32 %v1726, %v1736
        %v1739 = vadd.f32 %v1727, %v1737
        %v1740 = vlaneseq
        %v1741 = vshrl.u32 %v1740, 7
        %v1742 = vsub.s32 0, %v1741
        %v1743 = vrot.slane %v1643, %v1742
        %v1744 = vmul.f32 %v692, %v1743
        %v1745 = vmul.f32 %v694, %v1743
        %v1746 = vadd.f32 %v1738, %v1744
        %v1747 = vadd.f32 %v1739, %v1745
        %v1748 = vlaneseq
        %v1749 = vshrl.u32 %v1748, 7
        %v1750 = vsub.s32 1, %v1749
        %v1751 = vrot.slane %v1643, %v1750
        %v1752 = vmul.f32 %v1406, %v1751
        %v1753 = vmul.f32 %v1408, %v1751
        %v1754 = vadd.f32 %v1746, %v1752
        %v1755 = vadd.f32 %v1747, %v1753
        %v1756 = vlaneseq
        %v1757 = vshrl.u32 %v1756, 7
        %v1758 = vsub.s32 2, %v1757
        %v1759 = vrot.slane %v1643, %v1758
        %v1760 = vmul.f32 %v689, %v1759
        %v1761 = vmul.f32 %v690, %v1759
        %v1762 = vadd.f32 %v1754, %v1760
        %v1763 = vadd.f32 %v1755, %v1761
        %v1764 = vlaneseq
        %v1765 = vshrl.u32 %v1764, 7
        %v1766 = vsub.s32 3, %v1765
        %v1767 = vrot.slane %v1643, %v1766
        %v1768 = vmul.f32 %v1426, %v1767
        %v1769 = vmul.f32 %v1428, %v1767
        %v1770 = vadd.f32 %v1762, %v1768
        %v1771 = vadd.f32 %v1763, %v1769
        %v1772 = vlaneseq
        %v1773 = vshrl.u32 %v1772, 7
        %v1774 = vsub.s32 4, %v1773
        %v1775 = vrot.slane %v1643, %v1774
        %v1776 = vmul.f32 %v712, %v1775
        %v1777 = vmul.f32 %v714, %v1775
        %v1778 = vadd.f32 %v1770, %v1776
        %v1779 = vadd.f32 %v1771, %v1777
        %1780 = vrot.lane.b32.xlu0 %v1437, 16
        %v1781 = vpop.permute.xlu0 %1780
        %1782 = vrot.lane.b32.xlu0 %v1438, 16
        %v1783 = vpop.permute.xlu0 %1782
        %v1784 = vlaneseq
        %v1785 = vshrl.u32 %v1784, 7
        %v1786 = vsub.s32 0, %v1785
        %v1787 = vrot.slane %v1644, %v1786
        %v1788 = vmul.f32 %v1781, %v1787
        %v1789 = vmul.f32 %v1783, %v1787
        %v1790 = vadd.f32 %v1778, %v1788
        %v1791 = vadd.f32 %v1779, %v1789
        %v1792 = vlaneseq
        %v1793 = vshrl.u32 %v1792, 7
        %v1794 = vsub.s32 1, %v1793
        %v1795 = vrot.slane %v1644, %v1794
        %v1796 = vmul.f32 %v1440, %v1795
        %v1797 = vmul.f32 %v1442, %v1795
        %v1798 = vadd.f32 %v1790, %v1796
        %v1799 = vadd.f32 %v1791, %v1797
        %v1800 = vlaneseq
        %v1801 = vshrl.u32 %v1800, 7
        %v1802 = vsub.s32 2, %v1801
        %v1803 = vrot.slane %v1644, %v1802
        %v1804 = vmul.f32 %v1437, %v1803
        %v1805 = vmul.f32 %v1438, %v1803
        %v1806 = vadd.f32 %v1798, %v1804
        %v1807 = vadd.f32 %v1799, %v1805
        %v1808 = vlaneseq
        %v1809 = vshrl.u32 %v1808, 7
        %v1810 = vsub.s32 3, %v1809
        %v1811 = vrot.slane %v1644, %v1810
        %v1812 = vmul.f32 %v1460, %v1811
        %v1813 = vmul.f32 %v1462, %v1811
        %v1814 = vadd.f32 %v1806, %v1812
        %v1815 = vadd.f32 %v1807, %v1813
        %1816 = vrot.lane.b32.xlu0 %v1437, 112
        %v1817 = vpop.permute.xlu0 %1816
        %1818 = vrot.lane.b32.xlu0 %v1438, 112
        %v1819 = vpop.permute.xlu0 %1818
        %v1820 = vlaneseq
        %v1821 = vshrl.u32 %v1820, 7
        %v1822 = vsub.s32 4, %v1821
        %v1823 = vrot.slane %v1644, %v1822
        %v1824 = vmul.f32 %v1817, %v1823
        %v1825 = vmul.f32 %v1819, %v1823
        %v1826 = vadd.f32 %v1814, %v1824
        %v1827 = vadd.f32 %v1815, %v1825
        %v1828 = vlaneseq
        %v1829 = vshrl.u32 %v1828, 7
        %v1830 = vsub.s32 0, %v1829
        %v1831 = vrot.slane %v1645, %v1830
        %v1832 = vmul.f32 %v726, %v1831
        %v1833 = vmul.f32 %v728, %v1831
        %v1834 = vadd.f32 %v1826, %v1832
        %v1835 = vadd.f32 %v1827, %v1833
        %1836 = vrot.lane.b32.xlu0 %v723, 8
        %v1837 = vpop.permute.xlu0 %1836
        %1838 = vrot.lane.b32.xlu0 %v724, 8
        %v1839 = vpop.permute.xlu0 %1838
        %v1840 = vlaneseq
        %v1841 = vshrl.u32 %v1840, 7
        %v1842 = vsub.s32 1, %v1841
        %v1843 = vrot.slane %v1645, %v1842
        %v1844 = vmul.f32 %v1837, %v1843
        %v1845 = vmul.f32 %v1839, %v1843
        %v1846 = vadd.f32 %v1834, %v1844
        %v1847 = vadd.f32 %v1835, %v1845
        %v1848 = vlaneseq
        %v1849 = vshrl.u32 %v1848, 7
        %v1850 = vsub.s32 2, %v1849
        %v1851 = vrot.slane %v1645, %v1850
        %v1852 = vmul.f32 %v723, %v1851
        %v1853 = vmul.f32 %v724, %v1851
        %v1854 = vadd.f32 %v1846, %v1852
        %v1855 = vadd.f32 %v1847, %v1853
        %1856 = vrot.lane.b32.xlu0 %v723, 120
        %v1857 = vpop.permute.xlu0 %1856
        %1858 = vrot.lane.b32.xlu0 %v724, 120
        %v1859 = vpop.permute.xlu0 %1858
        %v1860 = vlaneseq
        %v1861 = vshrl.u32 %v1860, 7
        %v1862 = vsub.s32 3, %v1861
        %v1863 = vrot.slane %v1645, %v1862
        %v1864 = vmul.f32 %v1857, %v1863
        %v1865 = vmul.f32 %v1859, %v1863
        %v1866 = vadd.f32 %v1854, %v1864
        %v1867 = vadd.f32 %v1855, %v1865
        %v1868 = vlaneseq
        %v1869 = vshrl.u32 %v1868, 7
        %v1870 = vsub.s32 4, %v1869
        %v1871 = vrot.slane %v1645, %v1870
        %v1872 = vmul.f32 %v746, %v1871
        %v1873 = vmul.f32 %v748, %v1871
        %v1874 = vadd.f32 %v1866, %v1872
        %v1875 = vadd.f32 %v1867, %v1873
        %s1876 = scalar_lea.vmem %s251, 128 [#allocation6]
        %v1877 = vld [vmem:[%s1876] sm:$0xff]
        %v1878 = vld [vmem:[%s1876 + $0x8] sm:$0xff]
        %v1879 = vld [vmem:[%s1876 + $0x10] sm:$0xff]
        %v1880 = vld [vmem:[%s1876 + $0x18] sm:$0xff]
        %v1881 = vld [vmem:[%s1876 + $0x20] sm:$0xff]
        %v1882 = vld [vmem:[%s1876 + $0x28] sm:$0xff]
        %v1883 = vld [vmem:[%s1876 + $0x30] sm:$0xff]
        %v1884 = vld [vmem:[%s1876 + $0x38] sm:$0xff]
        %1887 = vrot.lane.b32.xlu0 %v1874, 96
        %v1888 = vpop.permute.xlu0 %1887
        %1889 = vrot.lane.b32.xlu0 %v1875, 96
        %v1890 = vpop.permute.xlu0 %1889
        %v1891 = vsel %vm772, %v1888, 0
        %v1893 = vsel %vm772, %v1890, 0
        %1895 = vmatprep.subr.mxu0 0.0
        %1896 = vmatpush1.msra.mxu0 %v1877
        %1897 = vmatprep.subr.mxu0 0.0
        %1898 = vmatpush1.msra.mxu0 %v1878
        %1899 = vmatprep.subr.mxu0 0.0
        %1900 = vmatpush1.msra.mxu0 %v1879
        %1901 = vmatprep.subr.mxu0 0.0
        %1902 = vmatpush1.msra.mxu0 %v1880
        %1903 = vmatprep.subr.mxu0 0.0
        %1904 = vmatpush1.msra.mxu0 %v1881
        %1905 = vmatprep.subr.mxu0 0.0
        %1906 = vmatpush1.msra.mxu0 %v1882
        %1907 = vmatprep.subr.mxu0 0.0
        %1908 = vmatpush1.msra.mxu0 %v1883
        %1909 = vmatprep.subr.mxu0 0.0
        %1910 = vmatpush1.msra.mxu0 %v1884
        %1911 = vmatprep.subr.mxu0 0.0
        %1912 = vmatpush1.msra.mxu0 0.0
        %1913 = vmatprep.subr.mxu0 0.0
        %1914 = vmatpush1.msra.mxu0 0.0
        %1915 = vmatprep.subr.mxu0 0.0
        %1916 = vmatpush1.msra.mxu0 0.0
        %1917 = vmatprep.subr.mxu0 0.0
        %1918 = vmatpush1.msra.mxu0 0.0
        %1919 = vmatprep.subr.mxu0 0.0
        %1920 = vmatpush1.msra.mxu0 0.0
        %1921 = vmatprep.subr.mxu0 0.0
        %1922 = vmatpush1.msra.mxu0 0.0
        %1923 = vmatprep.subr.mxu0 0.0
        %1924 = vmatpush1.msra.mxu0 0.0
        %1925 = vmatprep.subr.mxu0 0.0
        %1926 = vmatpush1.msra.mxu0 0.0
        %1927 = vmatprep.subr.mxu0 0.0
        %1928 = vmatpush1.msra.mxu0 0.0
        %1929 = vmatprep.subr.mxu0 0.0
        %1930 = vmatpush1.msra.mxu0 0.0
        %1931 = vmatprep.subr.mxu0 0.0
        %1932 = vmatpush1.msra.mxu0 0.0
        %1933 = vmatprep.subr.mxu0 0.0
        %1934 = vmatpush1.msra.mxu0 0.0
        %1935 = vmatprep.subr.mxu0 0.0
        %1936 = vmatpush1.msra.mxu0 0.0
        %1937 = vmatprep.subr.mxu0 0.0
        %1938 = vmatpush1.msra.mxu0 0.0
        %1939 = vmatprep.subr.mxu0 0.0
        %1940 = vmatpush1.msra.mxu0 0.0
        %1941 = vmatprep.subr.mxu0 0.0
        %1942 = vmatpush1.msra.mxu0 0.0
        %1943 = vmatprep.subr.mxu0 0.0
        %1944 = vmatpush1.msra.mxu0 0.0
        %1945 = vmatprep.subr.mxu0 0.0
        %1946 = vmatpush1.msra.mxu0 0.0
        %1947 = vmatprep.subr.mxu0 0.0
        %1948 = vmatpush1.msra.mxu0 0.0
        %1949 = vmatprep.subr.mxu0 0.0
        %1950 = vmatpush1.msra.mxu0 0.0
        %1951 = vmatprep.subr.mxu0 0.0
        %1952 = vmatpush1.msra.mxu0 0.0
        %1953 = vmatprep.subr.mxu0 0.0
        %1954 = vmatpush1.msra.mxu0 0.0
        %1955 = vmatprep.subr.mxu0 0.0
        %1956 = vmatpush1.msra.mxu0 0.0
        %1957 = vmatprep.subr.mxu0 0.0
        %1958 = vmatpush1.msra.mxu0 0.0
        %1959 = vmatprep.mubr.f32.mxu0 0.0
        %1960 = vmatmul.mubr.f32.gmra.mrb[0].mxu0 %v1891
        %v1961 = vpop.f32.mrb[0].mxu0
        %v1962 = vadd.f32 0.0, %v1961
        %v1963 = vpop.f32.mrb[0].mxu0
        %1964 = vmatprep.mubr.f32.mxu0 0.0
        %1965 = vmatmul.mubr.f32.gmra.mrb[0].mxu0 %v1893
        %v1966 = vpop.f32.mrb[0].mxu0
        %v1967 = vadd.f32 0.0, %v1966
        %v1968 = vpop.f32.mrb[0].mxu0
        %1969 = vdwg.mxu0
        %v1970 = vsel %vm772, %v1962, 0.0
        %v1971 = vsel %vm772, %v1967, 0.0
        %v1972 = vadd.f32 %v1970, %v1971
        %v1973 = vrot.slane %v1972, 4
        %v1974 = vadd.f32 %v1972, %v1973
        %v1975 = vrot.slane %v1974, 2
        %v1976 = vadd.f32 %v1974, %v1975
        %v1977 = vrot.slane %v1976, 1
        %v1978 = vadd.f32 %v1976, %v1977
        %v1979 = vmul.f32 %v1962, %v1962
        %v1980 = vmul.f32 %v1967, %v1967
        %v1981 = vsel %vm772, %v1979, 0.0
        %v1982 = vsel %vm772, %v1980, 0.0
        %v1983 = vadd.f32 %v1981, %v1982
        %v1984 = vrot.slane %v1983, 4
        %v1985 = vadd.f32 %v1983, %v1984
        %v1986 = vrot.slane %v1985, 2
        %v1987 = vadd.f32 %v1985, %v1986
        %v1988 = vrot.slane %v1987, 1
        %v1989 = vadd.f32 %v1987, %v1988
        %v1990 = vsel %vm463, %v1978, %v1989
        %1991 = vrot.lane.b32.xlu0 %v1990, 64
        %v1992 = vpop.permute.xlu0 %1991
        %v1993 = vsel %vm469, %v1992, %v1990
        %1994 = vrot.lane.b32.xlu0 %v1993, 64
        %v1995 = vpop.permute.xlu0 %1994
        %v1996 = vsel %vm469, %v1995, %v1990
        %1998 = vrot.lane.b32.xlu0 %v1996, 72
        %v1999 = vpop.permute.xlu0 %1998
        %v2001 = vadd.f32 %v1990, %v1999
        %2002 = vrot.lane.b32.xlu0 %v2001, 64
        %v2003 = vpop.permute.xlu0 %2002
        %v2004 = vsel %vm469, %v2003, %v2001
        %2005 = vrot.lane.b32.xlu0 %v2004, 64
        %v2006 = vpop.permute.xlu0 %2005
        %v2007 = vsel %vm469, %v2006, %v2001
        %2009 = vrot.lane.b32.xlu0 %v2007, 80
        %v2010 = vpop.permute.xlu0 %2009
        %v2012 = vadd.f32 %v2001, %v2010
        %2013 = vrot.lane.b32.xlu0 %v2012, 64
        %v2014 = vpop.permute.xlu0 %2013
        %v2015 = vsel %vm469, %v2014, %v2012
        %2016 = vrot.lane.b32.xlu0 %v2015, 64
        %v2017 = vpop.permute.xlu0 %2016
        %v2018 = vsel %vm469, %v2017, %v2012
        %2020 = vrot.lane.b32.xlu0 %v2018, 96
        %v2021 = vpop.permute.xlu0 %2020
        %v2023 = vadd.f32 %v2012, %v2021
        %v2024 = vmul.f32 %v2023, 0.0078125
        %v2025 = vmul.f32 %v2024, %v2024
        %v2027 = vrot.slane %v2025, 7
        %v2029 = vsub.f32 %v2024, %v2027
        %v2030 = vmax.f32 %v2029, 0.0
        %v2031 = vlaneseq
        %v2032 = vshrl.u32 %v2031, 7
        %v2033 = vsub.s32 0, %v2032
        %v2034 = vrot.slane %v2024, %v2033
        %v2035 = vsub.f32 %v1962, %v2034
        %v2036 = vsub.f32 %v1967, %v2034
        %v2037 = vadd.f32 %v2030, 1e-05
        %v2038 = vrsqrt.pop %v2037
        %v2039 = vlaneseq
        %v2040 = vshrl.u32 %v2039, 7
        %v2041 = vsub.s32 1, %v2040
        %v2042 = vrot.slane %v2038, %v2041
        %v2043 = vmul.f32 %v2035, %v2042
        %v2044 = vmul.f32 %v2036, %v2042
        %v2045 = vmax.f32 %v2043, 0.0
        %v2046 = vmax.f32 %v2044, 0.0
        %2049 = vrot.lane.b32.xlu0 %v1639, 32
        %v2050 = vpop.permute.xlu0 %2049
        %2051 = vrot.lane.b32.xlu0 %v1640, 32
        %v2052 = vpop.permute.xlu0 %2051
        %2055 = vst.msk [vmem:[#allocation2 + $0x4] sm:$0xff] %vm343, %v2050
        %2056 = vst.msk [vmem:[#allocation2 + $0x14] sm:$0xff] %vm343, %v2052
        %s2057 = scalar_lea.vmem %s297, 12
        %v2058 = vld [vmem:[%s2057] sm:$0x7]
        %v2059 = vld [vmem:[%s2057 + $0x4] sm:$0x7]
        %v2060 = vld [vmem:[%s2057 + $0x8] sm:$0x7]
        %v2061 = vld [vmem:[#allocation2 + $0x3] sm:$0xff]
        %v2062 = vld [vmem:[#allocation2 + $0x13] sm:$0xff]
        %2063 = vrot.lane.b32.xlu0 %v2061, 8
        %v2064 = vpop.permute.xlu0 %2063
        %2065 = vrot.lane.b32.xlu0 %v2062, 8
        %v2066 = vpop.permute.xlu0 %2065
        %v2067 = vlaneseq
        %v2068 = vshrl.u32 %v2067, 7
        %v2069 = vsub.s32 0, %v2068
        %v2070 = vrot.slane %v2058, %v2069
        %v2071 = vmul.f32 %v2064, %v2070
        %v2072 = vmul.f32 %v2066, %v2070
        %v2073 = vlaneseq
        %v2074 = vshrl.u32 %v2073, 7
        %v2075 = vsub.s32 1, %v2074
        %v2076 = vrot.slane %v2058, %v2075
        %v2077 = vmul.f32 %v2061, %v2076
        %v2078 = vmul.f32 %v2062, %v2076
        %v2079 = vadd.f32 %v2071, %v2077
        %v2080 = vadd.f32 %v2072, %v2078
        %2081 = vrot.lane.b32.xlu0 %v2061, 120
        %v2082 = vpop.permute.xlu0 %2081
        %2083 = vrot.lane.b32.xlu0 %v2062, 120
        %v2084 = vpop.permute.xlu0 %2083
        %v2085 = vlaneseq
        %v2086 = vshrl.u32 %v2085, 7
        %v2087 = vsub.s32 2, %v2086
        %v2088 = vrot.slane %v2058, %v2087
        %v2089 = vmul.f32 %v2082, %v2088
        %v2090 = vmul.f32 %v2084, %v2088
        %v2091 = vadd.f32 %v2079, %v2089
        %v2092 = vadd.f32 %v2080, %v2090
        %v2093 = vld [vmem:[#allocation2 + $0x4] sm:$0xff]
        %v2094 = vld [vmem:[#allocation2 + $0x14] sm:$0xff]
        %2095 = vrot.lane.b32.xlu0 %v2093, 8
        %v2096 = vpop.permute.xlu0 %2095
        %2097 = vrot.lane.b32.xlu0 %v2094, 8
        %v2098 = vpop.permute.xlu0 %2097
        %v2099 = vlaneseq
        %v2100 = vshrl.u32 %v2099, 7
        %v2101 = vsub.s32 0, %v2100
        %v2102 = vrot.slane %v2059, %v2101
        %v2103 = vmul.f32 %v2096, %v2102
        %v2104 = vmul.f32 %v2098, %v2102
        %v2105 = vadd.f32 %v2091, %v2103
        %v2106 = vadd.f32 %v2092, %v2104
        %v2107 = vlaneseq
        %v2108 = vshrl.u32 %v2107, 7
        %v2109 = vsub.s32 1, %v2108
        %v2110 = vrot.slane %v2059, %v2109
        %v2111 = vmul.f32 %v2093, %v2110
        %v2112 = vmul.f32 %v2094, %v2110
        %v2113 = vadd.f32 %v2105, %v2111
        %v2114 = vadd.f32 %v2106, %v2112
        %2115 = vrot.lane.b32.xlu0 %v2093, 120
        %v2116 = vpop.permute.xlu0 %2115
        %2117 = vrot.lane.b32.xlu0 %v2094, 120
        %v2118 = vpop.permute.xlu0 %2117
        %v2119 = vlaneseq
        %v2120 = vshrl.u32 %v2119, 7
        %v2121 = vsub.s32 2, %v2120
        %v2122 = vrot.slane %v2059, %v2121
        %v2123 = vmul.f32 %v2116, %v2122
        %v2124 = vmul.f32 %v2118, %v2122
        %v2125 = vadd.f32 %v2113, %v2123
        %v2126 = vadd.f32 %v2114, %v2124
        %v2127 = vld [vmem:[#allocation2 + $0x5] sm:$0xff]
        %v2128 = vld [vmem:[#allocation2 + $0x15] sm:$0xff]
        %2129 = vrot.lane.b32.xlu0 %v2127, 8
        %v2130 = vpop.permute.xlu0 %2129
        %2131 = vrot.lane.b32.xlu0 %v2128, 8
        %v2132 = vpop.permute.xlu0 %2131
        %v2133 = vlaneseq
        %v2134 = vshrl.u32 %v2133, 7
        %v2135 = vsub.s32 0, %v2134
        %v2136 = vrot.slane %v2060, %v2135
        %v2137 = vmul.f32 %v2130, %v2136
        %v2138 = vmul.f32 %v2132, %v2136
        %v2139 = vadd.f32 %v2125, %v2137
        %v2140 = vadd.f32 %v2126, %v2138
        %v2141 = vlaneseq
        %v2142 = vshrl.u32 %v2141, 7
        %v2143 = vsub.s32 1, %v2142
        %v2144 = vrot.slane %v2060, %v2143
        %v2145 = vmul.f32 %v2127, %v2144
        %v2146 = vmul.f32 %v2128, %v2144
        %v2147 = vadd.f32 %v2139, %v2145
        %v2148 = vadd.f32 %v2140, %v2146
        %2149 = vrot.lane.b32.xlu0 %v2127, 120
        %v2150 = vpop.permute.xlu0 %2149
        %2151 = vrot.lane.b32.xlu0 %v2128, 120
        %v2152 = vpop.permute.xlu0 %2151
        %v2153 = vlaneseq
        %v2154 = vshrl.u32 %v2153, 7
        %v2155 = vsub.s32 2, %v2154
        %v2156 = vrot.slane %v2060, %v2155
        %v2157 = vmul.f32 %v2150, %v2156
        %v2158 = vmul.f32 %v2152, %v2156
        %v2159 = vadd.f32 %v2147, %v2157
        %v2160 = vadd.f32 %v2148, %v2158
        %s2161 = scalar_lea.vmem %s251, 64 [#allocation6]
        %v2162 = vld [vmem:[%s2161] sm:$0xff]
        %v2163 = vld [vmem:[%s2161 + $0x8] sm:$0xff]
        %v2164 = vld [vmem:[%s2161 + $0x10] sm:$0xff]
        %v2165 = vld [vmem:[%s2161 + $0x18] sm:$0xff]
        %v2166 = vld [vmem:[%s2161 + $0x20] sm:$0xff]
        %v2167 = vld [vmem:[%s2161 + $0x28] sm:$0xff]
        %v2168 = vld [vmem:[%s2161 + $0x30] sm:$0xff]
        %v2169 = vld [vmem:[%s2161 + $0x38] sm:$0xff]
        %2172 = vrot.lane.b32.xlu0 %v2159, 96
        %v2173 = vpop.permute.xlu0 %2172
        %2174 = vrot.lane.b32.xlu0 %v2160, 96
        %v2175 = vpop.permute.xlu0 %2174
        %v2176 = vsel %vm772, %v2173, 0
        %v2178 = vsel %vm772, %v2175, 0
        %2180 = vmatprep.subr.mxu0 0.0
        %2181 = vmatpush1.msra.mxu0 %v2162
        %2182 = vmatprep.subr.mxu0 0.0
        %2183 = vmatpush1.msra.mxu0 %v2163
        %2184 = vmatprep.subr.mxu0 0.0
        %2185 = vmatpush1.msra.mxu0 %v2164
        %2186 = vmatprep.subr.mxu0 0.0
        %2187 = vmatpush1.msra.mxu0 %v2165
        %2188 = vmatprep.subr.mxu0 0.0
        %2189 = vmatpush1.msra.mxu0 %v2166
        %2190 = vmatprep.subr.mxu0 0.0
        %2191 = vmatpush1.msra.mxu0 %v2167
        %2192 = vmatprep.subr.mxu0 0.0
        %2193 = vmatpush1.msra.mxu0 %v2168
        %2194 = vmatprep.subr.mxu0 0.0
        %2195 = vmatpush1.msra.mxu0 %v2169
        %2196 = vmatprep.subr.mxu0 0.0
        %2197 = vmatpush1.msra.mxu0 0.0
        %2198 = vmatprep.subr.mxu0 0.0
        %2199 = vmatpush1.msra.mxu0 0.0
        %2200 = vmatprep.subr.mxu0 0.0
        %2201 = vmatpush1.msra.mxu0 0.0
        %2202 = vmatprep.subr.mxu0 0.0
        %2203 = vmatpush1.msra.mxu0 0.0
        %2204 = vmatprep.subr.mxu0 0.0
        %2205 = vmatpush1.msra.mxu0 0.0
        %2206 = vmatprep.subr.mxu0 0.0
        %2207 = vmatpush1.msra.mxu0 0.0
        %2208 = vmatprep.subr.mxu0 0.0
        %2209 = vmatpush1.msra.mxu0 0.0
        %2210 = vmatprep.subr.mxu0 0.0
        %2211 = vmatpush1.msra.mxu0 0.0
        %2212 = vmatprep.subr.mxu0 0.0
        %2213 = vmatpush1.msra.mxu0 0.0
        %2214 = vmatprep.subr.mxu0 0.0
        %2215 = vmatpush1.msra.mxu0 0.0
        %2216 = vmatprep.subr.mxu0 0.0
        %2217 = vmatpush1.msra.mxu0 0.0
        %2218 = vmatprep.subr.mxu0 0.0
        %2219 = vmatpush1.msra.mxu0 0.0
        %2220 = vmatprep.subr.mxu0 0.0
        %2221 = vmatpush1.msra.mxu0 0.0
        %2222 = vmatprep.subr.mxu0 0.0
        %2223 = vmatpush1.msra.mxu0 0.0
        %2224 = vmatprep.subr.mxu0 0.0
        %2225 = vmatpush1.msra.mxu0 0.0
        %2226 = vmatprep.subr.mxu0 0.0
        %2227 = vmatpush1.msra.mxu0 0.0
        %2228 = vmatprep.subr.mxu0 0.0
        %2229 = vmatpush1.msra.mxu0 0.0
        %2230 = vmatprep.subr.mxu0 0.0
        %2231 = vmatpush1.msra.mxu0 0.0
        %2232 = vmatprep.subr.mxu0 0.0
        %2233 = vmatpush1.msra.mxu0 0.0
        %2234 = vmatprep.subr.mxu0 0.0
        %2235 = vmatpush1.msra.mxu0 0.0
        %2236 = vmatprep.subr.mxu0 0.0
        %2237 = vmatpush1.msra.mxu0 0.0
        %2238 = vmatprep.subr.mxu0 0.0
        %2239 = vmatpush1.msra.mxu0 0.0
        %2240 = vmatprep.subr.mxu0 0.0
        %2241 = vmatpush1.msra.mxu0 0.0
        %2242 = vmatprep.subr.mxu0 0.0
        %2243 = vmatpush1.msra.mxu0 0.0
        %2244 = vmatprep.mubr.f32.mxu0 0.0
        %2245 = vmatmul.mubr.f32.gmra.mrb[0].mxu0 %v2176
        %v2246 = vpop.f32.mrb[0].mxu0
        %v2247 = vadd.f32 0.0, %v2246
        %v2248 = vpop.f32.mrb[0].mxu0
        %2249 = vmatprep.mubr.f32.mxu0 0.0
        %2250 = vmatmul.mubr.f32.gmra.mrb[0].mxu0 %v2178
        %v2251 = vpop.f32.mrb[0].mxu0
        %v2252 = vadd.f32 0.0, %v2251
        %v2253 = vpop.f32.mrb[0].mxu0
        %2254 = vdwg.mxu0
        %v2255 = vsel %vm772, %v2247, 0.0
        %v2256 = vsel %vm772, %v2252, 0.0
        %v2257 = vadd.f32 %v2255, %v2256
        %v2258 = vrot.slane %v2257, 4
        %v2259 = vadd.f32 %v2257, %v2258
        %v2260 = vrot.slane %v2259, 2
        %v2261 = vadd.f32 %v2259, %v2260
        %v2262 = vrot.slane %v2261, 1
        %v2263 = vadd.f32 %v2261, %v2262
        %v2264 = vmul.f32 %v2247, %v2247
        %v2265 = vmul.f32 %v2252, %v2252
        %v2266 = vsel %vm772, %v2264, 0.0
        %v2267 = vsel %vm772, %v2265, 0.0
        %v2268 = vadd.f32 %v2266, %v2267
        %v2269 = vrot.slane %v2268, 4
        %v2270 = vadd.f32 %v2268, %v2269
        %v2271 = vrot.slane %v2270, 2
        %v2272 = vadd.f32 %v2270, %v2271
        %v2273 = vrot.slane %v2272, 1
        %v2274 = vadd.f32 %v2272, %v2273
        %v2275 = vsel %vm463, %v2263, %v2274
        %2276 = vrot.lane.b32.xlu0 %v2275, 64
        %v2277 = vpop.permute.xlu0 %2276
        %v2278 = vsel %vm469, %v2277, %v2275
        %2279 = vrot.lane.b32.xlu0 %v2278, 64
        %v2280 = vpop.permute.xlu0 %2279
        %v2281 = vsel %vm469, %v2280, %v2275
        %2283 = vrot.lane.b32.xlu0 %v2281, 72
        %v2284 = vpop.permute.xlu0 %2283
        %v2286 = vadd.f32 %v2275, %v2284
        %2287 = vrot.lane.b32.xlu0 %v2286, 64
        %v2288 = vpop.permute.xlu0 %2287
        %v2289 = vsel %vm469, %v2288, %v2286
        %2290 = vrot.lane.b32.xlu0 %v2289, 64
        %v2291 = vpop.permute.xlu0 %2290
        %v2292 = vsel %vm469, %v2291, %v2286
        %2294 = vrot.lane.b32.xlu0 %v2292, 80
        %v2295 = vpop.permute.xlu0 %2294
        %v2297 = vadd.f32 %v2286, %v2295
        %2298 = vrot.lane.b32.xlu0 %v2297, 64
        %v2299 = vpop.permute.xlu0 %2298
        %v2300 = vsel %vm469, %v2299, %v2297
        %2301 = vrot.lane.b32.xlu0 %v2300, 64
        %v2302 = vpop.permute.xlu0 %2301
        %v2303 = vsel %vm469, %v2302, %v2297
        %2305 = vrot.lane.b32.xlu0 %v2303, 96
        %v2306 = vpop.permute.xlu0 %2305
        %v2308 = vadd.f32 %v2297, %v2306
        %v2309 = vmul.f32 %v2308, 0.0078125
        %v2310 = vmul.f32 %v2309, %v2309
        %v2312 = vrot.slane %v2310, 7
        %v2314 = vsub.f32 %v2309, %v2312
        %v2315 = vmax.f32 %v2314, 0.0
        %v2316 = vlaneseq
        %v2317 = vshrl.u32 %v2316, 7
        %v2318 = vsub.s32 0, %v2317
        %v2319 = vrot.slane %v2309, %v2318
        %v2320 = vsub.f32 %v2247, %v2319
        %v2321 = vsub.f32 %v2252, %v2319
        %v2322 = vadd.f32 %v2315, 1e-05
        %v2323 = vrsqrt.pop %v2322
        %v2324 = vlaneseq
        %v2325 = vshrl.u32 %v2324, 7
        %v2326 = vsub.s32 1, %v2325
        %v2327 = vrot.slane %v2323, %v2326
        %v2328 = vmul.f32 %v2320, %v2327
        %v2329 = vmul.f32 %v2321, %v2327
        %v2330 = vstv %s322
        %v2331 = vmul.f32 %v2330, %v2328
        %v2332 = vmul.f32 %v2330, %v2329
        %v2333 = vadd.f32 %v1368, %v2331
        %v2334 = vadd.f32 %v1369, %v2332
        %2337 = vrot.lane.b32.xlu0 %v2045, 32
        %v2338 = vpop.permute.xlu0 %2337
        %2339 = vrot.lane.b32.xlu0 %v2046, 32
        %v2340 = vpop.permute.xlu0 %2339
        %2343 = vst.msk [vmem:[#allocation2 + $0x4] sm:$0xff] %vm343, %v2338
        %2344 = vst.msk [vmem:[#allocation2 + $0x14] sm:$0xff] %vm343, %v2340
        %s2345 = scalar_lea.vmem %s302, 40
        %v2346 = vld [vmem:[%s2345] sm:$0x1f]
        %v2347 = vld [vmem:[%s2345 + $0x8] sm:$0x1f]
        %v2348 = vld [vmem:[%s2345 + $0x10] sm:$0x1f]
        %v2349 = vld [vmem:[%s2345 + $0x18] sm:$0x1f]
        %v2350 = vld [vmem:[%s2345 + $0x20] sm:$0x1f]
        %v2351 = vld [vmem:[#allocation2 + $0x2] sm:$0xff]
        %v2352 = vld [vmem:[#allocation2 + $0x12] sm:$0xff]
        %2353 = vrot.lane.b32.xlu0 %v2351, 16
        %v2354 = vpop.permute.xlu0 %2353
        %2355 = vrot.lane.b32.xlu0 %v2352, 16
        %v2356 = vpop.permute.xlu0 %2355
        %v2357 = vlaneseq
        %v2358 = vshrl.u32 %v2357, 7
        %v2359 = vsub.s32 0, %v2358
        %v2360 = vrot.slane %v2346, %v2359
        %v2361 = vmul.f32 %v2354, %v2360
        %v2362 = vmul.f32 %v2356, %v2360
        %2363 = vrot.lane.b32.xlu0 %v2351, 8
        %v2364 = vpop.permute.xlu0 %2363
        %2365 = vrot.lane.b32.xlu0 %v2352, 8
        %v2366 = vpop.permute.xlu0 %2365
        %v2367 = vlaneseq
        %v2368 = vshrl.u32 %v2367, 7
        %v2369 = vsub.s32 1, %v2368
        %v2370 = vrot.slane %v2346, %v2369
        %v2371 = vmul.f32 %v2364, %v2370
        %v2372 = vmul.f32 %v2366, %v2370
        %v2373 = vadd.f32 %v2361, %v2371
        %v2374 = vadd.f32 %v2362, %v2372
        %v2375 = vlaneseq
        %v2376 = vshrl.u32 %v2375, 7
        %v2377 = vsub.s32 2, %v2376
        %v2378 = vrot.slane %v2346, %v2377
        %v2379 = vmul.f32 %v2351, %v2378
        %v2380 = vmul.f32 %v2352, %v2378
        %v2381 = vadd.f32 %v2373, %v2379
        %v2382 = vadd.f32 %v2374, %v2380
        %2383 = vrot.lane.b32.xlu0 %v2351, 120
        %v2384 = vpop.permute.xlu0 %2383
        %2385 = vrot.lane.b32.xlu0 %v2352, 120
        %v2386 = vpop.permute.xlu0 %2385
        %v2387 = vlaneseq
        %v2388 = vshrl.u32 %v2387, 7
        %v2389 = vsub.s32 3, %v2388
        %v2390 = vrot.slane %v2346, %v2389
        %v2391 = vmul.f32 %v2384, %v2390
        %v2392 = vmul.f32 %v2386, %v2390
        %v2393 = vadd.f32 %v2381, %v2391
        %v2394 = vadd.f32 %v2382, %v2392
        %2395 = vrot.lane.b32.xlu0 %v2351, 112
        %v2396 = vpop.permute.xlu0 %2395
        %2397 = vrot.lane.b32.xlu0 %v2352, 112
        %v2398 = vpop.permute.xlu0 %2397
        %v2399 = vlaneseq
        %v2400 = vshrl.u32 %v2399, 7
        %v2401 = vsub.s32 4, %v2400
        %v2402 = vrot.slane %v2346, %v2401
        %v2403 = vmul.f32 %v2396, %v2402
        %v2404 = vmul.f32 %v2398, %v2402
        %v2405 = vadd.f32 %v2393, %v2403
        %v2406 = vadd.f32 %v2394, %v2404
        %v2407 = vld [vmem:[#allocation2 + $0x3] sm:$0xff]
        %v2408 = vld [vmem:[#allocation2 + $0x13] sm:$0xff]
        %2409 = vrot.lane.b32.xlu0 %v2407, 16
        %v2410 = vpop.permute.xlu0 %2409
        %2411 = vrot.lane.b32.xlu0 %v2408, 16
        %v2412 = vpop.permute.xlu0 %2411
        %v2413 = vlaneseq
        %v2414 = vshrl.u32 %v2413, 7
        %v2415 = vsub.s32 0, %v2414
        %v2416 = vrot.slane %v2347, %v2415
        %v2417 = vmul.f32 %v2410, %v2416
        %v2418 = vmul.f32 %v2412, %v2416
        %v2419 = vadd.f32 %v2405, %v2417
        %v2420 = vadd.f32 %v2406, %v2418
        %2421 = vrot.lane.b32.xlu0 %v2407, 8
        %v2422 = vpop.permute.xlu0 %2421
        %2423 = vrot.lane.b32.xlu0 %v2408, 8
        %v2424 = vpop.permute.xlu0 %2423
        %v2425 = vlaneseq
        %v2426 = vshrl.u32 %v2425, 7
        %v2427 = vsub.s32 1, %v2426
        %v2428 = vrot.slane %v2347, %v2427
        %v2429 = vmul.f32 %v2422, %v2428
        %v2430 = vmul.f32 %v2424, %v2428
        %v2431 = vadd.f32 %v2419, %v2429
        %v2432 = vadd.f32 %v2420, %v2430
        %v2433 = vlaneseq
        %v2434 = vshrl.u32 %v2433, 7
        %v2435 = vsub.s32 2, %v2434
        %v2436 = vrot.slane %v2347, %v2435
        %v2437 = vmul.f32 %v2407, %v2436
        %v2438 = vmul.f32 %v2408, %v2436
        %v2439 = vadd.f32 %v2431, %v2437
        %v2440 = vadd.f32 %v2432, %v2438
        %2441 = vrot.lane.b32.xlu0 %v2407, 120
        %v2442 = vpop.permute.xlu0 %2441
        %2443 = vrot.lane.b32.xlu0 %v2408, 120
        %v2444 = vpop.permute.xlu0 %2443
        %v2445 = vlaneseq
        %v2446 = vshrl.u32 %v2445, 7
        %v2447 = vsub.s32 3, %v2446
        %v2448 = vrot.slane %v2347, %v2447
        %v2449 = vmul.f32 %v2442, %v2448
        %v2450 = vmul.f32 %v2444, %v2448
        %v2451 = vadd.f32 %v2439, %v2449
        %v2452 = vadd.f32 %v2440, %v2450
        %2453 = vrot.lane.b32.xlu0 %v2407, 112
        %v2454 = vpop.permute.xlu0 %2453
        %2455 = vrot.lane.b32.xlu0 %v2408, 112
        %v2456 = vpop.permute.xlu0 %2455
        %v2457 = vlaneseq
        %v2458 = vshrl.u32 %v2457, 7
        %v2459 = vsub.s32 4, %v2458
        %v2460 = vrot.slane %v2347, %v2459
        %v2461 = vmul.f32 %v2454, %v2460
        %v2462 = vmul.f32 %v2456, %v2460
        %v2463 = vadd.f32 %v2451, %v2461
        %v2464 = vadd.f32 %v2452, %v2462
        %v2465 = vld [vmem:[#allocation2 + $0x4] sm:$0xff]
        %v2466 = vld [vmem:[#allocation2 + $0x14] sm:$0xff]
        %2467 = vrot.lane.b32.xlu0 %v2465, 16
        %v2468 = vpop.permute.xlu0 %2467
        %2469 = vrot.lane.b32.xlu0 %v2466, 16
        %v2470 = vpop.permute.xlu0 %2469
        %v2471 = vlaneseq
        %v2472 = vshrl.u32 %v2471, 7
        %v2473 = vsub.s32 0, %v2472
        %v2474 = vrot.slane %v2348, %v2473
        %v2475 = vmul.f32 %v2468, %v2474
        %v2476 = vmul.f32 %v2470, %v2474
        %v2477 = vadd.f32 %v2463, %v2475
        %v2478 = vadd.f32 %v2464, %v2476
        %2479 = vrot.lane.b32.xlu0 %v2465, 8
        %v2480 = vpop.permute.xlu0 %2479
        %2481 = vrot.lane.b32.xlu0 %v2466, 8
        %v2482 = vpop.permute.xlu0 %2481
        %v2483 = vlaneseq
        %v2484 = vshrl.u32 %v2483, 7
        %v2485 = vsub.s32 1, %v2484
        %v2486 = vrot.slane %v2348, %v2485
        %v2487 = vmul.f32 %v2480, %v2486
        %v2488 = vmul.f32 %v2482, %v2486
        %v2489 = vadd.f32 %v2477, %v2487
        %v2490 = vadd.f32 %v2478, %v2488
        %v2491 = vlaneseq
        %v2492 = vshrl.u32 %v2491, 7
        %v2493 = vsub.s32 2, %v2492
        %v2494 = vrot.slane %v2348, %v2493
        %v2495 = vmul.f32 %v2465, %v2494
        %v2496 = vmul.f32 %v2466, %v2494
        %v2497 = vadd.f32 %v2489, %v2495
        %v2498 = vadd.f32 %v2490, %v2496
        %2499 = vrot.lane.b32.xlu0 %v2465, 120
        %v2500 = vpop.permute.xlu0 %2499
        %2501 = vrot.lane.b32.xlu0 %v2466, 120
        %v2502 = vpop.permute.xlu0 %2501
        %v2503 = vlaneseq
        %v2504 = vshrl.u32 %v2503, 7
        %v2505 = vsub.s32 3, %v2504
        %v2506 = vrot.slane %v2348, %v2505
        %v2507 = vmul.f32 %v2500, %v2506
        %v2508 = vmul.f32 %v2502, %v2506
        %v2509 = vadd.f32 %v2497, %v2507
        %v2510 = vadd.f32 %v2498, %v2508
        %2511 = vrot.lane.b32.xlu0 %v2465, 112
        %v2512 = vpop.permute.xlu0 %2511
        %2513 = vrot.lane.b32.xlu0 %v2466, 112
        %v2514 = vpop.permute.xlu0 %2513
        %v2515 = vlaneseq
        %v2516 = vshrl.u32 %v2515, 7
        %v2517 = vsub.s32 4, %v2516
        %v2518 = vrot.slane %v2348, %v2517
        %v2519 = vmul.f32 %v2512, %v2518
        %v2520 = vmul.f32 %v2514, %v2518
        %v2521 = vadd.f32 %v2509, %v2519
        %v2522 = vadd.f32 %v2510, %v2520
        %v2523 = vld [vmem:[#allocation2 + $0x5] sm:$0xff]
        %v2524 = vld [vmem:[#allocation2 + $0x15] sm:$0xff]
        %2525 = vrot.lane.b32.xlu0 %v2523, 16
        %v2526 = vpop.permute.xlu0 %2525
        %2527 = vrot.lane.b32.xlu0 %v2524, 16
        %v2528 = vpop.permute.xlu0 %2527
        %v2529 = vlaneseq
        %v2530 = vshrl.u32 %v2529, 7
        %v2531 = vsub.s32 0, %v2530
        %v2532 = vrot.slane %v2349, %v2531
        %v2533 = vmul.f32 %v2526, %v2532
        %v2534 = vmul.f32 %v2528, %v2532
        %v2535 = vadd.f32 %v2521, %v2533
        %v2536 = vadd.f32 %v2522, %v2534
        %2537 = vrot.lane.b32.xlu0 %v2523, 8
        %v2538 = vpop.permute.xlu0 %2537
        %2539 = vrot.lane.b32.xlu0 %v2524, 8
        %v2540 = vpop.permute.xlu0 %2539
        %v2541 = vlaneseq
        %v2542 = vshrl.u32 %v2541, 7
        %v2543 = vsub.s32 1, %v2542
        %v2544 = vrot.slane %v2349, %v2543
        %v2545 = vmul.f32 %v2538, %v2544
        %v2546 = vmul.f32 %v2540, %v2544
        %v2547 = vadd.f32 %v2535, %v2545
        %v2548 = vadd.f32 %v2536, %v2546
        %v2549 = vlaneseq
        %v2550 = vshrl.u32 %v2549, 7
        %v2551 = vsub.s32 2, %v2550
        %v2552 = vrot.slane %v2349, %v2551
        %v2553 = vmul.f32 %v2523, %v2552
        %v2554 = vmul.f32 %v2524, %v2552
        %v2555 = vadd.f32 %v2547, %v2553
        %v2556 = vadd.f32 %v2548, %v2554
        %2557 = vrot.lane.b32.xlu0 %v2523, 120
        %v2558 = vpop.permute.xlu0 %2557
        %2559 = vrot.lane.b32.xlu0 %v2524, 120
        %v2560 = vpop.permute.xlu0 %2559
        %v2561 = vlaneseq
        %v2562 = vshrl.u32 %v2561, 7
        %v2563 = vsub.s32 3, %v2562
        %v2564 = vrot.slane %v2349, %v2563
        %v2565 = vmul.f32 %v2558, %v2564
        %v2566 = vmul.f32 %v2560, %v2564
        %v2567 = vadd.f32 %v2555, %v2565
        %v2568 = vadd.f32 %v2556, %v2566
        %2569 = vrot.lane.b32.xlu0 %v2523, 112
        %v2570 = vpop.permute.xlu0 %2569
        %2571 = vrot.lane.b32.xlu0 %v2524, 112
        %v2572 = vpop.permute.xlu0 %2571
        %v2573 = vlaneseq
        %v2574 = vshrl.u32 %v2573, 7
        %v2575 = vsub.s32 4, %v2574
        %v2576 = vrot.slane %v2349, %v2575
        %v2577 = vmul.f32 %v2570, %v2576
        %v2578 = vmul.f32 %v2572, %v2576
        %v2579 = vadd.f32 %v2567, %v2577
        %v2580 = vadd.f32 %v2568, %v2578
        %v2581 = vld [vmem:[#allocation2 + $0x6] sm:$0xff]
        %v2582 = vld [vmem:[#allocation2 + $0x16] sm:$0xff]
        %2583 = vrot.lane.b32.xlu0 %v2581, 16
        %v2584 = vpop.permute.xlu0 %2583
        %2585 = vrot.lane.b32.xlu0 %v2582, 16
        %v2586 = vpop.permute.xlu0 %2585
        %v2587 = vlaneseq
        %v2588 = vshrl.u32 %v2587, 7
        %v2589 = vsub.s32 0, %v2588
        %v2590 = vrot.slane %v2350, %v2589
        %v2591 = vmul.f32 %v2584, %v2590
        %v2592 = vmul.f32 %v2586, %v2590
        %v2593 = vadd.f32 %v2579, %v2591
        %v2594 = vadd.f32 %v2580, %v2592
        %2595 = vrot.lane.b32.xlu0 %v2581, 8
        %v2596 = vpop.permute.xlu0 %2595
        %2597 = vrot.lane.b32.xlu0 %v2582, 8
        %v2598 = vpop.permute.xlu0 %2597
        %v2599 = vlaneseq
        %v2600 = vshrl.u32 %v2599, 7
        %v2601 = vsub.s32 1, %v2600
        %v2602 = vrot.slane %v2350, %v2601
        %v2603 = vmul.f32 %v2596, %v2602
        %v2604 = vmul.f32 %v2598, %v2602
        %v2605 = vadd.f32 %v2593, %v2603
        %v2606 = vadd.f32 %v2594, %v2604
        %v2607 = vlaneseq
        %v2608 = vshrl.u32 %v2607, 7
        %v2609 = vsub.s32 2, %v2608
        %v2610 = vrot.slane %v2350, %v2609
        %v2611 = vmul.f32 %v2581, %v2610
        %v2612 = vmul.f32 %v2582, %v2610
        %v2613 = vadd.f32 %v2605, %v2611
        %v2614 = vadd.f32 %v2606, %v2612
        %2615 = vrot.lane.b32.xlu0 %v2581, 120
        %v2616 = vpop.permute.xlu0 %2615
        %2617 = vrot.lane.b32.xlu0 %v2582, 120
        %v2618 = vpop.permute.xlu0 %2617
        %v2619 = vlaneseq
        %v2620 = vshrl.u32 %v2619, 7
        %v2621 = vsub.s32 3, %v2620
        %v2622 = vrot.slane %v2350, %v2621
        %v2623 = vmul.f32 %v2616, %v2622
        %v2624 = vmul.f32 %v2618, %v2622
        %v2625 = vadd.f32 %v2613, %v2623
        %v2626 = vadd.f32 %v2614, %v2624
        %2627 = vrot.lane.b32.xlu0 %v2581, 112
        %v2628 = vpop.permute.xlu0 %2627
        %2629 = vrot.lane.b32.xlu0 %v2582, 112
        %v2630 = vpop.permute.xlu0 %2629
        %v2631 = vlaneseq
        %v2632 = vshrl.u32 %v2631, 7
        %v2633 = vsub.s32 4, %v2632
        %v2634 = vrot.slane %v2350, %v2633
        %v2635 = vmul.f32 %v2628, %v2634
        %v2636 = vmul.f32 %v2630, %v2634
        %v2637 = vadd.f32 %v2625, %v2635
        %v2638 = vadd.f32 %v2626, %v2636
        %s2639 = scalar_lea.vmem %s251, 192 [#allocation6]
        %v2640 = vld [vmem:[%s2639] sm:$0xff]
        %v2641 = vld [vmem:[%s2639 + $0x8] sm:$0xff]
        %v2642 = vld [vmem:[%s2639 + $0x10] sm:$0xff]
        %v2643 = vld [vmem:[%s2639 + $0x18] sm:$0xff]
        %v2644 = vld [vmem:[%s2639 + $0x20] sm:$0xff]
        %v2645 = vld [vmem:[%s2639 + $0x28] sm:$0xff]
        %v2646 = vld [vmem:[%s2639 + $0x30] sm:$0xff]
        %v2647 = vld [vmem:[%s2639 + $0x38] sm:$0xff]
        %2650 = vrot.lane.b32.xlu0 %v2637, 96
        %v2651 = vpop.permute.xlu0 %2650
        %2652 = vrot.lane.b32.xlu0 %v2638, 96
        %v2653 = vpop.permute.xlu0 %2652
        %v2654 = vsel %vm772, %v2651, 0
        %v2656 = vsel %vm772, %v2653, 0
        %2658 = vmatprep.subr.mxu0 0.0
        %2659 = vmatpush1.msra.mxu0 %v2640
        %2660 = vmatprep.subr.mxu0 0.0
        %2661 = vmatpush1.msra.mxu0 %v2641
        %2662 = vmatprep.subr.mxu0 0.0
        %2663 = vmatpush1.msra.mxu0 %v2642
        %2664 = vmatprep.subr.mxu0 0.0
        %2665 = vmatpush1.msra.mxu0 %v2643
        %2666 = vmatprep.subr.mxu0 0.0
        %2667 = vmatpush1.msra.mxu0 %v2644
        %2668 = vmatprep.subr.mxu0 0.0
        %2669 = vmatpush1.msra.mxu0 %v2645
        %2670 = vmatprep.subr.mxu0 0.0
        %2671 = vmatpush1.msra.mxu0 %v2646
        %2672 = vmatprep.subr.mxu0 0.0
        %2673 = vmatpush1.msra.mxu0 %v2647
        %2674 = vmatprep.subr.mxu0 0.0
        %2675 = vmatpush1.msra.mxu0 0.0
        %2676 = vmatprep.subr.mxu0 0.0
        %2677 = vmatpush1.msra.mxu0 0.0
        %2678 = vmatprep.subr.mxu0 0.0
        %2679 = vmatpush1.msra.mxu0 0.0
        %2680 = vmatprep.subr.mxu0 0.0
        %2681 = vmatpush1.msra.mxu0 0.0
        %2682 = vmatprep.subr.mxu0 0.0
        %2683 = vmatpush1.msra.mxu0 0.0
        %2684 = vmatprep.subr.mxu0 0.0
        %2685 = vmatpush1.msra.mxu0 0.0
        %2686 = vmatprep.subr.mxu0 0.0
        %2687 = vmatpush1.msra.mxu0 0.0
        %2688 = vmatprep.subr.mxu0 0.0
        %2689 = vmatpush1.msra.mxu0 0.0
        %2690 = vmatprep.subr.mxu0 0.0
        %2691 = vmatpush1.msra.mxu0 0.0
        %2692 = vmatprep.subr.mxu0 0.0
        %2693 = vmatpush1.msra.mxu0 0.0
        %2694 = vmatprep.subr.mxu0 0.0
        %2695 = vmatpush1.msra.mxu0 0.0
        %2696 = vmatprep.subr.mxu0 0.0
        %2697 = vmatpush1.msra.mxu0 0.0
        %2698 = vmatprep.subr.mxu0 0.0
        %2699 = vmatpush1.msra.mxu0 0.0
        %2700 = vmatprep.subr.mxu0 0.0
        %2701 = vmatpush1.msra.mxu0 0.0
        %2702 = vmatprep.subr.mxu0 0.0
        %2703 = vmatpush1.msra.mxu0 0.0
        %2704 = vmatprep.subr.mxu0 0.0
        %2705 = vmatpush1.msra.mxu0 0.0
        %2706 = vmatprep.subr.mxu0 0.0
        %2707 = vmatpush1.msra.mxu0 0.0
        %2708 = vmatprep.subr.mxu0 0.0
        %2709 = vmatpush1.msra.mxu0 0.0
        %2710 = vmatprep.subr.mxu0 0.0
        %2711 = vmatpush1.msra.mxu0 0.0
        %2712 = vmatprep.subr.mxu0 0.0
        %2713 = vmatpush1.msra.mxu0 0.0
        %2714 = vmatprep.subr.mxu0 0.0
        %2715 = vmatpush1.msra.mxu0 0.0
        %2716 = vmatprep.subr.mxu0 0.0
        %2717 = vmatpush1.msra.mxu0 0.0
        %2718 = vmatprep.subr.mxu0 0.0
        %2719 = vmatpush1.msra.mxu0 0.0
        %2720 = vmatprep.subr.mxu0 0.0
        %2721 = vmatpush1.msra.mxu0 0.0
        %2722 = vmatprep.mubr.f32.mxu0 0.0
        %2723 = vmatmul.mubr.f32.gmra.mrb[0].mxu0 %v2654
        %v2724 = vpop.f32.mrb[0].mxu0
        %v2725 = vadd.f32 0.0, %v2724
        %v2726 = vpop.f32.mrb[0].mxu0
        %2727 = vmatprep.mubr.f32.mxu0 0.0
        %2728 = vmatmul.mubr.f32.gmra.mrb[0].mxu0 %v2656
        %v2729 = vpop.f32.mrb[0].mxu0
        %v2730 = vadd.f32 0.0, %v2729
        %v2731 = vpop.f32.mrb[0].mxu0
        %2732 = vdwg.mxu0
        %v2733 = vsel %vm772, %v2725, 0.0
        %v2734 = vsel %vm772, %v2730, 0.0
        %v2735 = vadd.f32 %v2733, %v2734
        %v2736 = vrot.slane %v2735, 4
        %v2737 = vadd.f32 %v2735, %v2736
        %v2738 = vrot.slane %v2737, 2
        %v2739 = vadd.f32 %v2737, %v2738
        %v2740 = vrot.slane %v2739, 1
        %v2741 = vadd.f32 %v2739, %v2740
        %v2742 = vmul.f32 %v2725, %v2725
        %v2743 = vmul.f32 %v2730, %v2730
        %v2744 = vsel %vm772, %v2742, 0.0
        %v2745 = vsel %vm772, %v2743, 0.0
        %v2746 = vadd.f32 %v2744, %v2745
        %v2747 = vrot.slane %v2746, 4
        %v2748 = vadd.f32 %v2746, %v2747
        %v2749 = vrot.slane %v2748, 2
        %v2750 = vadd.f32 %v2748, %v2749
        %v2751 = vrot.slane %v2750, 1
        %v2752 = vadd.f32 %v2750, %v2751
        %v2753 = vsel %vm463, %v2741, %v2752
        %2754 = vrot.lane.b32.xlu0 %v2753, 64
        %v2755 = vpop.permute.xlu0 %2754
        %v2756 = vsel %vm469, %v2755, %v2753
        %2757 = vrot.lane.b32.xlu0 %v2756, 64
        %v2758 = vpop.permute.xlu0 %2757
        %v2759 = vsel %vm469, %v2758, %v2753
        %2761 = vrot.lane.b32.xlu0 %v2759, 72
        %v2762 = vpop.permute.xlu0 %2761
        %v2764 = vadd.f32 %v2753, %v2762
        %2765 = vrot.lane.b32.xlu0 %v2764, 64
        %v2766 = vpop.permute.xlu0 %2765
        %v2767 = vsel %vm469, %v2766, %v2764
        %2768 = vrot.lane.b32.xlu0 %v2767, 64
        %v2769 = vpop.permute.xlu0 %2768
        %v2770 = vsel %vm469, %v2769, %v2764
        %2772 = vrot.lane.b32.xlu0 %v2770, 80
        %v2773 = vpop.permute.xlu0 %2772
        %v2775 = vadd.f32 %v2764, %v2773
        %2776 = vrot.lane.b32.xlu0 %v2775, 64
        %v2777 = vpop.permute.xlu0 %2776
        %v2778 = vsel %vm469, %v2777, %v2775
        %2779 = vrot.lane.b32.xlu0 %v2778, 64
        %v2780 = vpop.permute.xlu0 %2779
        %v2781 = vsel %vm469, %v2780, %v2775
        %2783 = vrot.lane.b32.xlu0 %v2781, 96
        %v2784 = vpop.permute.xlu0 %2783
        %v2786 = vadd.f32 %v2775, %v2784
        %v2787 = vmul.f32 %v2786, 0.0078125
        %v2788 = vmul.f32 %v2787, %v2787
        %v2790 = vrot.slane %v2788, 7
        %v2792 = vsub.f32 %v2787, %v2790
        %v2793 = vmax.f32 %v2792, 0.0
        %v2794 = vlaneseq
        %v2795 = vshrl.u32 %v2794, 7
        %v2796 = vsub.s32 0, %v2795
        %v2797 = vrot.slane %v2787, %v2796
        %v2798 = vsub.f32 %v2725, %v2797
        %v2799 = vsub.f32 %v2730, %v2797
        %v2800 = vadd.f32 %v2793, 1e-05
        %v2801 = vrsqrt.pop %v2800
        %v2802 = vlaneseq
        %v2803 = vshrl.u32 %v2802, 7
        %v2804 = vsub.s32 1, %v2803
        %v2805 = vrot.slane %v2801, %v2804
        %v2806 = vmul.f32 %v2798, %v2805
        %v2807 = vmul.f32 %v2799, %v2805
        %v2808 = vstv %s324
        %v2809 = vmul.f32 %v2808, %v2806
        %v2810 = vmul.f32 %v2808, %v2807
        %v2811 = vadd.f32 %v2333, %v2809
        %v2812 = vadd.f32 %v2334, %v2810
        %v2813 = vld [vmem:[#allocation9] sm:$0xff]
        %v2814 = vld [vmem:[#allocation9 + $0x8] sm:$0xff]
        %v2815 = vstv %s329
        %v2816 = vmul.f32 %v2815, %v2811
        %v2817 = vmul.f32 %v2815, %v2812
        %v2818 = vadd.f32 %v2813, %v2816
        %v2819 = vadd.f32 %v2814, %v2817
        %2820 = vst.msk [vmem:[#allocation9] sm:$0xff] %vm772, %v2818
        %2821 = vst.msk [vmem:[#allocation9 + $0x8] sm:$0xff] %vm772, %v2819
        // Predicated region
        $region49: #{tpu_custom_call.1} parent=39 // pred_check
          %p2822 = pneg %p170
        $region50: #{tpu_custom_call.1} parent=39 // pred_check_branch
          %2824 = sbr.rel (%p2822) target = $region52
        $region51: #{tpu_custom_call.1} parent=39 // pred_region
          %s2826 = ssub.s32 256, 256
          %2827 = vsyncadd [#allocation8], %s2826
          %s2828 = sshll.u32 [#allocation9], 4
          %s2829 = int_to_ptr.vmem [resolvable:$true] %s2828
          %2834 = dma.vmem_to_hbm [thread:$0]  %s2829, 256, %s7, [#allocation8], 128, 128, 8
        $region52: #{tpu_custom_call.1} parent=39 // pred_fallthru
          _
        // Predicated region
        $region53: #{tpu_custom_call.1} parent=39 // pred_check
          %p2835 = pneg %p170
        $region54: #{tpu_custom_call.1} parent=39 // pred_check_branch
          %2837 = sbr.rel (%p2835) target = $region56
        $region55: #{tpu_custom_call.1} parent=39 // pred_region
          %2838 = dma.done [#allocation8], 256
        $region56: #{tpu_custom_call.1} parent=39 // pred_fallthru
          _
      $region40: #{tpu_custom_call.1} parent=5 // pred_fallthru
        _
      %p2839 = scmp.le.s32.totalorder 2, %s27
      // Predicated region
      $region57: #{tpu_custom_call.1} parent=5 // pred_check
        %p2840 = pneg %p2839
      $region58: #{tpu_custom_call.1} parent=5 // pred_check_branch
        %2842 = sbr.rel (%p2840) target = $region60
      $region59: #{tpu_custom_call.1} parent=5 // pred_region
        %s2843 = ssub.s32 %s27, 2
      $region60: #{tpu_custom_call.1} parent=5 // pred_fallthru
        _
    $region6: #{tpu_custom_call.1} parent=1 // loop_footer
      %s31 = sadd.s32 1, %s27
    $region7: #{tpu_custom_call.1} parent=1 // loop_footer_branch
      %26 = sbr.rel target = $region3
    $region8: #{tpu_custom_call.1} parent=1 // loop_exit
      _
    %2844 = vsyncpa [#allocation7], 1
    %s2845 = scalar_lea.sflag [#allocation7], 1
    %2846 = vsyncpa %s2845, 1
    %2847 = vsyncpa [#allocation8], 1
    %s2848 = scalar_lea.sflag [#allocation8], 1
    %2849 = vsyncpa %s2848, 1

</llo_original>
